<compile_context>
chip_gen: v7x
topology: tpu7x:2x2x1
jax: 0.10.0
libtpu: 0.0.40
codegen_flags: <defaults>
</compile_context>

<pallas_src>
import functools
import math

import jax
import jax.numpy as jnp
from jax.experimental import pallas as pl
from jax.experimental.pallas import tpu as pltpu


_LAYER_IO = [(5, 16), (16, 32), (32, 16), (16, 1)]
# Pad in-channel counts up to a sublane multiple (only layer 1: 5 -> 8).
_CIN_PAD = {5: 8, 16: 16, 32: 32}
# Tap order (dh, dw); weights, masks and in-kernel shifts all use this order.
_TAP_OFFSETS = tuple((kh - 1, kw - 1) for kh in range(3) for kw in range(3))

_ROLL_FN = None


def _lane_roll_fn():
    """Lane-shift implementation: pltpu.roll (XLU rotate) when available,
    else jnp.roll (two lane slices + concat).  The tiny probe also verifies
    the rotate direction, so the kernel is correct either way."""
    global _ROLL_FN
    if _ROLL_FN is not None:
        return _ROLL_FN

    def probe(x_ref, o_ref):
        o_ref[...] = pltpu.roll(x_ref[...], 3, axis=1)

    try:
        x = jnp.arange(8 * 128, dtype=jnp.float32).reshape(8, 128)
        y = pl.pallas_call(
            probe, out_shape=jax.ShapeDtypeStruct((8, 128), jnp.float32))(x)
        ok = bool(jnp.array_equal(y, jnp.roll(x, 3, axis=1)))
    except Exception:
        ok = False
    _ROLL_FN = pltpu.roll if ok else jnp.roll
    return _ROLL_FN


def _fused_conv_kernel(x_ref, mask_ref, w1_ref, b1_ref, w2_ref, b2_ref,
                       w3_ref, b3_ref, w4_ref, b4_ref, alpha_ref, o_ref,
                       *, shifts, roll_fn):
    L = x_ref.shape[-1]
    masks = [mask_ref[t] for t in range(len(shifts))]   # each (1, L), loaded once

    def conv3x3(a, w_ref, b_ref):
        # 3x3 'same' conv = 9 accumulated per-tap matmuls.  The activation is
        # flat (cin, L) with lane index i = b*H*W + y*W + x, so tap (dh, dw)
        # is a lane roll by dh*W + dw.  Reads that would cross an image
        # row / column / batch boundary (including the roll wrap-around) are
        # zeroed by the precomputed per-tap mask, which realises the zero
        # 'same' padding without any padded buffer.  All matmuls are f32
        # operands with f32 accumulation (MXU has huge slack at cout <= 32).
        acc = None
        for t, s in enumerate(shifts):
            if s == 0:
                tap = a                                   # centre tap, no mask
            else:
                tap = roll_fn(a, (-s) % L, axis=1) * masks[t]
            y = jnp.dot(w_ref[t], tap, preferred_element_type=jnp.float32)
            acc = y if acc is None else acc + y
        return acc + b_ref[...]                           # (cout, 1) lane-bcast bias

    def prelu(a, alpha):
        return jnp.where(a >= 0.0, a, alpha * a)

    a = x_ref[...]                                        # (cin_pad, L) f32
    a = prelu(conv3x3(a, w1_ref, b1_ref), alpha_ref[0])
    a = prelu(conv3x3(a, w2_ref, b2_ref), alpha_ref[1])
    a = prelu(conv3x3(a, w3_ref, b3_ref), alpha_ref[2])
    a = conv3x3(a, w4_ref, b4_ref)                        # (1, L)
    o_ref[...] = jnp.tanh(a).astype(o_ref.dtype)          # lane-dense store


def _flatten_weight(w_oihw, cin_pad):
    """(O, I, 3, 3) conv weight -> tap-major (9, O, I_pad) f32, matching the
    kernel's per-tap loop order (_TAP_OFFSETS)."""
    cout, cin, kh, kw = w_oihw.shape
    if cin_pad > cin:
        w_oihw = jnp.pad(w_oihw, ((0, 0), (0, cin_pad - cin), (0, 0), (0, 0)))
    w = jnp.transpose(w_oihw, (2, 3, 0, 1)).reshape(kh * kw, cout, cin_pad)
    return w.astype(jnp.float32)


def _boundary_masks(H, W, bb):
    """Host-side (9, 1, L) {0,1} f32 masks, identical for every grid step
    (each block covers `bb` whole images)."""
    HW = H * W
    L = bb * HW
    idx = jnp.arange(L, dtype=jnp.int32)
    col = idx % W
    row = (idx % HW) // W
    masks = []
    for dh, dw in _TAP_OFFSETS:
        valid = ((col + dw >= 0) & (col + dw < W) &
                 (row + dh >= 0) & (row + dh < H))
        masks.append(valid)
    return jnp.stack(masks).astype(jnp.float32).reshape(9, 1, L)


def _pick_batch_block(N, HW, max_lanes=8192):
    """Largest batch-block bb (divisor of N) such that
      * L = bb*HW stays under max_lanes (per-step VMEM temps ~1.5 KB/lane),
      * L is 128-aligned unless bb == N (full-array blocks are always legal),
      * at least two grid steps remain when N >= 2, so both v7x TensorCores
        get work under dimension_semantics=("parallel",).
    """
    # TODO(synk): spatial (row) tiling with a 1-row halo for HW > max_lanes;
    # for now such images fall back to bb=1 (one whole image per step).
    def ok(bb):
        L = bb * HW
        if bb < N and L % 128 != 0:
            return False
        if bb > 1 and L > max_lanes:
            return False
        return True

    divisors = [d for d in range(1, N + 1) if N % d == 0 and ok(d)]
    if not divisors:
        return N
    multi = [d for d in divisors if N // d >= 2]
    return max(multi) if multi else max(divisors)


def transfusion_conv3_forward(x_nchw, params, *, batch_block=None,
                              max_lanes=8192):
    """Forward pass. x_nchw: (N, 5, H, W) float32 -> (N, 1, H, W) float32."""
    N, Cin, H, W = x_nchw.shape
    assert Cin == _LAYER_IO[0][0]
    HW = H * W
    cin_pad = _CIN_PAD[Cin]

    ws, bs = params["weights"], params["biases"]
    alphas = params["prelu_alphas"].astype(jnp.float32)

    w_tap = [_flatten_weight(w, _CIN_PAD[w.shape[1]]) for w in ws]
    b_col = [b.reshape(-1, 1).astype(jnp.float32) for b in bs]

    bb = batch_block if batch_block is not None else _pick_batch_block(
        N, HW, max_lanes)
    assert N % bb == 0
    L = bb * HW

    # Channel-major with batch folded into the lane axis: (Cin_pad, N*H*W).
    # Input stays f32 (matmuls are f32 for numerics); the Cout=1 output is a
    # lane-dense (1, N*H*W) slab that reshapes back to (N,1,H,W) for free.
    x_cm = jnp.transpose(x_nchw, (1, 0, 2, 3)).reshape(Cin, N * HW)
    x_cm = jnp.pad(x_cm.astype(jnp.float32), ((0, cin_pad - Cin), (0, 0)))

    masks = _boundary_masks(H, W, bb)
    shifts = tuple(dh * W + dw for dh, dw in _TAP_OFFSETS)
    roll_fn = _lane_roll_fn()

    kernel = functools.partial(_fused_conv_kernel, shifts=shifts,
                               roll_fn=roll_fn)
    const2 = lambda i: (0, 0)
    const3 = lambda i: (0, 0, 0)

    out_flat = pl.pallas_call(
        kernel,
        out_shape=jax.ShapeDtypeStruct((1, N * HW), jnp.float32),
        grid=(N // bb,),
        in_specs=[
            pl.BlockSpec((cin_pad, L), lambda i: (0, i)),
            pl.BlockSpec(masks.shape, const3),            # resident masks
            pl.BlockSpec(w_tap[0].shape, const3), pl.BlockSpec(b_col[0].shape, const2),
            pl.BlockSpec(w_tap[1].shape, const3), pl.BlockSpec(b_col[1].shape, const2),
            pl.BlockSpec(w_tap[2].shape, const3), pl.BlockSpec(b_col[2].shape, const2),
            pl.BlockSpec(w_tap[3].shape, const3), pl.BlockSpec(b_col[3].shape, const2),
            pl.BlockSpec(memory_space=pltpu.MemorySpace.SMEM),   # PReLU alphas
        ],
        out_specs=pl.BlockSpec((1, L), lambda i: (0, i)),
        compiler_params=pltpu.CompilerParams(
            dimension_semantics=("parallel",),
            vmem_limit_bytes=32 * 1024 * 1024),
    )(x_cm, masks, w_tap[0], b_col[0], w_tap[1], b_col[1],
      w_tap[2], b_col[2], w_tap[3], b_col[3], alphas)

    return out_flat.reshape(N, 1, H, W).astype(x_nchw.dtype)


def init_params(key):
    """Matches the PyTorch __init__: conv weight ~ N(0, sqrt(2/(9*out_ch))),
    conv bias = 0, PReLU alpha is a learnable scalar initialised to 0.25."""
    weights, biases = [], []
    for cin, cout in _LAYER_IO:
        key, sub = jax.random.split(key)
        std = math.sqrt(2.0 / (3 * 3 * cout))
        weights.append(std * jax.random.normal(sub, (cout, cin, 3, 3),
                                               dtype=jnp.float32))
        biases.append(jnp.zeros((cout,), dtype=jnp.float32))
    alphas = jnp.full((3,), 0.25, dtype=jnp.float32)   # learnable PReLU params
    return {"weights": weights, "biases": biases, "prelu_alphas": alphas}


def _reference_forward(x_nchw, params):
    """Pure-JAX reference (lax conv at HIGHEST precision, true f32)."""
    ws, bs, alphas = params["weights"], params["biases"], params["prelu_alphas"]
    y = x_nchw
    for i in range(4):
        y = jax.lax.conv_general_dilated(
            y, ws[i], window_strides=(1, 1), padding="SAME",
            dimension_numbers=("NCHW", "OIHW", "NCHW"),
            precision=jax.lax.Precision.HIGHEST)
        y = y + bs[i][None, :, None, None]
        if i < 3:
            y = jnp.where(y >= 0.0, y, alphas[i] * y)
        else:
            y = jnp.tanh(y)
    return y


if __name__ == "__main__":
    key = jax.random.PRNGKey(0)
    pkey, xkey = jax.random.split(key)
    params = init_params(pkey)

    N, C, H, W = 2, 5, 16, 16
    x = jax.random.normal(xkey, (N, C, H, W), dtype=jnp.float32)

    out = jax.block_until_ready(transfusion_conv3_forward(x, params))
    assert out.shape == (N, 1, H, W), out.shape

    ref = jax.block_until_ready(_reference_forward(x, params))
    err = float(jnp.max(jnp.abs(out - ref)))
    # f32 matmuls throughout -> tight tolerance (previous bf16 version failed
    # at 3e-2; this one sits around 1e-5).
    assert jnp.allclose(out, ref, rtol=1e-3, atol=1e-3), err

    print("KERNEL_OK")
</pallas_src>

<mosaic_0001>
module attributes {stable_mosaic.version = 11 : i64} {
  func.func @probe(%arg0: memref<8x128xf32, #tpu.memory_space<vmem>>, %arg1: memref<8x128xf32, #tpu.memory_space<vmem>>) attributes {dimension_semantics = [], scalar_prefetch = 0 : i64, scratch_operands = 0 : i64, tpu.core_type = #tpu.core_type<tc>} {
    %c0 = arith.constant 0 : index
    %c0_0 = arith.constant 0 : index
    %0 = vector.load %arg0[%c0, %c0_0] : memref<8x128xf32, #tpu.memory_space<vmem>>, vector<8x128xf32>
    %c3_i32 = arith.constant 3 : i32
    %1 = tpu.dynamic_rotate %0 by %c3_i32 dim 1 : vector<8x128xf32>, i32 -> vector<8x128xf32>
    %c0_1 = arith.constant 0 : index
    %c0_2 = arith.constant 0 : index
    %2 = vector.load %arg1[%c0_1, %c0_2] : memref<8x128xf32, #tpu.memory_space<vmem>>, vector<8x128xf32>
    tpu.vector_store %arg1[%c0_1, %c0_2], %1 {strides = array<i32>} : memref<8x128xf32, #tpu.memory_space<vmem>>, vector<8x128xf32>,
    return
  }
}

module attributes {stable_mosaic.version = 11 : i64} {
  func.func @_fused_conv_kernel(%arg0: i32, %arg1: memref<8x256xf32, #tpu.memory_space<vmem>>, %arg2: memref<9x1x256xf32, #tpu.memory_space<vmem>>, %arg3: memref<9x16x8xf32, #tpu.memory_space<vmem>>, %arg4: memref<16x1xf32, #tpu.memory_space<vmem>>, %arg5: memref<9x32x16xf32, #tpu.memory_space<vmem>>, %arg6: memref<32x1xf32, #tpu.memory_space<vmem>>, %arg7: memref<9x16x32xf32, #tpu.memory_space<vmem>>, %arg8: memref<16x1xf32, #tpu.memory_space<vmem>>, %arg9: memref<9x1x16xf32, #tpu.memory_space<vmem>>, %arg10: memref<1x1xf32, #tpu.memory_space<vmem>>, %arg11: memref<3xf32, #tpu.memory_space<smem>>, %arg12: memref<1x256xf32, #tpu.memory_space<vmem>>) attributes {dimension_semantics = [#tpu.dimension_semantics<parallel>], iteration_bounds = array<i64: 2>, scalar_prefetch = 0 : i64, scratch_operands = 0 : i64, tpu.core_type = #tpu.core_type<tc>, window_params = [{transform_indices = @transform_0, window_bounds = array<i64: 8, 256>}, {pipeline_mode = #tpu.pipeline_mode<synchronous>, transform_indices = @transform_1, window_bounds = array<i64: 9, 1, 256>}, {pipeline_mode = #tpu.pipeline_mode<synchronous>, transform_indices = @transform_2, window_bounds = array<i64: 9, 16, 8>}, {pipeline_mode = #tpu.pipeline_mode<synchronous>, transform_indices = @transform_3, window_bounds = array<i64: 16, 1>}, {pipeline_mode = #tpu.pipeline_mode<synchronous>, transform_indices = @transform_4, window_bounds = array<i64: 9, 32, 16>}, {pipeline_mode = #tpu.pipeline_mode<synchronous>, transform_indices = @transform_5, window_bounds = array<i64: 32, 1>}, {pipeline_mode = #tpu.pipeline_mode<synchronous>, transform_indices = @transform_6, window_bounds = array<i64: 9, 16, 32>}, {pipeline_mode = #tpu.pipeline_mode<synchronous>, transform_indices = @transform_7, window_bounds = array<i64: 16, 1>}, {pipeline_mode = #tpu.pipeline_mode<synchronous>, transform_indices = @transform_8, window_bounds = array<i64: 9, 1, 16>}, {pipeline_mode = #tpu.pipeline_mode<synchronous>, transform_indices = @transform_9, window_bounds = array<i64: 1, 1>}, {transform_indices = @transform_10, window_bounds = array<i64: 3>}, {transform_indices = @transform_11, window_bounds = array<i64: 1, 256>}]} {
    %c0 = arith.constant 0 : index
    %c0_0 = arith.constant 0 : index
    %c0_1 = arith.constant 0 : index
    %0 = vector.load %arg2[%c0, %c0_0, %c0_1] : memref<9x1x256xf32, #tpu.memory_space<vmem>>, vector<1x1x256xf32>
    %1 = vector.shape_cast %0 : vector<1x1x256xf32> to vector<1x256xf32>
    %c1 = arith.constant 1 : index
    %c0_2 = arith.constant 0 : index
    %c0_3 = arith.constant 0 : index
    %2 = vector.load %arg2[%c1, %c0_2, %c0_3] : memref<9x1x256xf32, #tpu.memory_space<vmem>>, vector<1x1x256xf32>
    %3 = vector.shape_cast %2 : vector<1x1x256xf32> to vector<1x256xf32>
    %c2 = arith.constant 2 : index
    %c0_4 = arith.constant 0 : index
    %c0_5 = arith.constant 0 : index
    %4 = vector.load %arg2[%c2, %c0_4, %c0_5] : memref<9x1x256xf32, #tpu.memory_space<vmem>>, vector<1x1x256xf32>
    %5 = vector.shape_cast %4 : vector<1x1x256xf32> to vector<1x256xf32>
    %c3 = arith.constant 3 : index
    %c0_6 = arith.constant 0 : index
    %c0_7 = arith.constant 0 : index
    %6 = vector.load %arg2[%c3, %c0_6, %c0_7] : memref<9x1x256xf32, #tpu.memory_space<vmem>>, vector<1x1x256xf32>
    %7 = vector.shape_cast %6 : vector<1x1x256xf32> to vector<1x256xf32>
    %c5 = arith.constant 5 : index
    %c0_8 = arith.constant 0 : index
    %c0_9 = arith.constant 0 : index
    %8 = vector.load %arg2[%c5, %c0_8, %c0_9] : memref<9x1x256xf32, #tpu.memory_space<vmem>>, vector<1x1x256xf32>
    %9 = vector.shape_cast %8 : vector<1x1x256xf32> to vector<1x256xf32>
    %c6 = arith.constant 6 : index
    %c0_10 = arith.constant 0 : index
    %c0_11 = arith.constant 0 : index
    %10 = vector.load %arg2[%c6, %c0_10, %c0_11] : memref<9x1x256xf32, #tpu.memory_space<vmem>>, vector<1x1x256xf32>
    %11 = vector.shape_cast %10 : vector<1x1x256xf32> to vector<1x256xf32>
    %c7 = arith.constant 7 : index
    %c0_12 = arith.constant 0 : index
    %c0_13 = arith.constant 0 : index
    %12 = vector.load %arg2[%c7, %c0_12, %c0_13] : memref<9x1x256xf32, #tpu.memory_space<vmem>>, vector<1x1x256xf32>
    %13 = vector.shape_cast %12 : vector<1x1x256xf32> to vector<1x256xf32>
    %c8 = arith.constant 8 : index
    %c0_14 = arith.constant 0 : index
    %c0_15 = arith.constant 0 : index
    %14 = vector.load %arg2[%c8, %c0_14, %c0_15] : memref<9x1x256xf32, #tpu.memory_space<vmem>>, vector<1x1x256xf32>
    %15 = vector.shape_cast %14 : vector<1x1x256xf32> to vector<1x256xf32>
    %c0_16 = arith.constant 0 : index
    %c0_17 = arith.constant 0 : index
    %16 = vector.load %arg1[%c0_16, %c0_17] : memref<8x256xf32, #tpu.memory_space<vmem>>, vector<8x256xf32>
    %17 = vector.extract_strided_slice %16 {offsets = [0, 239], sizes = [8, 17], strides = [1, 1]} : vector<8x256xf32> to vector<8x17xf32>
    %18 = vector.extract_strided_slice %16 {offsets = [0, 0], sizes = [8, 239], strides = [1, 1]} : vector<8x256xf32> to vector<8x239xf32>
    %19 = tpu.concatenate %17, %18 in 1 : vector<8x17xf32>, vector<8x239xf32> -> vector<8x256xf32>
    %20 = vector.broadcast %1 : vector<1x256xf32> to vector<8x256xf32>
    %21 = arith.mulf %19, %20 : vector<8x256xf32>
    %c0_18 = arith.constant 0 : index
    %c0_19 = arith.constant 0 : index
    %c0_20 = arith.constant 0 : index
    %22 = vector.load %arg3[%c0_18, %c0_19, %c0_20] : memref<9x16x8xf32, #tpu.memory_space<vmem>>, vector<1x16x8xf32>
    %23 = vector.shape_cast %22 : vector<1x16x8xf32> to vector<16x8xf32>
    %cst = arith.constant dense<0.000000e+00> : vector<16x256xf32>
    %24 = tpu.matmul %23, %21, %cst {dimension_numbers = #tpu.dot_dimension_numbers<[1], [0], [0], [1], [0, 0, 1, 1], [], []>} : vector<16x8xf32>, vector<8x256xf32>, vector<16x256xf32> -> vector<16x256xf32>
    %25 = vector.extract_strided_slice %16 {offsets = [0, 240], sizes = [8, 16], strides = [1, 1]} : vector<8x256xf32> to vector<8x16xf32>
    %26 = vector.extract_strided_slice %16 {offsets = [0, 0], sizes = [8, 240], strides = [1, 1]} : vector<8x256xf32> to vector<8x240xf32>
    %27 = tpu.concatenate %25, %26 in 1 : vector<8x16xf32>, vector<8x240xf32> -> vector<8x256xf32>
    %28 = vector.broadcast %3 : vector<1x256xf32> to vector<8x256xf32>
    %29 = arith.mulf %27, %28 : vector<8x256xf32>
    %c1_21 = arith.constant 1 : index
    %c0_22 = arith.constant 0 : index
    %c0_23 = arith.constant 0 : index
    %30 = vector.load %arg3[%c1_21, %c0_22, %c0_23] : memref<9x16x8xf32, #tpu.memory_space<vmem>>, vector<1x16x8xf32>
    %31 = vector.shape_cast %30 : vector<1x16x8xf32> to vector<16x8xf32>
    %cst_24 = arith.constant dense<0.000000e+00> : vector<16x256xf32>
    %32 = tpu.matmul %31, %29, %cst_24 {dimension_numbers = #tpu.dot_dimension_numbers<[1], [0], [0], [1], [0, 0, 1, 1], [], []>} : vector<16x8xf32>, vector<8x256xf32>, vector<16x256xf32> -> vector<16x256xf32>
    %33 = arith.addf %24, %32 : vector<16x256xf32>
    %34 = vector.extract_strided_slice %16 {offsets = [0, 241], sizes = [8, 15], strides = [1, 1]} : vector<8x256xf32> to vector<8x15xf32>
    %35 = vector.extract_strided_slice %16 {offsets = [0, 0], sizes = [8, 241], strides = [1, 1]} : vector<8x256xf32> to vector<8x241xf32>
    %36 = tpu.concatenate %34, %35 in 1 : vector<8x15xf32>, vector<8x241xf32> -> vector<8x256xf32>
    %37 = vector.broadcast %5 : vector<1x256xf32> to vector<8x256xf32>
    %38 = arith.mulf %36, %37 : vector<8x256xf32>
    %c2_25 = arith.constant 2 : index
    %c0_26 = arith.constant 0 : index
    %c0_27 = arith.constant 0 : index
    %39 = vector.load %arg3[%c2_25, %c0_26, %c0_27] : memref<9x16x8xf32, #tpu.memory_space<vmem>>, vector<1x16x8xf32>
    %40 = vector.shape_cast %39 : vector<1x16x8xf32> to vector<16x8xf32>
    %cst_28 = arith.constant dense<0.000000e+00> : vector<16x256xf32>
    %41 = tpu.matmul %40, %38, %cst_28 {dimension_numbers = #tpu.dot_dimension_numbers<[1], [0], [0], [1], [0, 0, 1, 1], [], []>} : vector<16x8xf32>, vector<8x256xf32>, vector<16x256xf32> -> vector<16x256xf32>
    %42 = arith.addf %33, %41 : vector<16x256xf32>
    %43 = vector.extract_strided_slice %16 {offsets = [0, 255], sizes = [8, 1], strides = [1, 1]} : vector<8x256xf32> to vector<8x1xf32>
    %44 = vector.extract_strided_slice %16 {offsets = [0, 0], sizes = [8, 255], strides = [1, 1]} : vector<8x256xf32> to vector<8x255xf32>
    %45 = tpu.concatenate %43, %44 in 1 : vector<8x1xf32>, vector<8x255xf32> -> vector<8x256xf32>
    %46 = vector.broadcast %7 : vector<1x256xf32> to vector<8x256xf32>
    %47 = arith.mulf %45, %46 : vector<8x256xf32>
    %c3_29 = arith.constant 3 : index
    %c0_30 = arith.constant 0 : index
    %c0_31 = arith.constant 0 : index
    %48 = vector.load %arg3[%c3_29, %c0_30, %c0_31] : memref<9x16x8xf32, #tpu.memory_space<vmem>>, vector<1x16x8xf32>
    %49 = vector.shape_cast %48 : vector<1x16x8xf32> to vector<16x8xf32>
    %cst_32 = arith.constant dense<0.000000e+00> : vector<16x256xf32>
    %50 = tpu.matmul %49, %47, %cst_32 {dimension_numbers = #tpu.dot_dimension_numbers<[1], [0], [0], [1], [0, 0, 1, 1], [], []>} : vector<16x8xf32>, vector<8x256xf32>, vector<16x256xf32> -> vector<16x256xf32>
    %51 = arith.addf %42, %50 : vector<16x256xf32>
    %c4 = arith.constant 4 : index
    %c0_33 = arith.constant 0 : index
    %c0_34 = arith.constant 0 : index
    %52 = vector.load %arg3[%c4, %c0_33, %c0_34] : memref<9x16x8xf32, #tpu.memory_space<vmem>>, vector<1x16x8xf32>
    %53 = vector.shape_cast %52 : vector<1x16x8xf32> to vector<16x8xf32>
    %cst_35 = arith.constant dense<0.000000e+00> : vector<16x256xf32>
    %54 = tpu.matmul %53, %16, %cst_35 {dimension_numbers = #tpu.dot_dimension_numbers<[1], [0], [0], [1], [0, 0, 1, 1], [], []>} : vector<16x8xf32>, vector<8x256xf32>, vector<16x256xf32> -> vector<16x256xf32>
    %55 = arith.addf %51, %54 : vector<16x256xf32>
    %56 = vector.extract_strided_slice %16 {offsets = [0, 1], sizes = [8, 255], strides = [1, 1]} : vector<8x256xf32> to vector<8x255xf32>
    %57 = vector.extract_strided_slice %16 {offsets = [0, 0], sizes = [8, 1], strides = [1, 1]} : vector<8x256xf32> to vector<8x1xf32>
    %58 = tpu.concatenate %56, %57 in 1 : vector<8x255xf32>, vector<8x1xf32> -> vector<8x256xf32>
    %59 = vector.broadcast %9 : vector<1x256xf32> to vector<8x256xf32>
    %60 = arith.mulf %58, %59 : vector<8x256xf32>
    %c5_36 = arith.constant 5 : index
    %c0_37 = arith.constant 0 : index
    %c0_38 = arith.constant 0 : index
    %61 = vector.load %arg3[%c5_36, %c0_37, %c0_38] : memref<9x16x8xf32, #tpu.memory_space<vmem>>, vector<1x16x8xf32>
    %62 = vector.shape_cast %61 : vector<1x16x8xf32> to vector<16x8xf32>
    %cst_39 = arith.constant dense<0.000000e+00> : vector<16x256xf32>
    %63 = tpu.matmul %62, %60, %cst_39 {dimension_numbers = #tpu.dot_dimension_numbers<[1], [0], [0], [1], [0, 0, 1, 1], [], []>} : vector<16x8xf32>, vector<8x256xf32>, vector<16x256xf32> -> vector<16x256xf32>
    %64 = arith.addf %55, %63 : vector<16x256xf32>
    %65 = vector.extract_strided_slice %16 {offsets = [0, 15], sizes = [8, 241], strides = [1, 1]} : vector<8x256xf32> to vector<8x241xf32>
    %66 = vector.extract_strided_slice %16 {offsets = [0, 0], sizes = [8, 15], strides = [1, 1]} : vector<8x256xf32> to vector<8x15xf32>
    %67 = tpu.concatenate %65, %66 in 1 : vector<8x241xf32>, vector<8x15xf32> -> vector<8x256xf32>
    %68 = vector.broadcast %11 : vector<1x256xf32> to vector<8x256xf32>
    %69 = arith.mulf %67, %68 : vector<8x256xf32>
    %c6_40 = arith.constant 6 : index
    %c0_41 = arith.constant 0 : index
    %c0_42 = arith.constant 0 : index
    %70 = vector.load %arg3[%c6_40, %c0_41, %c0_42] : memref<9x16x8xf32, #tpu.memory_space<vmem>>, vector<1x16x8xf32>
    %71 = vector.shape_cast %70 : vector<1x16x8xf32> to vector<16x8xf32>
    %cst_43 = arith.constant dense<0.000000e+00> : vector<16x256xf32>
    %72 = tpu.matmul %71, %69, %cst_43 {dimension_numbers = #tpu.dot_dimension_numbers<[1], [0], [0], [1], [0, 0, 1, 1], [], []>} : vector<16x8xf32>, vector<8x256xf32>, vector<16x256xf32> -> vector<16x256xf32>
    %73 = arith.addf %64, %72 : vector<16x256xf32>
    %74 = vector.extract_strided_slice %16 {offsets = [0, 16], sizes = [8, 240], strides = [1, 1]} : vector<8x256xf32> to vector<8x240xf32>
    %75 = vector.extract_strided_slice %16 {offsets = [0, 0], sizes = [8, 16], strides = [1, 1]} : vector<8x256xf32> to vector<8x16xf32>
    %76 = tpu.concatenate %74, %75 in 1 : vector<8x240xf32>, vector<8x16xf32> -> vector<8x256xf32>
    %77 = vector.broadcast %13 : vector<1x256xf32> to vector<8x256xf32>
    %78 = arith.mulf %76, %77 : vector<8x256xf32>
    %c7_44 = arith.constant 7 : index
    %c0_45 = arith.constant 0 : index
    %c0_46 = arith.constant 0 : index
    %79 = vector.load %arg3[%c7_44, %c0_45, %c0_46] : memref<9x16x8xf32, #tpu.memory_space<vmem>>, vector<1x16x8xf32>
    %80 = vector.shape_cast %79 : vector<1x16x8xf32> to vector<16x8xf32>
    %cst_47 = arith.constant dense<0.000000e+00> : vector<16x256xf32>
    %81 = tpu.matmul %80, %78, %cst_47 {dimension_numbers = #tpu.dot_dimension_numbers<[1], [0], [0], [1], [0, 0, 1, 1], [], []>} : vector<16x8xf32>, vector<8x256xf32>, vector<16x256xf32> -> vector<16x256xf32>
    %82 = arith.addf %73, %81 : vector<16x256xf32>
    %83 = vector.extract_strided_slice %16 {offsets = [0, 17], sizes = [8, 239], strides = [1, 1]} : vector<8x256xf32> to vector<8x239xf32>
    %84 = vector.extract_strided_slice %16 {offsets = [0, 0], sizes = [8, 17], strides = [1, 1]} : vector<8x256xf32> to vector<8x17xf32>
    %85 = tpu.concatenate %83, %84 in 1 : vector<8x239xf32>, vector<8x17xf32> -> vector<8x256xf32>
    %86 = vector.broadcast %15 : vector<1x256xf32> to vector<8x256xf32>
    %87 = arith.mulf %85, %86 : vector<8x256xf32>
    %c8_48 = arith.constant 8 : index
    %c0_49 = arith.constant 0 : index
    %c0_50 = arith.constant 0 : index
    %88 = vector.load %arg3[%c8_48, %c0_49, %c0_50] : memref<9x16x8xf32, #tpu.memory_space<vmem>>, vector<1x16x8xf32>
    %89 = vector.shape_cast %88 : vector<1x16x8xf32> to vector<16x8xf32>
    %cst_51 = arith.constant dense<0.000000e+00> : vector<16x256xf32>
    %90 = tpu.matmul %89, %87, %cst_51 {dimension_numbers = #tpu.dot_dimension_numbers<[1], [0], [0], [1], [0, 0, 1, 1], [], []>} : vector<16x8xf32>, vector<8x256xf32>, vector<16x256xf32> -> vector<16x256xf32>
    %91 = arith.addf %82, %90 : vector<16x256xf32>
    %c0_52 = arith.constant 0 : index
    %c0_53 = arith.constant 0 : index
    %92 = vector.load %arg4[%c0_52, %c0_53] : memref<16x1xf32, #tpu.memory_space<vmem>>, vector<16x1xf32>
    %93 = vector.broadcast %92 : vector<16x1xf32> to vector<16x256xf32>
    %94 = arith.addf %91, %93 : vector<16x256xf32>
    %c0_54 = arith.constant 0 : index
    %95 = memref.load %arg11[%c0_54] : memref<3xf32, #tpu.memory_space<smem>>
    %cst_55 = arith.constant 0.000000e+00 : f32
    %96 = vector.broadcast %cst_55 : f32 to vector<16x256xf32>
    %97 = arith.cmpf oge, %94, %96 : vector<16x256xf32>
    %98 = vector.broadcast %95 : f32 to vector<16x256xf32>
    %99 = arith.mulf %98, %94 : vector<16x256xf32>
    %100 = arith.select %97, %94, %99 : vector<16x256xi1>, vector<16x256xf32>
    %101 = vector.extract_strided_slice %100 {offsets = [0, 239], sizes = [16, 17], strides = [1, 1]} : vector<16x256xf32> to vector<16x17xf32>
    %102 = vector.extract_strided_slice %100 {offsets = [0, 0], sizes = [16, 239], strides = [1, 1]} : vector<16x256xf32> to vector<16x239xf32>
    %103 = tpu.concatenate %101, %102 in 1 : vector<16x17xf32>, vector<16x239xf32> -> vector<16x256xf32>
    %104 = vector.broadcast %1 : vector<1x256xf32> to vector<16x256xf32>
    %105 = arith.mulf %103, %104 : vector<16x256xf32>
    %c0_56 = arith.constant 0 : index
    %c0_57 = arith.constant 0 : index
    %c0_58 = arith.constant 0 : index
    %106 = vector.load %arg5[%c0_56, %c0_57, %c0_58] : memref<9x32x16xf32, #tpu.memory_space<vmem>>, vector<1x32x16xf32>
    %107 = vector.shape_cast %106 : vector<1x32x16xf32> to vector<32x16xf32>
    %cst_59 = arith.constant dense<0.000000e+00> : vector<32x256xf32>
    %108 = tpu.matmul %107, %105, %cst_59 {dimension_numbers = #tpu.dot_dimension_numbers<[1], [0], [0], [1], [0, 0, 1, 1], [], []>} : vector<32x16xf32>, vector<16x256xf32>, vector<32x256xf32> -> vector<32x256xf32>
    %109 = vector.extract_strided_slice %100 {offsets = [0, 240], sizes = [16, 16], strides = [1, 1]} : vector<16x256xf32> to vector<16x16xf32>
    %110 = vector.extract_strided_slice %100 {offsets = [0, 0], sizes = [16, 240], strides = [1, 1]} : vector<16x256xf32> to vector<16x240xf32>
    %111 = tpu.concatenate %109, %110 in 1 : vector<16x16xf32>, vector<16x240xf32> -> vector<16x256xf32>
    %112 = vector.broadcast %3 : vector<1x256xf32> to vector<16x256xf32>
    %113 = arith.mulf %111, %112 : vector<16x256xf32>
    %c1_60 = arith.constant 1 : index
    %c0_61 = arith.constant 0 : index
    %c0_62 = arith.constant 0 : index
    %114 = vector.load %arg5[%c1_60, %c0_61, %c0_62] : memref<9x32x16xf32, #tpu.memory_space<vmem>>, vector<1x32x16xf32>
    %115 = vector.shape_cast %114 : vector<1x32x16xf32> to vector<32x16xf32>
    %cst_63 = arith.constant dense<0.000000e+00> : vector<32x256xf32>
    %116 = tpu.matmul %115, %113, %cst_63 {dimension_numbers = #tpu.dot_dimension_numbers<[1], [0], [0], [1], [0, 0, 1, 1], [], []>} : vector<32x16xf32>, vector<16x256xf32>, vector<32x256xf32> -> vector<32x256xf32>
    %117 = arith.addf %108, %116 : vector<32x256xf32>
    %118 = vector.extract_strided_slice %100 {offsets = [0, 241], sizes = [16, 15], strides = [1, 1]} : vector<16x256xf32> to vector<16x15xf32>
    %119 = vector.extract_strided_slice %100 {offsets = [0, 0], sizes = [16, 241], strides = [1, 1]} : vector<16x256xf32> to vector<16x241xf32>
    %120 = tpu.concatenate %118, %119 in 1 : vector<16x15xf32>, vector<16x241xf32> -> vector<16x256xf32>
    %121 = vector.broadcast %5 : vector<1x256xf32> to vector<16x256xf32>
    %122 = arith.mulf %120, %121 : vector<16x256xf32>
    %c2_64 = arith.constant 2 : index
    %c0_65 = arith.constant 0 : index
    %c0_66 = arith.constant 0 : index
    %123 = vector.load %arg5[%c2_64, %c0_65, %c0_66] : memref<9x32x16xf32, #tpu.memory_space<vmem>>, vector<1x32x16xf32>
    %124 = vector.shape_cast %123 : vector<1x32x16xf32> to vector<32x16xf32>
    %cst_67 = arith.constant dense<0.000000e+00> : vector<32x256xf32>
    %125 = tpu.matmul %124, %122, %cst_67 {dimension_numbers = #tpu.dot_dimension_numbers<[1], [0], [0], [1], [0, 0, 1, 1], [], []>} : vector<32x16xf32>, vector<16x256xf32>, vector<32x256xf32> -> vector<32x256xf32>
    %126 = arith.addf %117, %125 : vector<32x256xf32>
    %127 = vector.extract_strided_slice %100 {offsets = [0, 255], sizes = [16, 1], strides = [1, 1]} : vector<16x256xf32> to vector<16x1xf32>
    %128 = vector.extract_strided_slice %100 {offsets = [0, 0], sizes = [16, 255], strides = [1, 1]} : vector<16x256xf32> to vector<16x255xf32>
    %129 = tpu.concatenate %127, %128 in 1 : vector<16x1xf32>, vector<16x255xf32> -> vector<16x256xf32>
    %130 = vector.broadcast %7 : vector<1x256xf32> to vector<16x256xf32>
    %131 = arith.mulf %129, %130 : vector<16x256xf32>
    %c3_68 = arith.constant 3 : index
    %c0_69 = arith.constant 0 : index
    %c0_70 = arith.constant 0 : index
    %132 = vector.load %arg5[%c3_68, %c0_69, %c0_70] : memref<9x32x16xf32, #tpu.memory_space<vmem>>, vector<1x32x16xf32>
    %133 = vector.shape_cast %132 : vector<1x32x16xf32> to vector<32x16xf32>
    %cst_71 = arith.constant dense<0.000000e+00> : vector<32x256xf32>
    %134 = tpu.matmul %133, %131, %cst_71 {dimension_numbers = #tpu.dot_dimension_numbers<[1], [0], [0], [1], [0, 0, 1, 1], [], []>} : vector<32x16xf32>, vector<16x256xf32>, vector<32x256xf32> -> vector<32x256xf32>
    %135 = arith.addf %126, %134 : vector<32x256xf32>
    %c4_72 = arith.constant 4 : index
    %c0_73 = arith.constant 0 : index
    %c0_74 = arith.constant 0 : index
    %136 = vector.load %arg5[%c4_72, %c0_73, %c0_74] : memref<9x32x16xf32, #tpu.memory_space<vmem>>, vector<1x32x16xf32>
    %137 = vector.shape_cast %136 : vector<1x32x16xf32> to vector<32x16xf32>
    %cst_75 = arith.constant dense<0.000000e+00> : vector<32x256xf32>
    %138 = tpu.matmul %137, %100, %cst_75 {dimension_numbers = #tpu.dot_dimension_numbers<[1], [0], [0], [1], [0, 0, 1, 1], [], []>} : vector<32x16xf32>, vector<16x256xf32>, vector<32x256xf32> -> vector<32x256xf32>
    %139 = arith.addf %135, %138 : vector<32x256xf32>
    %140 = vector.extract_strided_slice %100 {offsets = [0, 1], sizes = [16, 255], strides = [1, 1]} : vector<16x256xf32> to vector<16x255xf32>
    %141 = vector.extract_strided_slice %100 {offsets = [0, 0], sizes = [16, 1], strides = [1, 1]} : vector<16x256xf32> to vector<16x1xf32>
    %142 = tpu.concatenate %140, %141 in 1 : vector<16x255xf32>, vector<16x1xf32> -> vector<16x256xf32>
    %143 = vector.broadcast %9 : vector<1x256xf32> to vector<16x256xf32>
    %144 = arith.mulf %142, %143 : vector<16x256xf32>
    %c5_76 = arith.constant 5 : index
    %c0_77 = arith.constant 0 : index
    %c0_78 = arith.constant 0 : index
    %145 = vector.load %arg5[%c5_76, %c0_77, %c0_78] : memref<9x32x16xf32, #tpu.memory_space<vmem>>, vector<1x32x16xf32>
    %146 = vector.shape_cast %145 : vector<1x32x16xf32> to vector<32x16xf32>
    %cst_79 = arith.constant dense<0.000000e+00> : vector<32x256xf32>
    %147 = tpu.matmul %146, %144, %cst_79 {dimension_numbers = #tpu.dot_dimension_numbers<[1], [0], [0], [1], [0, 0, 1, 1], [], []>} : vector<32x16xf32>, vector<16x256xf32>, vector<32x256xf32> -> vector<32x256xf32>
    %148 = arith.addf %139, %147 : vector<32x256xf32>
    %149 = vector.extract_strided_slice %100 {offsets = [0, 15], sizes = [16, 241], strides = [1, 1]} : vector<16x256xf32> to vector<16x241xf32>
    %150 = vector.extract_strided_slice %100 {offsets = [0, 0], sizes = [16, 15], strides = [1, 1]} : vector<16x256xf32> to vector<16x15xf32>
    %151 = tpu.concatenate %149, %150 in 1 : vector<16x241xf32>, vector<16x15xf32> -> vector<16x256xf32>
    %152 = vector.broadcast %11 : vector<1x256xf32> to vector<16x256xf32>
    %153 = arith.mulf %151, %152 : vector<16x256xf32>
    %c6_80 = arith.constant 6 : index
    %c0_81 = arith.constant 0 : index
    %c0_82 = arith.constant 0 : index
    %154 = vector.load %arg5[%c6_80, %c0_81, %c0_82] : memref<9x32x16xf32, #tpu.memory_space<vmem>>, vector<1x32x16xf32>
    %155 = vector.shape_cast %154 : vector<1x32x16xf32> to vector<32x16xf32>
    %cst_83 = arith.constant dense<0.000000e+00> : vector<32x256xf32>
    %156 = tpu.matmul %155, %153, %cst_83 {dimension_numbers = #tpu.dot_dimension_numbers<[1], [0], [0], [1], [0, 0, 1, 1], [], []>} : vector<32x16xf32>, vector<16x256xf32>, vector<32x256xf32> -> vector<32x256xf32>
    %157 = arith.addf %148, %156 : vector<32x256xf32>
    %158 = vector.extract_strided_slice %100 {offsets = [0, 16], sizes = [16, 240], strides = [1, 1]} : vector<16x256xf32> to vector<16x240xf32>
    %159 = vector.extract_strided_slice %100 {offsets = [0, 0], sizes = [16, 16], strides = [1, 1]} : vector<16x256xf32> to vector<16x16xf32>
    %160 = tpu.concatenate %158, %159 in 1 : vector<16x240xf32>, vector<16x16xf32> -> vector<16x256xf32>
    %161 = vector.broadcast %13 : vector<1x256xf32> to vector<16x256xf32>
    %162 = arith.mulf %160, %161 : vector<16x256xf32>
    %c7_84 = arith.constant 7 : index
    %c0_85 = arith.constant 0 : index
    %c0_86 = arith.constant 0 : index
    %163 = vector.load %arg5[%c7_84, %c0_85, %c0_86] : memref<9x32x16xf32, #tpu.memory_space<vmem>>, vector<1x32x16xf32>
    %164 = vector.shape_cast %163 : vector<1x32x16xf32> to vector<32x16xf32>
    %cst_87 = arith.constant dense<0.000000e+00> : vector<32x256xf32>
    %165 = tpu.matmul %164, %162, %cst_87 {dimension_numbers = #tpu.dot_dimension_numbers<[1], [0], [0], [1], [0, 0, 1, 1], [], []>} : vector<32x16xf32>, vector<16x256xf32>, vector<32x256xf32> -> vector<32x256xf32>
    %166 = arith.addf %157, %165 : vector<32x256xf32>
    %167 = vector.extract_strided_slice %100 {offsets = [0, 17], sizes = [16, 239], strides = [1, 1]} : vector<16x256xf32> to vector<16x239xf32>
    %168 = vector.extract_strided_slice %100 {offsets = [0, 0], sizes = [16, 17], strides = [1, 1]} : vector<16x256xf32> to vector<16x17xf32>
    %169 = tpu.concatenate %167, %168 in 1 : vector<16x239xf32>, vector<16x17xf32> -> vector<16x256xf32>
    %170 = vector.broadcast %15 : vector<1x256xf32> to vector<16x256xf32>
    %171 = arith.mulf %169, %170 : vector<16x256xf32>
    %c8_88 = arith.constant 8 : index
    %c0_89 = arith.constant 0 : index
    %c0_90 = arith.constant 0 : index
    %172 = vector.load %arg5[%c8_88, %c0_89, %c0_90] : memref<9x32x16xf32, #tpu.memory_space<vmem>>, vector<1x32x16xf32>
    %173 = vector.shape_cast %172 : vector<1x32x16xf32> to vector<32x16xf32>
    %cst_91 = arith.constant dense<0.000000e+00> : vector<32x256xf32>
    %174 = tpu.matmul %173, %171, %cst_91 {dimension_numbers = #tpu.dot_dimension_numbers<[1], [0], [0], [1], [0, 0, 1, 1], [], []>} : vector<32x16xf32>, vector<16x256xf32>, vector<32x256xf32> -> vector<32x256xf32>
    %175 = arith.addf %166, %174 : vector<32x256xf32>
    %c0_92 = arith.constant 0 : index
    %c0_93 = arith.constant 0 : index
    %176 = vector.load %arg6[%c0_92, %c0_93] : memref<32x1xf32, #tpu.memory_space<vmem>>, vector<32x1xf32>
    %177 = vector.broadcast %176 : vector<32x1xf32> to vector<32x256xf32>
    %178 = arith.addf %175, %177 : vector<32x256xf32>
    %c1_94 = arith.constant 1 : index
    %179 = memref.load %arg11[%c1_94] : memref<3xf32, #tpu.memory_space<smem>>
    %cst_95 = arith.constant 0.000000e+00 : f32
    %180 = vector.broadcast %cst_95 : f32 to vector<32x256xf32>
    %181 = arith.cmpf oge, %178, %180 : vector<32x256xf32>
    %182 = vector.broadcast %179 : f32 to vector<32x256xf32>
    %183 = arith.mulf %182, %178 : vector<32x256xf32>
    %184 = arith.select %181, %178, %183 : vector<32x256xi1>, vector<32x256xf32>
    %185 = vector.extract_strided_slice %184 {offsets = [0, 239], sizes = [32, 17], strides = [1, 1]} : vector<32x256xf32> to vector<32x17xf32>
    %186 = vector.extract_strided_slice %184 {offsets = [0, 0], sizes = [32, 239], strides = [1, 1]} : vector<32x256xf32> to vector<32x239xf32>
    %187 = tpu.concatenate %185, %186 in 1 : vector<32x17xf32>, vector<32x239xf32> -> vector<32x256xf32>
    %188 = vector.broadcast %1 : vector<1x256xf32> to vector<32x256xf32>
    %189 = arith.mulf %187, %188 : vector<32x256xf32>
    %c0_96 = arith.constant 0 : index
    %c0_97 = arith.constant 0 : index
    %c0_98 = arith.constant 0 : index
    %190 = vector.load %arg7[%c0_96, %c0_97, %c0_98] : memref<9x16x32xf32, #tpu.memory_space<vmem>>, vector<1x16x32xf32>
    %191 = vector.shape_cast %190 : vector<1x16x32xf32> to vector<16x32xf32>
    %cst_99 = arith.constant dense<0.000000e+00> : vector<16x256xf32>
    %192 = tpu.matmul %191, %189, %cst_99 {dimension_numbers = #tpu.dot_dimension_numbers<[1], [0], [0], [1], [0, 0, 1, 1], [], []>} : vector<16x32xf32>, vector<32x256xf32>, vector<16x256xf32> -> vector<16x256xf32>
    %193 = vector.extract_strided_slice %184 {offsets = [0, 240], sizes = [32, 16], strides = [1, 1]} : vector<32x256xf32> to vector<32x16xf32>
    %194 = vector.extract_strided_slice %184 {offsets = [0, 0], sizes = [32, 240], strides = [1, 1]} : vector<32x256xf32> to vector<32x240xf32>
    %195 = tpu.concatenate %193, %194 in 1 : vector<32x16xf32>, vector<32x240xf32> -> vector<32x256xf32>
    %196 = vector.broadcast %3 : vector<1x256xf32> to vector<32x256xf32>
    %197 = arith.mulf %195, %196 : vector<32x256xf32>
    %c1_100 = arith.constant 1 : index
    %c0_101 = arith.constant 0 : index
    %c0_102 = arith.constant 0 : index
    %198 = vector.load %arg7[%c1_100, %c0_101, %c0_102] : memref<9x16x32xf32, #tpu.memory_space<vmem>>, vector<1x16x32xf32>
    %199 = vector.shape_cast %198 : vector<1x16x32xf32> to vector<16x32xf32>
    %cst_103 = arith.constant dense<0.000000e+00> : vector<16x256xf32>
    %200 = tpu.matmul %199, %197, %cst_103 {dimension_numbers = #tpu.dot_dimension_numbers<[1], [0], [0], [1], [0, 0, 1, 1], [], []>} : vector<16x32xf32>, vector<32x256xf32>, vector<16x256xf32> -> vector<16x256xf32>
    %201 = arith.addf %192, %200 : vector<16x256xf32>
    %202 = vector.extract_strided_slice %184 {offsets = [0, 241], sizes = [32, 15], strides = [1, 1]} : vector<32x256xf32> to vector<32x15xf32>
    %203 = vector.extract_strided_slice %184 {offsets = [0, 0], sizes = [32, 241], strides = [1, 1]} : vector<32x256xf32> to vector<32x241xf32>
    %204 = tpu.concatenate %202, %203 in 1 : vector<32x15xf32>, vector<32x241xf32> -> vector<32x256xf32>
    %205 = vector.broadcast %5 : vector<1x256xf32> to vector<32x256xf32>
    %206 = arith.mulf %204, %205 : vector<32x256xf32>
    %c2_104 = arith.constant 2 : index
    %c0_105 = arith.constant 0 : index
    %c0_106 = arith.constant 0 : index
    %207 = vector.load %arg7[%c2_104, %c0_105, %c0_106] : memref<9x16x32xf32, #tpu.memory_space<vmem>>, vector<1x16x32xf32>
    %208 = vector.shape_cast %207 : vector<1x16x32xf32> to vector<16x32xf32>
    %cst_107 = arith.constant dense<0.000000e+00> : vector<16x256xf32>
    %209 = tpu.matmul %208, %206, %cst_107 {dimension_numbers = #tpu.dot_dimension_numbers<[1], [0], [0], [1], [0, 0, 1, 1], [], []>} : vector<16x32xf32>, vector<32x256xf32>, vector<16x256xf32> -> vector<16x256xf32>
    %210 = arith.addf %201, %209 : vector<16x256xf32>
    %211 = vector.extract_strided_slice %184 {offsets = [0, 255], sizes = [32, 1], strides = [1, 1]} : vector<32x256xf32> to vector<32x1xf32>
    %212 = vector.extract_strided_slice %184 {offsets = [0, 0], sizes = [32, 255], strides = [1, 1]} : vector<32x256xf32> to vector<32x255xf32>
    %213 = tpu.concatenate %211, %212 in 1 : vector<32x1xf32>, vector<32x255xf32> -> vector<32x256xf32>
    %214 = vector.broadcast %7 : vector<1x256xf32> to vector<32x256xf32>
    %215 = arith.mulf %213, %214 : vector<32x256xf32>
    %c3_108 = arith.constant 3 : index
    %c0_109 = arith.constant 0 : index
    %c0_110 = arith.constant 0 : index
    %216 = vector.load %arg7[%c3_108, %c0_109, %c0_110] : memref<9x16x32xf32, #tpu.memory_space<vmem>>, vector<1x16x32xf32>
    %217 = vector.shape_cast %216 : vector<1x16x32xf32> to vector<16x32xf32>
    %cst_111 = arith.constant dense<0.000000e+00> : vector<16x256xf32>
    %218 = tpu.matmul %217, %215, %cst_111 {dimension_numbers = #tpu.dot_dimension_numbers<[1], [0], [0], [1], [0, 0, 1, 1], [], []>} : vector<16x32xf32>, vector<32x256xf32>, vector<16x256xf32> -> vector<16x256xf32>
    %219 = arith.addf %210, %218 : vector<16x256xf32>
    %c4_112 = arith.constant 4 : index
    %c0_113 = arith.constant 0 : index
    %c0_114 = arith.constant 0 : index
    %220 = vector.load %arg7[%c4_112, %c0_113, %c0_114] : memref<9x16x32xf32, #tpu.memory_space<vmem>>, vector<1x16x32xf32>
    %221 = vector.shape_cast %220 : vector<1x16x32xf32> to vector<16x32xf32>
    %cst_115 = arith.constant dense<0.000000e+00> : vector<16x256xf32>
    %222 = tpu.matmul %221, %184, %cst_115 {dimension_numbers = #tpu.dot_dimension_numbers<[1], [0], [0], [1], [0, 0, 1, 1], [], []>} : vector<16x32xf32>, vector<32x256xf32>, vector<16x256xf32> -> vector<16x256xf32>
    %223 = arith.addf %219, %222 : vector<16x256xf32>
    %224 = vector.extract_strided_slice %184 {offsets = [0, 1], sizes = [32, 255], strides = [1, 1]} : vector<32x256xf32> to vector<32x255xf32>
    %225 = vector.extract_strided_slice %184 {offsets = [0, 0], sizes = [32, 1], strides = [1, 1]} : vector<32x256xf32> to vector<32x1xf32>
    %226 = tpu.concatenate %224, %225 in 1 : vector<32x255xf32>, vector<32x1xf32> -> vector<32x256xf32>
    %227 = vector.broadcast %9 : vector<1x256xf32> to vector<32x256xf32>
    %228 = arith.mulf %226, %227 : vector<32x256xf32>
    %c5_116 = arith.constant 5 : index
    %c0_117 = arith.constant 0 : index
    %c0_118 = arith.constant 0 : index
    %229 = vector.load %arg7[%c5_116, %c0_117, %c0_118] : memref<9x16x32xf32, #tpu.memory_space<vmem>>, vector<1x16x32xf32>
    %230 = vector.shape_cast %229 : vector<1x16x32xf32> to vector<16x32xf32>
    %cst_119 = arith.constant dense<0.000000e+00> : vector<16x256xf32>
    %231 = tpu.matmul %230, %228, %cst_119 {dimension_numbers = #tpu.dot_dimension_numbers<[1], [0], [0], [1], [0, 0, 1, 1], [], []>} : vector<16x32xf32>, vector<32x256xf32>, vector<16x256xf32> -> vector<16x256xf32>
    %232 = arith.addf %223, %231 : vector<16x256xf32>
    %233 = vector.extract_strided_slice %184 {offsets = [0, 15], sizes = [32, 241], strides = [1, 1]} : vector<32x256xf32> to vector<32x241xf32>
    %234 = vector.extract_strided_slice %184 {offsets = [0, 0], sizes = [32, 15], strides = [1, 1]} : vector<32x256xf32> to vector<32x15xf32>
    %235 = tpu.concatenate %233, %234 in 1 : vector<32x241xf32>, vector<32x15xf32> -> vector<32x256xf32>
    %236 = vector.broadcast %11 : vector<1x256xf32> to vector<32x256xf32>
    %237 = arith.mulf %235, %236 : vector<32x256xf32>
    %c6_120 = arith.constant 6 : index
    %c0_121 = arith.constant 0 : index
    %c0_122 = arith.constant 0 : index
    %238 = vector.load %arg7[%c6_120, %c0_121, %c0_122] : memref<9x16x32xf32, #tpu.memory_space<vmem>>, vector<1x16x32xf32>
    %239 = vector.shape_cast %238 : vector<1x16x32xf32> to vector<16x32xf32>
    %cst_123 = arith.constant dense<0.000000e+00> : vector<16x256xf32>
    %240 = tpu.matmul %239, %237, %cst_123 {dimension_numbers = #tpu.dot_dimension_numbers<[1], [0], [0], [1], [0, 0, 1, 1], [], []>} : vector<16x32xf32>, vector<32x256xf32>, vector<16x256xf32> -> vector<16x256xf32>
    %241 = arith.addf %232, %240 : vector<16x256xf32>
    %242 = vector.extract_strided_slice %184 {offsets = [0, 16], sizes = [32, 240], strides = [1, 1]} : vector<32x256xf32> to vector<32x240xf32>
    %243 = vector.extract_strided_slice %184 {offsets = [0, 0], sizes = [32, 16], strides = [1, 1]} : vector<32x256xf32> to vector<32x16xf32>
    %244 = tpu.concatenate %242, %243 in 1 : vector<32x240xf32>, vector<32x16xf32> -> vector<32x256xf32>
    %245 = vector.broadcast %13 : vector<1x256xf32> to vector<32x256xf32>
    %246 = arith.mulf %244, %245 : vector<32x256xf32>
    %c7_124 = arith.constant 7 : index
    %c0_125 = arith.constant 0 : index
    %c0_126 = arith.constant 0 : index
    %247 = vector.load %arg7[%c7_124, %c0_125, %c0_126] : memref<9x16x32xf32, #tpu.memory_space<vmem>>, vector<1x16x32xf32>
    %248 = vector.shape_cast %247 : vector<1x16x32xf32> to vector<16x32xf32>
    %cst_127 = arith.constant dense<0.000000e+00> : vector<16x256xf32>
    %249 = tpu.matmul %248, %246, %cst_127 {dimension_numbers = #tpu.dot_dimension_numbers<[1], [0], [0], [1], [0, 0, 1, 1], [], []>} : vector<16x32xf32>, vector<32x256xf32>, vector<16x256xf32> -> vector<16x256xf32>
    %250 = arith.addf %241, %249 : vector<16x256xf32>
    %251 = vector.extract_strided_slice %184 {offsets = [0, 17], sizes = [32, 239], strides = [1, 1]} : vector<32x256xf32> to vector<32x239xf32>
    %252 = vector.extract_strided_slice %184 {offsets = [0, 0], sizes = [32, 17], strides = [1, 1]} : vector<32x256xf32> to vector<32x17xf32>
    %253 = tpu.concatenate %251, %252 in 1 : vector<32x239xf32>, vector<32x17xf32> -> vector<32x256xf32>
    %254 = vector.broadcast %15 : vector<1x256xf32> to vector<32x256xf32>
    %255 = arith.mulf %253, %254 : vector<32x256xf32>
    %c8_128 = arith.constant 8 : index
    %c0_129 = arith.constant 0 : index
    %c0_130 = arith.constant 0 : index
    %256 = vector.load %arg7[%c8_128, %c0_129, %c0_130] : memref<9x16x32xf32, #tpu.memory_space<vmem>>, vector<1x16x32xf32>
    %257 = vector.shape_cast %256 : vector<1x16x32xf32> to vector<16x32xf32>
    %cst_131 = arith.constant dense<0.000000e+00> : vector<16x256xf32>
    %258 = tpu.matmul %257, %255, %cst_131 {dimension_numbers = #tpu.dot_dimension_numbers<[1], [0], [0], [1], [0, 0, 1, 1], [], []>} : vector<16x32xf32>, vector<32x256xf32>, vector<16x256xf32> -> vector<16x256xf32>
    %259 = arith.addf %250, %258 : vector<16x256xf32>
    %c0_132 = arith.constant 0 : index
    %c0_133 = arith.constant 0 : index
    %260 = vector.load %arg8[%c0_132, %c0_133] : memref<16x1xf32, #tpu.memory_space<vmem>>, vector<16x1xf32>
    %261 = vector.broadcast %260 : vector<16x1xf32> to vector<16x256xf32>
    %262 = arith.addf %259, %261 : vector<16x256xf32>
    %c2_134 = arith.constant 2 : index
    %263 = memref.load %arg11[%c2_134] : memref<3xf32, #tpu.memory_space<smem>>
    %cst_135 = arith.constant 0.000000e+00 : f32
    %264 = vector.broadcast %cst_135 : f32 to vector<16x256xf32>
    %265 = arith.cmpf oge, %262, %264 : vector<16x256xf32>
    %266 = vector.broadcast %263 : f32 to vector<16x256xf32>
    %267 = arith.mulf %266, %262 : vector<16x256xf32>
    %268 = arith.select %265, %262, %267 : vector<16x256xi1>, vector<16x256xf32>
    %269 = vector.extract_strided_slice %268 {offsets = [0, 239], sizes = [16, 17], strides = [1, 1]} : vector<16x256xf32> to vector<16x17xf32>
    %270 = vector.extract_strided_slice %268 {offsets = [0, 0], sizes = [16, 239], strides = [1, 1]} : vector<16x256xf32> to vector<16x239xf32>
    %271 = tpu.concatenate %269, %270 in 1 : vector<16x17xf32>, vector<16x239xf32> -> vector<16x256xf32>
    %272 = vector.broadcast %1 : vector<1x256xf32> to vector<16x256xf32>
    %273 = arith.mulf %271, %272 : vector<16x256xf32>
    %c0_136 = arith.constant 0 : index
    %c0_137 = arith.constant 0 : index
    %c0_138 = arith.constant 0 : index
    %274 = vector.load %arg9[%c0_136, %c0_137, %c0_138] : memref<9x1x16xf32, #tpu.memory_space<vmem>>, vector<1x1x16xf32>
    %275 = vector.shape_cast %274 : vector<1x1x16xf32> to vector<1x16xf32>
    %cst_139 = arith.constant dense<0.000000e+00> : vector<1x256xf32>
    %276 = tpu.matmul %275, %273, %cst_139 {dimension_numbers = #tpu.dot_dimension_numbers<[1], [0], [0], [1], [0, 0, 1, 1], [], []>} : vector<1x16xf32>, vector<16x256xf32>, vector<1x256xf32> -> vector<1x256xf32>
    %277 = vector.extract_strided_slice %268 {offsets = [0, 240], sizes = [16, 16], strides = [1, 1]} : vector<16x256xf32> to vector<16x16xf32>
    %278 = vector.extract_strided_slice %268 {offsets = [0, 0], sizes = [16, 240], strides = [1, 1]} : vector<16x256xf32> to vector<16x240xf32>
    %279 = tpu.concatenate %277, %278 in 1 : vector<16x16xf32>, vector<16x240xf32> -> vector<16x256xf32>
    %280 = vector.broadcast %3 : vector<1x256xf32> to vector<16x256xf32>
    %281 = arith.mulf %279, %280 : vector<16x256xf32>
    %c1_140 = arith.constant 1 : index
    %c0_141 = arith.constant 0 : index
    %c0_142 = arith.constant 0 : index
    %282 = vector.load %arg9[%c1_140, %c0_141, %c0_142] : memref<9x1x16xf32, #tpu.memory_space<vmem>>, vector<1x1x16xf32>
    %283 = vector.shape_cast %282 : vector<1x1x16xf32> to vector<1x16xf32>
    %cst_143 = arith.constant dense<0.000000e+00> : vector<1x256xf32>
    %284 = tpu.matmul %283, %281, %cst_143 {dimension_numbers = #tpu.dot_dimension_numbers<[1], [0], [0], [1], [0, 0, 1, 1], [], []>} : vector<1x16xf32>, vector<16x256xf32>, vector<1x256xf32> -> vector<1x256xf32>
    %285 = arith.addf %276, %284 : vector<1x256xf32>
    %286 = vector.extract_strided_slice %268 {offsets = [0, 241], sizes = [16, 15], strides = [1, 1]} : vector<16x256xf32> to vector<16x15xf32>
    %287 = vector.extract_strided_slice %268 {offsets = [0, 0], sizes = [16, 241], strides = [1, 1]} : vector<16x256xf32> to vector<16x241xf32>
    %288 = tpu.concatenate %286, %287 in 1 : vector<16x15xf32>, vector<16x241xf32> -> vector<16x256xf32>
    %289 = vector.broadcast %5 : vector<1x256xf32> to vector<16x256xf32>
    %290 = arith.mulf %288, %289 : vector<16x256xf32>
    %c2_144 = arith.constant 2 : index
    %c0_145 = arith.constant 0 : index
    %c0_146 = arith.constant 0 : index
    %291 = vector.load %arg9[%c2_144, %c0_145, %c0_146] : memref<9x1x16xf32, #tpu.memory_space<vmem>>, vector<1x1x16xf32>
    %292 = vector.shape_cast %291 : vector<1x1x16xf32> to vector<1x16xf32>
    %cst_147 = arith.constant dense<0.000000e+00> : vector<1x256xf32>
    %293 = tpu.matmul %292, %290, %cst_147 {dimension_numbers = #tpu.dot_dimension_numbers<[1], [0], [0], [1], [0, 0, 1, 1], [], []>} : vector<1x16xf32>, vector<16x256xf32>, vector<1x256xf32> -> vector<1x256xf32>
    %294 = arith.addf %285, %293 : vector<1x256xf32>
    %295 = vector.extract_strided_slice %268 {offsets = [0, 255], sizes = [16, 1], strides = [1, 1]} : vector<16x256xf32> to vector<16x1xf32>
    %296 = vector.extract_strided_slice %268 {offsets = [0, 0], sizes = [16, 255], strides = [1, 1]} : vector<16x256xf32> to vector<16x255xf32>
    %297 = tpu.concatenate %295, %296 in 1 : vector<16x1xf32>, vector<16x255xf32> -> vector<16x256xf32>
    %298 = vector.broadcast %7 : vector<1x256xf32> to vector<16x256xf32>
    %299 = arith.mulf %297, %298 : vector<16x256xf32>
    %c3_148 = arith.constant 3 : index
    %c0_149 = arith.constant 0 : index
    %c0_150 = arith.constant 0 : index
    %300 = vector.load %arg9[%c3_148, %c0_149, %c0_150] : memref<9x1x16xf32, #tpu.memory_space<vmem>>, vector<1x1x16xf32>
    %301 = vector.shape_cast %300 : vector<1x1x16xf32> to vector<1x16xf32>
    %cst_151 = arith.constant dense<0.000000e+00> : vector<1x256xf32>
    %302 = tpu.matmul %301, %299, %cst_151 {dimension_numbers = #tpu.dot_dimension_numbers<[1], [0], [0], [1], [0, 0, 1, 1], [], []>} : vector<1x16xf32>, vector<16x256xf32>, vector<1x256xf32> -> vector<1x256xf32>
    %303 = arith.addf %294, %302 : vector<1x256xf32>
    %c4_152 = arith.constant 4 : index
    %c0_153 = arith.constant 0 : index
    %c0_154 = arith.constant 0 : index
    %304 = vector.load %arg9[%c4_152, %c0_153, %c0_154] : memref<9x1x16xf32, #tpu.memory_space<vmem>>, vector<1x1x16xf32>
    %305 = vector.shape_cast %304 : vector<1x1x16xf32> to vector<1x16xf32>
    %cst_155 = arith.constant dense<0.000000e+00> : vector<1x256xf32>
    %306 = tpu.matmul %305, %268, %cst_155 {dimension_numbers = #tpu.dot_dimension_numbers<[1], [0], [0], [1], [0, 0, 1, 1], [], []>} : vector<1x16xf32>, vector<16x256xf32>, vector<1x256xf32> -> vector<1x256xf32>
    %307 = arith.addf %303, %306 : vector<1x256xf32>
    %308 = vector.extract_strided_slice %268 {offsets = [0, 1], sizes = [16, 255], strides = [1, 1]} : vector<16x256xf32> to vector<16x255xf32>
    %309 = vector.extract_strided_slice %268 {offsets = [0, 0], sizes = [16, 1], strides = [1, 1]} : vector<16x256xf32> to vector<16x1xf32>
    %310 = tpu.concatenate %308, %309 in 1 : vector<16x255xf32>, vector<16x1xf32> -> vector<16x256xf32>
    %311 = vector.broadcast %9 : vector<1x256xf32> to vector<16x256xf32>
    %312 = arith.mulf %310, %311 : vector<16x256xf32>
    %c5_156 = arith.constant 5 : index
    %c0_157 = arith.constant 0 : index
    %c0_158 = arith.constant 0 : index
    %313 = vector.load %arg9[%c5_156, %c0_157, %c0_158] : memref<9x1x16xf32, #tpu.memory_space<vmem>>, vector<1x1x16xf32>
    %314 = vector.shape_cast %313 : vector<1x1x16xf32> to vector<1x16xf32>
    %cst_159 = arith.constant dense<0.000000e+00> : vector<1x256xf32>
    %315 = tpu.matmul %314, %312, %cst_159 {dimension_numbers = #tpu.dot_dimension_numbers<[1], [0], [0], [1], [0, 0, 1, 1], [], []>} : vector<1x16xf32>, vector<16x256xf32>, vector<1x256xf32> -> vector<1x256xf32>
    %316 = arith.addf %307, %315 : vector<1x256xf32>
    %317 = vector.extract_strided_slice %268 {offsets = [0, 15], sizes = [16, 241], strides = [1, 1]} : vector<16x256xf32> to vector<16x241xf32>
    %318 = vector.extract_strided_slice %268 {offsets = [0, 0], sizes = [16, 15], strides = [1, 1]} : vector<16x256xf32> to vector<16x15xf32>
    %319 = tpu.concatenate %317, %318 in 1 : vector<16x241xf32>, vector<16x15xf32> -> vector<16x256xf32>
    %320 = vector.broadcast %11 : vector<1x256xf32> to vector<16x256xf32>
    %321 = arith.mulf %319, %320 : vector<16x256xf32>
    %c6_160 = arith.constant 6 : index
    %c0_161 = arith.constant 0 : index
    %c0_162 = arith.constant 0 : index
    %322 = vector.load %arg9[%c6_160, %c0_161, %c0_162] : memref<9x1x16xf32, #tpu.memory_space<vmem>>, vector<1x1x16xf32>
    %323 = vector.shape_cast %322 : vector<1x1x16xf32> to vector<1x16xf32>
    %cst_163 = arith.constant dense<0.000000e+00> : vector<1x256xf32>
    %324 = tpu.matmul %323, %321, %cst_163 {dimension_numbers = #tpu.dot_dimension_numbers<[1], [0], [0], [1], [0, 0, 1, 1], [], []>} : vector<1x16xf32>, vector<16x256xf32>, vector<1x256xf32> -> vector<1x256xf32>
    %325 = arith.addf %316, %324 : vector<1x256xf32>
    %326 = vector.extract_strided_slice %268 {offsets = [0, 16], sizes = [16, 240], strides = [1, 1]} : vector<16x256xf32> to vector<16x240xf32>
    %327 = vector.extract_strided_slice %268 {offsets = [0, 0], sizes = [16, 16], strides = [1, 1]} : vector<16x256xf32> to vector<16x16xf32>
    %328 = tpu.concatenate %326, %327 in 1 : vector<16x240xf32>, vector<16x16xf32> -> vector<16x256xf32>
    %329 = vector.broadcast %13 : vector<1x256xf32> to vector<16x256xf32>
    %330 = arith.mulf %328, %329 : vector<16x256xf32>
    %c7_164 = arith.constant 7 : index
    %c0_165 = arith.constant 0 : index
    %c0_166 = arith.constant 0 : index
    %331 = vector.load %arg9[%c7_164, %c0_165, %c0_166] : memref<9x1x16xf32, #tpu.memory_space<vmem>>, vector<1x1x16xf32>
    %332 = vector.shape_cast %331 : vector<1x1x16xf32> to vector<1x16xf32>
    %cst_167 = arith.constant dense<0.000000e+00> : vector<1x256xf32>
    %333 = tpu.matmul %332, %330, %cst_167 {dimension_numbers = #tpu.dot_dimension_numbers<[1], [0], [0], [1], [0, 0, 1, 1], [], []>} : vector<1x16xf32>, vector<16x256xf32>, vector<1x256xf32> -> vector<1x256xf32>
    %334 = arith.addf %325, %333 : vector<1x256xf32>
    %335 = vector.extract_strided_slice %268 {offsets = [0, 17], sizes = [16, 239], strides = [1, 1]} : vector<16x256xf32> to vector<16x239xf32>
    %336 = vector.extract_strided_slice %268 {offsets = [0, 0], sizes = [16, 17], strides = [1, 1]} : vector<16x256xf32> to vector<16x17xf32>
    %337 = tpu.concatenate %335, %336 in 1 : vector<16x239xf32>, vector<16x17xf32> -> vector<16x256xf32>
    %338 = vector.broadcast %15 : vector<1x256xf32> to vector<16x256xf32>
    %339 = arith.mulf %337, %338 : vector<16x256xf32>
    %c8_168 = arith.constant 8 : index
    %c0_169 = arith.constant 0 : index
    %c0_170 = arith.constant 0 : index
    %340 = vector.load %arg9[%c8_168, %c0_169, %c0_170] : memref<9x1x16xf32, #tpu.memory_space<vmem>>, vector<1x1x16xf32>
    %341 = vector.shape_cast %340 : vector<1x1x16xf32> to vector<1x16xf32>
    %cst_171 = arith.constant dense<0.000000e+00> : vector<1x256xf32>
    %342 = tpu.matmul %341, %339, %cst_171 {dimension_numbers = #tpu.dot_dimension_numbers<[1], [0], [0], [1], [0, 0, 1, 1], [], []>} : vector<1x16xf32>, vector<16x256xf32>, vector<1x256xf32> -> vector<1x256xf32>
    %343 = arith.addf %334, %342 : vector<1x256xf32>
    %c0_172 = arith.constant 0 : index
    %c0_173 = arith.constant 0 : index
    %344 = vector.load %arg10[%c0_172, %c0_173] : memref<1x1xf32, #tpu.memory_space<vmem>>, vector<1x1xf32>
    %345 = vector.broadcast %344 : vector<1x1xf32> to vector<1x256xf32>
    %346 = arith.addf %343, %345 : vector<1x256xf32>
    %347 = math.tanh %346 : vector<1x256xf32>
    %c0_174 = arith.constant 0 : index
    %c0_175 = arith.constant 0 : index
    %348 = vector.load %arg12[%c0_174, %c0_175] : memref<1x256xf32, #tpu.memory_space<vmem>>, vector<1x256xf32>
    tpu.vector_store %arg12[%c0_174, %c0_175], %347 {strides = array<i32>} : memref<1x256xf32, #tpu.memory_space<vmem>>, vector<1x256xf32>,
    return
  }
  func.func @transform_0(%arg0: i32) -> (i32, i32) {
    %c0_i32 = arith.constant 0 : i32
    %c0_i32_0 = arith.constant 0 : i32
    return %c0_i32, %arg0 : i32, i32
  }
  func.func @transform_1(%arg0: i32) -> (i32, i32, i32) {
    %c0_i32 = arith.constant 0 : i32
    %c0_i32_0 = arith.constant 0 : i32
    %c0_i32_1 = arith.constant 0 : i32
    %c0_i32_2 = arith.constant 0 : i32
    return %c0_i32, %c0_i32_0, %c0_i32_1 : i32, i32, i32
  }
  func.func @transform_2(%arg0: i32) -> (i32, i32, i32) {
    %c0_i32 = arith.constant 0 : i32
    %c0_i32_0 = arith.constant 0 : i32
    %c0_i32_1 = arith.constant 0 : i32
    %c0_i32_2 = arith.constant 0 : i32
    return %c0_i32, %c0_i32_0, %c0_i32_1 : i32, i32, i32
  }
  func.func @transform_3(%arg0: i32) -> (i32, i32) {
    %c0_i32 = arith.constant 0 : i32
    %c0_i32_0 = arith.constant 0 : i32
    %c0_i32_1 = arith.constant 0 : i32
    return %c0_i32, %c0_i32_0 : i32, i32
  }
  func.func @transform_4(%arg0: i32) -> (i32, i32, i32) {
    %c0_i32 = arith.constant 0 : i32
    %c0_i32_0 = arith.constant 0 : i32
    %c0_i32_1 = arith.constant 0 : i32
    %c0_i32_2 = arith.constant 0 : i32
    return %c0_i32, %c0_i32_0, %c0_i32_1 : i32, i32, i32
  }
  func.func @transform_5(%arg0: i32) -> (i32, i32) {
    %c0_i32 = arith.constant 0 : i32
    %c0_i32_0 = arith.constant 0 : i32
    %c0_i32_1 = arith.constant 0 : i32
    return %c0_i32, %c0_i32_0 : i32, i32
  }
  func.func @transform_6(%arg0: i32) -> (i32, i32, i32) {
    %c0_i32 = arith.constant 0 : i32
    %c0_i32_0 = arith.constant 0 : i32
    %c0_i32_1 = arith.constant 0 : i32
    %c0_i32_2 = arith.constant 0 : i32
    return %c0_i32, %c0_i32_0, %c0_i32_1 : i32, i32, i32
  }
  func.func @transform_7(%arg0: i32) -> (i32, i32) {
    %c0_i32 = arith.constant 0 : i32
    %c0_i32_0 = arith.constant 0 : i32
    %c0_i32_1 = arith.constant 0 : i32
    return %c0_i32, %c0_i32_0 : i32, i32
  }
  func.func @transform_8(%arg0: i32) -> (i32, i32, i32) {
    %c0_i32 = arith.constant 0 : i32
    %c0_i32_0 = arith.constant 0 : i32
    %c0_i32_1 = arith.constant 0 : i32
    %c0_i32_2 = arith.constant 0 : i32
    return %c0_i32, %c0_i32_0, %c0_i32_1 : i32, i32, i32
  }
  func.func @transform_9(%arg0: i32) -> (i32, i32) {
    %c0_i32 = arith.constant 0 : i32
    %c0_i32_0 = arith.constant 0 : i32
    %c0_i32_1 = arith.constant 0 : i32
    return %c0_i32, %c0_i32_0 : i32, i32
  }
  func.func @transform_10(%arg0: i32) -> i32 {
    %c0_i32 = arith.constant 0 : i32
    %c0_i32_0 = arith.constant 0 : i32
    return %c0_i32 : i32
  }
  func.func @transform_11(%arg0: i32) -> (i32, i32) {
    %c0_i32 = arith.constant 0 : i32
    %c0_i32_0 = arith.constant 0 : i32
    return %c0_i32, %arg0 : i32, i32
  }
}

</mosaic_0001>

<llo_original>
// kernel: tpu_custom_call.1
$region0: #{tpu_custom_call.1}
  #allocation0 [shape = 'u32[]', space=smem, size = 0x4, offset = 0x4, fixed_abs, tag = 'smem constant byte address 0x4 - core index']
  #allocation1 [shape = 'u32[144,128]{1,0:T(1,128)}', space=vmem, size = 0x12000, scoped, tag = 'internal scratch']
  %s0 = inlined_call_operand.hbm [shape: f32[8,128], index: 0, kind: input, shape index: {}]
  %s1 = inlined_call_operand.hbm [shape: f32[8,128], index: 1, kind: output, shape index: {}]
  %s2 = sld [smem:[#allocation0]]
  $region18: #{tpu_custom_call.1} parent=0
    _
  %s4 = ssub.s32 1, %s2
  %s5 = scalar_select 0, %s4, %s2
  $region1: #{tpu_custom_call.1} parent=0
    #allocation2 [shape = 'u8[4096]{0}', space=vmem, size = 0x1000, scoped, tag = 'input window, operand 0, single buffered']
    #allocation3 [shape = 's32[1]{0}', space=sflag, size = 0x4, scoped, tag = 'scoped memory for tpu_custom_call.1']
    #allocation4 [shape = 's32[1]{0}', space=sflag, size = 0x4, scoped, tag = 'scoped memory for tpu_custom_call.1']
    #allocation5 [shape = 'u8[4096]{0}', space=vmem, size = 0x1000, scoped, tag = 'output window, operand 0, single buffered']
    %6 = vsyncpa [#allocation3], 0
    %7 = vsyncpa [#allocation4], 0
    // Predicated region
    $region2: #{tpu_custom_call.1} parent=1 // pred_check
      _
    $region3: #{tpu_custom_call.1} parent=1 // pred_check_branch
      %9 = sbr.rel (0) target = $region5
    $region4: #{tpu_custom_call.1} parent=1 // pred_region
      %s11 = ssub.s32 128, 128
      %12 = vsyncadd [#allocation3], %s11
      %s14 = sshll.u32 [#allocation2], 4
      %s15 = int_to_ptr.vmem [resolvable:$true] %s14
      %17 = dma.hbm_to_vmem [thread:$0]  %s0, 128, %s15, [#allocation3]
    $region5: #{tpu_custom_call.1} parent=1 // pred_fallthru
      _
    // Predicated region
    $region6: #{tpu_custom_call.1} parent=1 // pred_check
      _
    $region7: #{tpu_custom_call.1} parent=1 // pred_check_branch
      %19 = sbr.rel (0) target = $region9
    $region8: #{tpu_custom_call.1} parent=1 // pred_region
      %20 = dma.done [#allocation3], 128
    $region9: #{tpu_custom_call.1} parent=1 // pred_fallthru
      _
    %v21 = vld [vmem:[#allocation2] sm:$0xff]
    %22 = vrot.lane.b32.xlu0 %v21, 3
    %v23 = vpop.permute.xlu0 %22
    %24 = vst [vmem:[#allocation5] sm:$0xff] %v23
    // Predicated region
    $region10: #{tpu_custom_call.1} parent=1 // pred_check
      _
    $region11: #{tpu_custom_call.1} parent=1 // pred_check_branch
      %26 = sbr.rel (0) target = $region13
    $region12: #{tpu_custom_call.1} parent=1 // pred_region
      %s28 = ssub.s32 128, 128
      %29 = vsyncadd [#allocation4], %s28
      %s31 = sshll.u32 [#allocation5], 4
      %s32 = int_to_ptr.vmem [resolvable:$true] %s31
      %34 = dma.vmem_to_hbm [thread:$0]  %s32, 128, %s1, [#allocation4]
    $region13: #{tpu_custom_call.1} parent=1 // pred_fallthru
      _
    // Predicated region
    $region14: #{tpu_custom_call.1} parent=1 // pred_check
      _
    $region15: #{tpu_custom_call.1} parent=1 // pred_check_branch
      %36 = sbr.rel (0) target = $region17
    $region16: #{tpu_custom_call.1} parent=1 // pred_region
      %37 = dma.done [#allocation4], 128
    $region17: #{tpu_custom_call.1} parent=1 // pred_fallthru
      _
    %38 = vsyncpa [#allocation3], 1
    %39 = vsyncpa [#allocation4], 1

// kernel: tpu_custom_call.1
$region0: #{tpu_custom_call.1}
  #allocation0 [shape = 'u32[]', space=smem, size = 0x4, offset = 0x4, fixed_abs, tag = 'smem constant byte address 0x4 - core index']
  #allocation1 [shape = 'u32[144,128]{1,0:T(1,128)}', space=vmem, size = 0x12000, scoped, tag = 'internal scratch']
  #allocation2 [shape = 'f32[1,1]{1,0:T(1,128)S(1)}', space=vmem, size = 0x200, scoped, tag = 'scoped memory for tpu_custom_call.1']
  %s0 = inlined_call_operand.vmem [shape: f32[8,512], index: 0, kind: input, shape index: {}]
  %s1 = inlined_call_operand.vmem [shape: f32[9,1,256], index: 1, kind: input, shape index: {}]
  %s2 = inlined_call_operand.vmem [shape: f32[9,16,8], index: 2, kind: input, shape index: {}]
  %s3 = inlined_call_operand.vmem [shape: f32[16,1], index: 3, kind: input, shape index: {}]
  %s4 = inlined_call_operand.vmem [shape: f32[9,32,16], index: 4, kind: input, shape index: {}]
  %s5 = inlined_call_operand.vmem [shape: f32[32,1], index: 5, kind: input, shape index: {}]
  %s6 = inlined_call_operand.vmem [shape: f32[9,16,32], index: 6, kind: input, shape index: {}]
  %s7 = inlined_call_operand.vmem [shape: f32[16,1], index: 7, kind: input, shape index: {}]
  %s8 = inlined_call_operand.vmem [shape: f32[9,1,16], index: 8, kind: input, shape index: {}]
  %s9 = inlined_call_operand.<no memory space> [shape: f32[1,1], index: 9, kind: input, shape index: {}]
  %s10 = inlined_call_operand.vmem [shape: f32[3], index: 10, kind: input, shape index: {}]
  %s11 = inlined_call_operand.hbm [shape: f32[1,512], index: 11, kind: output, shape index: {}]
  %s12 = sld [smem:[#allocation0]]
  $region81: #{tpu_custom_call.1} parent=0
    _
  %s14 = ssub.s32 1, %s12
  %s15 = scalar_select 0, %s14, %s12
  %v16 = vstv %s9
  %17 = vst [vmem:[#allocation2] sm:$0x1] %v16
  $region1: #{tpu_custom_call.1} parent=0
    #allocation3 [shape = 'u8[512]{0}', space=smem, size = 0x200, scoped, tag = 'input window, operand 10, single buffered']
    #allocation4 [shape = 's32[2]{0}', space=sflag, size = 0x8, scoped, tag = 'scoped memory for tpu_custom_call.1']
    #allocation5 [shape = 's32[2]{0}', space=sflag, size = 0x8, scoped, tag = 'scoped memory for tpu_custom_call.1']
    #allocation6 [shape = 'u8[2048]{0}', space=vmem, size = 0x800, scoped, tag = 'output window, operand 0']
    %18 = vsyncpa [#allocation5], 0
    %19 = vsyncpa [#allocation4], 0
    %s20 = scalar_lea.sflag [#allocation4], 1
    %21 = vsyncpa %s20, 0
    loop: start=0, step=1, limit=4
    $region2: #{tpu_custom_call.1} parent=1 // loop_pre_header
      _
    $region3: #{tpu_custom_call.1} parent=1 // loop_header
      %s23 = sphi 0, %s27
      %p24 = scmp.ge.s32.totalorder %s23, 4
      %s33 = sphi 0, %s35
      %s36 = sphi 0, %s33
      %s37 = sphi 0, %s36
      %s53 = sphi 0, %s37
      %s57 = sphi 0, %s57
      %s59 = sphi 0, %s57
      %s60 = sphi 0, %s59
      %s74 = sphi 0, %s60
      %s78 = sphi 0, %s78
      %s80 = sphi 0, %s78
      %s81 = sphi 0, %s80
      %s95 = sphi 0, %s81
      %s99 = sphi 0, %s99
      %s101 = sphi 0, %s99
      %s102 = sphi 0, %s101
      %s116 = sphi 0, %s102
      %s120 = sphi 0, %s120
      %s122 = sphi 0, %s120
      %s123 = sphi 0, %s122
      %s137 = sphi 0, %s123
      %s141 = sphi 0, %s141
      %s143 = sphi 0, %s141
      %s144 = sphi 0, %s143
      %s158 = sphi 0, %s144
      %s162 = sphi 0, %s162
      %s164 = sphi 0, %s162
      %s165 = sphi 0, %s164
      %s179 = sphi 0, %s165
      %s183 = sphi 0, %s183
      %s185 = sphi 0, %s183
      %s186 = sphi 0, %s185
      %s200 = sphi 0, %s186
      %s204 = sphi 0, %s204
      %s206 = sphi 0, %s204
      %s207 = sphi 0, %s206
      %s221 = sphi 0, %s207
      %s225 = sphi 0, %s225
      %s227 = sphi 0, %s225
      %s228 = sphi 0, %s227
      %s242 = sphi 0, %s228
      %s246 = sphi 0, %s246
      %s248 = sphi 0, %s246
      %s249 = sphi 0, %s248
      %s263 = sphi 0, %s249
      %s269 = sphi 0, %s271
      %s272 = sphi 0, %s269
      %s273 = sphi 0, %s272
      %s289 = sphi 0, %s273
    $region4: #{tpu_custom_call.1} parent=1 // loop_header_branch
      %26 = sbr.rel (%p24) target = $region8
    $region5: #{tpu_custom_call.1} parent=1 // loop_body
      %s28 = ssub.s32 %s23, 1
      %s29 = ssub.s32 %s23, 2
      %s30 = sadd.s32 %s23, 1
      %s31 = ssub.s32 %s23, %s30
      %p32 = scmp.eq.s32.totalorder %s31, 0
      %s34 = sadd.s32 %s33, 1
      %s35 = scalar_select %p32, %s33, %s34
      %p38 = pneg %p32
      %p39 = scmp.eq.s32.totalorder %s23, 1
      %p40 = por %p38, %p39
      %p41 = scmp.ne.s32.totalorder %s33, %s36
      %p42 = scmp.eq.s32.totalorder %s23, 0
      %p43 = por %p41, %p42
      %p44 = scmp.ne.s32.totalorder %s33, %s36
      %p45 = scmp.eq.s32.totalorder %s28, 1
      %p46 = por %p44, %p45
      %p47 = scmp.ne.s32.totalorder %s36, %s37
      %p48 = scmp.eq.s32.totalorder %s28, 0
      %p49 = por %p47, %p48
      %p50 = scmp.ne.s32.totalorder %s36, %s37
      %p51 = scmp.eq.s32.totalorder %s29, 1
      %p52 = por %p50, %p51
      %p54 = scmp.ne.s32.totalorder %s37, %s53
      %p55 = scmp.eq.s32.totalorder %s29, 0
      %p56 = por %p54, %p55
      %s58 = sadd.s32 %s57, 1
      %p61 = scmp.eq.s32.totalorder %s23, 1
      %p62 = scmp.ne.s32.totalorder %s57, %s59
      %p63 = scmp.eq.s32.totalorder %s23, 0
      %p64 = por %p62, %p63
      %p65 = scmp.ne.s32.totalorder %s57, %s59
      %p66 = scmp.eq.s32.totalorder %s28, 1
      %p67 = por %p65, %p66
      %p68 = scmp.ne.s32.totalorder %s59, %s60
      %p69 = scmp.eq.s32.totalorder %s28, 0
      %p70 = por %p68, %p69
      %p71 = scmp.ne.s32.totalorder %s59, %s60
      %p72 = scmp.eq.s32.totalorder %s29, 1
      %p73 = por %p71, %p72
      %p75 = scmp.ne.s32.totalorder %s60, %s74
      %p76 = scmp.eq.s32.totalorder %s29, 0
      %p77 = por %p75, %p76
      %s79 = sadd.s32 %s78, 1
      %p82 = scmp.eq.s32.totalorder %s23, 1
      %p83 = scmp.ne.s32.totalorder %s78, %s80
      %p84 = scmp.eq.s32.totalorder %s23, 0
      %p85 = por %p83, %p84
      %p86 = scmp.ne.s32.totalorder %s78, %s80
      %p87 = scmp.eq.s32.totalorder %s28, 1
      %p88 = por %p86, %p87
      %p89 = scmp.ne.s32.totalorder %s80, %s81
      %p90 = scmp.eq.s32.totalorder %s28, 0
      %p91 = por %p89, %p90
      %p92 = scmp.ne.s32.totalorder %s80, %s81
      %p93 = scmp.eq.s32.totalorder %s29, 1
      %p94 = por %p92, %p93
      %p96 = scmp.ne.s32.totalorder %s81, %s95
      %p97 = scmp.eq.s32.totalorder %s29, 0
      %p98 = por %p96, %p97
      %s100 = sadd.s32 %s99, 1
      %p103 = scmp.eq.s32.totalorder %s23, 1
      %p104 = scmp.ne.s32.totalorder %s99, %s101
      %p105 = scmp.eq.s32.totalorder %s23, 0
      %p106 = por %p104, %p105
      %p107 = scmp.ne.s32.totalorder %s99, %s101
      %p108 = scmp.eq.s32.totalorder %s28, 1
      %p109 = por %p107, %p108
      %p110 = scmp.ne.s32.totalorder %s101, %s102
      %p111 = scmp.eq.s32.totalorder %s28, 0
      %p112 = por %p110, %p111
      %p113 = scmp.ne.s32.totalorder %s101, %s102
      %p114 = scmp.eq.s32.totalorder %s29, 1
      %p115 = por %p113, %p114
      %p117 = scmp.ne.s32.totalorder %s102, %s116
      %p118 = scmp.eq.s32.totalorder %s29, 0
      %p119 = por %p117, %p118
      %s121 = sadd.s32 %s120, 1
      %p124 = scmp.eq.s32.totalorder %s23, 1
      %p125 = scmp.ne.s32.totalorder %s120, %s122
      %p126 = scmp.eq.s32.totalorder %s23, 0
      %p127 = por %p125, %p126
      %p128 = scmp.ne.s32.totalorder %s120, %s122
      %p129 = scmp.eq.s32.totalorder %s28, 1
      %p130 = por %p128, %p129
      %p131 = scmp.ne.s32.totalorder %s122, %s123
      %p132 = scmp.eq.s32.totalorder %s28, 0
      %p133 = por %p131, %p132
      %p134 = scmp.ne.s32.totalorder %s122, %s123
      %p135 = scmp.eq.s32.totalorder %s29, 1
      %p136 = por %p134, %p135
      %p138 = scmp.ne.s32.totalorder %s123, %s137
      %p139 = scmp.eq.s32.totalorder %s29, 0
      %p140 = por %p138, %p139
      %s142 = sadd.s32 %s141, 1
      %p145 = scmp.eq.s32.totalorder %s23, 1
      %p146 = scmp.ne.s32.totalorder %s141, %s143
      %p147 = scmp.eq.s32.totalorder %s23, 0
      %p148 = por %p146, %p147
      %p149 = scmp.ne.s32.totalorder %s141, %s143
      %p150 = scmp.eq.s32.totalorder %s28, 1
      %p151 = por %p149, %p150
      %p152 = scmp.ne.s32.totalorder %s143, %s144
      %p153 = scmp.eq.s32.totalorder %s28, 0
      %p154 = por %p152, %p153
      %p155 = scmp.ne.s32.totalorder %s143, %s144
      %p156 = scmp.eq.s32.totalorder %s29, 1
      %p157 = por %p155, %p156
      %p159 = scmp.ne.s32.totalorder %s144, %s158
      %p160 = scmp.eq.s32.totalorder %s29, 0
      %p161 = por %p159, %p160
      %s163 = sadd.s32 %s162, 1
      %p166 = scmp.eq.s32.totalorder %s23, 1
      %p167 = scmp.ne.s32.totalorder %s162, %s164
      %p168 = scmp.eq.s32.totalorder %s23, 0
      %p169 = por %p167, %p168
      %p170 = scmp.ne.s32.totalorder %s162, %s164
      %p171 = scmp.eq.s32.totalorder %s28, 1
      %p172 = por %p170, %p171
      %p173 = scmp.ne.s32.totalorder %s164, %s165
      %p174 = scmp.eq.s32.totalorder %s28, 0
      %p175 = por %p173, %p174
      %p176 = scmp.ne.s32.totalorder %s164, %s165
      %p177 = scmp.eq.s32.totalorder %s29, 1
      %p178 = por %p176, %p177
      %p180 = scmp.ne.s32.totalorder %s165, %s179
      %p181 = scmp.eq.s32.totalorder %s29, 0
      %p182 = por %p180, %p181
      %s184 = sadd.s32 %s183, 1
      %p187 = scmp.eq.s32.totalorder %s23, 1
      %p188 = scmp.ne.s32.totalorder %s183, %s185
      %p189 = scmp.eq.s32.totalorder %s23, 0
      %p190 = por %p188, %p189
      %p191 = scmp.ne.s32.totalorder %s183, %s185
      %p192 = scmp.eq.s32.totalorder %s28, 1
      %p193 = por %p191, %p192
      %p194 = scmp.ne.s32.totalorder %s185, %s186
      %p195 = scmp.eq.s32.totalorder %s28, 0
      %p196 = por %p194, %p195
      %p197 = scmp.ne.s32.totalorder %s185, %s186
      %p198 = scmp.eq.s32.totalorder %s29, 1
      %p199 = por %p197, %p198
      %p201 = scmp.ne.s32.totalorder %s186, %s200
      %p202 = scmp.eq.s32.totalorder %s29, 0
      %p203 = por %p201, %p202
      %s205 = sadd.s32 %s204, 1
      %p208 = scmp.eq.s32.totalorder %s23, 1
      %p209 = scmp.ne.s32.totalorder %s204, %s206
      %p210 = scmp.eq.s32.totalorder %s23, 0
      %p211 = por %p209, %p210
      %p212 = scmp.ne.s32.totalorder %s204, %s206
      %p213 = scmp.eq.s32.totalorder %s28, 1
      %p214 = por %p212, %p213
      %p215 = scmp.ne.s32.totalorder %s206, %s207
      %p216 = scmp.eq.s32.totalorder %s28, 0
      %p217 = por %p215, %p216
      %p218 = scmp.ne.s32.totalorder %s206, %s207
      %p219 = scmp.eq.s32.totalorder %s29, 1
      %p220 = por %p218, %p219
      %p222 = scmp.ne.s32.totalorder %s207, %s221
      %p223 = scmp.eq.s32.totalorder %s29, 0
      %p224 = por %p222, %p223
      %s226 = sadd.s32 %s225, 1
      %p229 = scmp.eq.s32.totalorder %s23, 1
      %p230 = scmp.ne.s32.totalorder %s225, %s227
      %p231 = scmp.eq.s32.totalorder %s23, 0
      %p232 = por %p230, %p231
      %p233 = scmp.ne.s32.totalorder %s225, %s227
      %p234 = scmp.eq.s32.totalorder %s28, 1
      %p235 = por %p233, %p234
      %p236 = scmp.ne.s32.totalorder %s227, %s228
      %p237 = scmp.eq.s32.totalorder %s28, 0
      %p238 = por %p236, %p237
      %p239 = scmp.ne.s32.totalorder %s227, %s228
      %p240 = scmp.eq.s32.totalorder %s29, 1
      %p241 = por %p239, %p240
      %p243 = scmp.ne.s32.totalorder %s228, %s242
      %p244 = scmp.eq.s32.totalorder %s29, 0
      %p245 = por %p243, %p244
      %s247 = sadd.s32 %s246, 1
      %p250 = scmp.eq.s32.totalorder %s23, 1
      %p251 = scmp.ne.s32.totalorder %s246, %s248
      %p252 = scmp.eq.s32.totalorder %s23, 0
      %p253 = por %p251, %p252
      %p254 = scmp.ne.s32.totalorder %s246, %s248
      %p255 = scmp.eq.s32.totalorder %s28, 1
      %p256 = por %p254, %p255
      %p257 = scmp.ne.s32.totalorder %s248, %s249
      %p258 = scmp.eq.s32.totalorder %s28, 0
      %p259 = por %p257, %p258
      %p260 = scmp.ne.s32.totalorder %s248, %s249
      %p261 = scmp.eq.s32.totalorder %s29, 1
      %p262 = por %p260, %p261
      %p264 = scmp.ne.s32.totalorder %s249, %s263
      %p265 = scmp.eq.s32.totalorder %s29, 0
      %p266 = por %p264, %p265
      %s267 = ssub.s32 %s23, %s30
      %p268 = scmp.eq.s32.totalorder %s267, 0
      %s270 = sadd.s32 %s269, 1
      %s271 = scalar_select %p268, %s269, %s270
      %p274 = pneg %p268
      %p275 = scmp.eq.s32.totalorder %s23, 1
      %p276 = por %p274, %p275
      %p277 = scmp.ne.s32.totalorder %s269, %s272
      %p278 = scmp.eq.s32.totalorder %s23, 0
      %p279 = por %p277, %p278
      %p280 = scmp.ne.s32.totalorder %s269, %s272
      %p281 = scmp.eq.s32.totalorder %s28, 1
      %p282 = por %p280, %p281
      %p283 = scmp.ne.s32.totalorder %s272, %s273
      %p284 = scmp.eq.s32.totalorder %s28, 0
      %p285 = por %p283, %p284
      %p286 = scmp.ne.s32.totalorder %s272, %s273
      %p287 = scmp.eq.s32.totalorder %s29, 1
      %p288 = por %p286, %p287
      %p290 = scmp.ne.s32.totalorder %s273, %s289
      %p291 = scmp.eq.s32.totalorder %s29, 0
      %p292 = por %p290, %p291
      %p293 = scmp.le.s32.totalorder 1, %s23
      %p294 = scmp.lt.s32.totalorder %s23, 3
      %p295 = pnand %p293, %p294
      %p296 = pneg %p295
      // Predicated region
      $region9: #{tpu_custom_call.1} parent=5 // pred_check
        _
      $region10: #{tpu_custom_call.1} parent=5 // pred_check_branch
        %298 = sbr.rel (%p295) target = $region12
      $region11: #{tpu_custom_call.1} parent=5 // pred_region
        %s299 = ssub.s32 %s23, 1
        // Predicated region
        $region13: #{tpu_custom_call.1} parent=11 // pred_check
          %p300 = pneg %p70
        $region14: #{tpu_custom_call.1} parent=11 // pred_check_branch
          %302 = sbr.rel (%p300) target = $region16
        $region15: #{tpu_custom_call.1} parent=11 // pred_region
          _
        $region16: #{tpu_custom_call.1} parent=11 // pred_fallthru
          _
        // Predicated region
        $region17: #{tpu_custom_call.1} parent=11 // pred_check
          %p303 = pneg %p91
        $region18: #{tpu_custom_call.1} parent=11 // pred_check_branch
          %305 = sbr.rel (%p303) target = $region20
        $region19: #{tpu_custom_call.1} parent=11 // pred_region
          _
        $region20: #{tpu_custom_call.1} parent=11 // pred_fallthru
          _
        // Predicated region
        $region21: #{tpu_custom_call.1} parent=11 // pred_check
          %p306 = pneg %p112
        $region22: #{tpu_custom_call.1} parent=11 // pred_check_branch
          %308 = sbr.rel (%p306) target = $region24
        $region23: #{tpu_custom_call.1} parent=11 // pred_region
          _
        $region24: #{tpu_custom_call.1} parent=11 // pred_fallthru
          _
        // Predicated region
        $region25: #{tpu_custom_call.1} parent=11 // pred_check
          %p309 = pneg %p133
        $region26: #{tpu_custom_call.1} parent=11 // pred_check_branch
          %311 = sbr.rel (%p309) target = $region28
        $region27: #{tpu_custom_call.1} parent=11 // pred_region
          _
        $region28: #{tpu_custom_call.1} parent=11 // pred_fallthru
          _
        // Predicated region
        $region29: #{tpu_custom_call.1} parent=11 // pred_check
          %p312 = pneg %p154
        $region30: #{tpu_custom_call.1} parent=11 // pred_check_branch
          %314 = sbr.rel (%p312) target = $region32
        $region31: #{tpu_custom_call.1} parent=11 // pred_region
          _
        $region32: #{tpu_custom_call.1} parent=11 // pred_fallthru
          _
        // Predicated region
        $region33: #{tpu_custom_call.1} parent=11 // pred_check
          %p315 = pneg %p175
        $region34: #{tpu_custom_call.1} parent=11 // pred_check_branch
          %317 = sbr.rel (%p315) target = $region36
        $region35: #{tpu_custom_call.1} parent=11 // pred_region
          _
        $region36: #{tpu_custom_call.1} parent=11 // pred_fallthru
          _
        // Predicated region
        $region37: #{tpu_custom_call.1} parent=11 // pred_check
          %p318 = pneg %p196
        $region38: #{tpu_custom_call.1} parent=11 // pred_check_branch
          %320 = sbr.rel (%p318) target = $region40
        $region39: #{tpu_custom_call.1} parent=11 // pred_region
          _
        $region40: #{tpu_custom_call.1} parent=11 // pred_fallthru
          _
        // Predicated region
        $region41: #{tpu_custom_call.1} parent=11 // pred_check
          %p321 = pneg %p217
        $region42: #{tpu_custom_call.1} parent=11 // pred_check_branch
          %323 = sbr.rel (%p321) target = $region44
        $region43: #{tpu_custom_call.1} parent=11 // pred_region
          _
        $region44: #{tpu_custom_call.1} parent=11 // pred_fallthru
          _
        // Predicated region
        $region45: #{tpu_custom_call.1} parent=11 // pred_check
          %p324 = pneg %p238
        $region46: #{tpu_custom_call.1} parent=11 // pred_check_branch
          %326 = sbr.rel (%p324) target = $region48
        $region47: #{tpu_custom_call.1} parent=11 // pred_region
          _
        $region48: #{tpu_custom_call.1} parent=11 // pred_fallthru
          _
        // Predicated region
        $region49: #{tpu_custom_call.1} parent=11 // pred_check
          %p327 = pneg %p259
        $region50: #{tpu_custom_call.1} parent=11 // pred_check_branch
          %329 = sbr.rel (%p327) target = $region52
        $region51: #{tpu_custom_call.1} parent=11 // pred_region
          %s331 = ssub.s32 16, 16
          %332 = vsyncadd [#allocation5], %s331
          %s334 = sshll.u32 %s10, 4
          %s335 = int_to_ptr.vmem [resolvable:$true] %s334
          %337 = dma.vmem_to_smem %s335, 16, [#allocation3], [#allocation5]
        $region52: #{tpu_custom_call.1} parent=11 // pred_fallthru
          _
      $region12: #{tpu_custom_call.1} parent=5 // pred_fallthru
        _
      %p338 = scmp.lt.s32.totalorder %s23, 2
      // Predicated region
      $region53: #{tpu_custom_call.1} parent=5 // pred_check
        %p339 = pneg %p338
      $region54: #{tpu_custom_call.1} parent=5 // pred_check_branch
        %341 = sbr.rel (%p339) target = $region56
      $region55: #{tpu_custom_call.1} parent=5 // pred_region
        // Predicated region
        $region57: #{tpu_custom_call.1} parent=55 // pred_check
          %p342 = pneg %p43
        $region58: #{tpu_custom_call.1} parent=55 // pred_check_branch
          %344 = sbr.rel (%p342) target = $region60
        $region59: #{tpu_custom_call.1} parent=55 // pred_region
          %s345 = smul.u32 2, %s23
          %p346 = scmp.lt.s32.totalorder %s345, 3
          %s347 = scalar_select %p346, %s345, 3
          %s348 = smul.addr %s347, 8
          %s349 = scalar_lea.vmem %s0, %s348
          %s350 = smul.u32 2, %s23
        $region60: #{tpu_custom_call.1} parent=55 // pred_fallthru
          _
      $region56: #{tpu_custom_call.1} parent=5 // pred_fallthru
        _
      %p351 = scmp.le.s32.totalorder 1, %s23
      %p352 = scmp.lt.s32.totalorder %s23, 3
      %p353 = pnand %p351, %p352
      %p354 = pneg %p353
      // Predicated region
      $region61: #{tpu_custom_call.1} parent=5 // pred_check
        _
      $region62: #{tpu_custom_call.1} parent=5 // pred_check_branch
        %356 = sbr.rel (%p353) target = $region64
      $region63: #{tpu_custom_call.1} parent=5 // pred_region
        %s357 = ssub.s32 %s23, 1
        // Predicated region
        $region65: #{tpu_custom_call.1} parent=63 // pred_check
          %p358 = pneg %p259
        $region66: #{tpu_custom_call.1} parent=63 // pred_check_branch
          %360 = sbr.rel (%p358) target = $region68
        $region67: #{tpu_custom_call.1} parent=63 // pred_region
          %361 = dma.done [#allocation5], 16
        $region68: #{tpu_custom_call.1} parent=63 // pred_fallthru
          _
        %362 = sfence
        %s363 = smul.u32 2, %s28
        %p364 = scmp.lt.s32.totalorder %s363, 3
        %s365 = scalar_select %p364, %s363, 3
        %s366 = smul.addr %s365, 8
        %s367 = scalar_lea.vmem %s0, %s366
        %p368 = pneg %p49
        %p369 = pneg %p46
        %p370 = pneg %p70
        %p371 = pneg %p67
        %p372 = pneg %p91
        %p373 = pneg %p88
        %p374 = pneg %p112
        %p375 = pneg %p109
        %p376 = pneg %p133
        %p377 = pneg %p130
        %p378 = pneg %p154
        %p379 = pneg %p151
        %p380 = pneg %p175
        %p381 = pneg %p172
        %p382 = pneg %p196
        %p383 = pneg %p193
        %p384 = pneg %p217
        %p385 = pneg %p214
        %p386 = pneg %p238
        %p387 = pneg %p235
        %p388 = pneg %p259
        %p389 = pneg %p256
        %p390 = pneg %p285
        %p391 = pneg %p282
        %s392 = sand.u32 %s272, 1
        %s393 = scalar_lea.sflag [#allocation4], %s392
        %s394 = sand.u32 %s272, 1
        %s395 = smul.addr %s394, 2
        %s396 = scalar_lea.vmem [#allocation6], %s395
        %s397 = smul.u32 2, %s28
        %p398 = scmp.lt.s32.totalorder %s397, 3
        %s399 = scalar_select %p398, %s397, 3
        %s400 = smul.addr %s399, 8
        %s401 = scalar_lea.vmem %s0, %s400
        %s402 = smul.u32 2, %s28
        %s403 = smul.u32 2, %s28
        %v404 = vld [vmem:[%s1] sm:$0x3]
        %s405 = scalar_lea.vmem %s1, 2
        %v406 = vld [vmem:[%s405] sm:$0x3]
        %s407 = scalar_lea.vmem %s1, 4
        %v408 = vld [vmem:[%s407] sm:$0x3]
        %s409 = scalar_lea.vmem %s1, 6
        %v410 = vld [vmem:[%s409] sm:$0x3]
        %s411 = scalar_lea.vmem %s1, 10
        %v412 = vld [vmem:[%s411] sm:$0x3]
        %s413 = scalar_lea.vmem %s1, 12
        %v414 = vld [vmem:[%s413] sm:$0x3]
        %s415 = scalar_lea.vmem %s1, 14
        %v416 = vld [vmem:[%s415] sm:$0x3]
        %s417 = scalar_lea.vmem %s1, 16
        %v418 = vld [vmem:[%s417] sm:$0x3]
        %v419 = vld [vmem:[%s401] sm:$0xff]
        %v420 = vld [vmem:[%s401 + $0x8] sm:$0xff]
        %422 = vrot.lane.b32.xlu0 %v420, 17
        %v423 = vpop.permute.xlu0 %422
        %426 = vrot.lane.b32.xlu0 %v419, 17
        %v427 = vpop.permute.xlu0 %426
        %vm428 = vcmask 138240
        %v429 = vsel %vm428, %v427, %v423
        %v432 = vsel %vm428, %v423, %v427
        %v434 = vlaneseq
        %v435 = vshrl.u32 %v434, 7
        %v436 = vsub.s32 0, %v435
        %v437 = vrot.slane %v404, %v436
        %v438 = vlaneseq
        %v439 = vshrl.u32 %v438, 7
        %v440 = vsub.s32 1, %v439
        %v441 = vrot.slane %v404, %v440
        %v444 = vmul.f32 %v432, %v437
        %v445 = vmul.f32 %v429, %v441
        %v446 = vld [vmem:[%s2] sm:$0xff]
        %v447 = vld [vmem:[%s2 + $0x8] sm:$0xff]
        %448 = vrot.lane.b32.xlu0 %v420, 16
        %v449 = vpop.permute.xlu0 %448
        %451 = vrot.lane.b32.xlu0 %v419, 16
        %v452 = vpop.permute.xlu0 %451
        %vm453 = vcmask 130048
        %v454 = vsel %vm453, %v452, %v449
        %v457 = vsel %vm453, %v449, %v452
        %v459 = vlaneseq
        %v460 = vshrl.u32 %v459, 7
        %v461 = vsub.s32 0, %v460
        %v462 = vrot.slane %v406, %v461
        %v463 = vlaneseq
        %v464 = vshrl.u32 %v463, 7
        %v465 = vsub.s32 1, %v464
        %v466 = vrot.slane %v406, %v465
        %v469 = vmul.f32 %v457, %v462
        %v470 = vmul.f32 %v454, %v466
        %s471 = scalar_lea.vmem %s2, 16
        %v472 = vld [vmem:[%s471] sm:$0xff]
        %v473 = vld [vmem:[%s471 + $0x8] sm:$0xff]
        %vm474 = vcmask 64512
        %v476 = vsel %vm474, %v472, 0
        %v479 = vsel %vm474, %v473, 0
        %481 = vmatprep.subr.mxu0 %v470
        %482 = vmatpush1.msra.mxu0 %v469
        %483 = vmatprep.subr.mxu0 0.0
        %484 = vmatpush1.msra.mxu0 0.0
        %485 = vmatprep.subr.mxu0 0.0
        %486 = vmatpush1.msra.mxu0 0.0
        %487 = vmatprep.subr.mxu0 0.0
        %488 = vmatpush1.msra.mxu0 0.0
        %489 = vmatprep.subr.mxu0 0.0
        %490 = vmatpush1.msra.mxu0 0.0
        %491 = vmatprep.subr.mxu0 0.0
        %492 = vmatpush1.msra.mxu0 0.0
        %493 = vmatprep.subr.mxu0 0.0
        %494 = vmatpush1.msra.mxu0 0.0
        %495 = vmatprep.subr.mxu0 0.0
        %496 = vmatpush1.msra.mxu0 0.0
        %497 = vmatprep.subr.mxu0 0.0
        %498 = vmatpush1.msra.mxu0 0.0
        %499 = vmatprep.subr.mxu0 0.0
        %500 = vmatpush1.msra.mxu0 0.0
        %501 = vmatprep.subr.mxu0 0.0
        %502 = vmatpush1.msra.mxu0 0.0
        %503 = vmatprep.subr.mxu0 0.0
        %504 = vmatpush1.msra.mxu0 0.0
        %505 = vmatprep.subr.mxu0 0.0
        %506 = vmatpush1.msra.mxu0 0.0
        %507 = vmatprep.subr.mxu0 0.0
        %508 = vmatpush1.msra.mxu0 0.0
        %509 = vmatprep.subr.mxu0 0.0
        %510 = vmatpush1.msra.mxu0 0.0
        %511 = vmatprep.subr.mxu0 0.0
        %512 = vmatpush1.msra.mxu0 0.0
        %513 = vmatprep.subr.mxu0 0.0
        %514 = vmatpush1.msra.mxu0 0.0
        %515 = vmatprep.subr.mxu0 0.0
        %516 = vmatpush1.msra.mxu0 0.0
        %517 = vmatprep.subr.mxu0 0.0
        %518 = vmatpush1.msra.mxu0 0.0
        %519 = vmatprep.subr.mxu0 0.0
        %520 = vmatpush1.msra.mxu0 0.0
        %521 = vmatprep.subr.mxu0 0.0
        %522 = vmatpush1.msra.mxu0 0.0
        %523 = vmatprep.subr.mxu0 0.0
        %524 = vmatpush1.msra.mxu0 0.0
        %525 = vmatprep.subr.mxu0 0.0
        %526 = vmatpush1.msra.mxu0 0.0
        %527 = vmatprep.subr.mxu0 0.0
        %528 = vmatpush1.msra.mxu0 0.0
        %529 = vmatprep.subr.mxu0 0.0
        %530 = vmatpush1.msra.mxu0 0.0
        %531 = vmatprep.subr.mxu0 0.0
        %532 = vmatpush1.msra.mxu0 0.0
        %533 = vmatprep.subr.mxu0 0.0
        %534 = vmatpush1.msra.mxu0 0.0
        %535 = vmatprep.subr.mxu0 0.0
        %536 = vmatpush1.msra.mxu0 0.0
        %537 = vmatprep.subr.mxu0 0.0
        %538 = vmatpush1.msra.mxu0 0.0
        %539 = vmatprep.subr.mxu0 0.0
        %540 = vmatpush1.msra.mxu0 0.0
        %541 = vmatprep.subr.mxu0 0.0
        %542 = vmatpush1.msra.mxu0 0.0
        %543 = vmatprep.subr.mxu0 0.0
        %544 = vmatpush1.msra.mxu0 0.0
        %545 = vmatprep.mubr.f32.mxu0 0.0
        %546 = vmatmul.mubr.f32.gmra.mrb[0].mxu0 %v476
        %v547 = vpop.f32.mrb[0].mxu0
        %v548 = vadd.f32 0.0, %v547
        %v549 = vpop.f32.mrb[0].mxu0
        %v550 = vadd.f32 0.0, %v549
        %551 = vmatprep.mubr.f32.mxu0 0.0
        %552 = vmatmul.mubr.f32.gmra.mrb[0].mxu0 %v479
        %v553 = vpop.f32.mrb[0].mxu0
        %v554 = vadd.f32 0.0, %v553
        %v555 = vpop.f32.mrb[0].mxu0
        %v556 = vadd.f32 0.0, %v555
        %557 = vdwg.mxu0
        %v559 = vsel %vm474, %v446, 0
        %v562 = vsel %vm474, %v447, 0
        %564 = vmatprep.subr.mxu0 %v445
        %565 = vmatpush1.msra.mxu0 %v444
        %566 = vmatprep.subr.mxu0 0.0
        %567 = vmatpush1.msra.mxu0 0.0
        %568 = vmatprep.subr.mxu0 0.0
        %569 = vmatpush1.msra.mxu0 0.0
        %570 = vmatprep.subr.mxu0 0.0
        %571 = vmatpush1.msra.mxu0 0.0
        %572 = vmatprep.subr.mxu0 0.0
        %573 = vmatpush1.msra.mxu0 0.0
        %574 = vmatprep.subr.mxu0 0.0
        %575 = vmatpush1.msra.mxu0 0.0
        %576 = vmatprep.subr.mxu0 0.0
        %577 = vmatpush1.msra.mxu0 0.0
        %578 = vmatprep.subr.mxu0 0.0
        %579 = vmatpush1.msra.mxu0 0.0
        %580 = vmatprep.subr.mxu0 0.0
        %581 = vmatpush1.msra.mxu0 0.0
        %582 = vmatprep.subr.mxu0 0.0
        %583 = vmatpush1.msra.mxu0 0.0
        %584 = vmatprep.subr.mxu0 0.0
        %585 = vmatpush1.msra.mxu0 0.0
        %586 = vmatprep.subr.mxu0 0.0
        %587 = vmatpush1.msra.mxu0 0.0
        %588 = vmatprep.subr.mxu0 0.0
        %589 = vmatpush1.msra.mxu0 0.0
        %590 = vmatprep.subr.mxu0 0.0
        %591 = vmatpush1.msra.mxu0 0.0
        %592 = vmatprep.subr.mxu0 0.0
        %593 = vmatpush1.msra.mxu0 0.0
        %594 = vmatprep.subr.mxu0 0.0
        %595 = vmatpush1.msra.mxu0 0.0
        %596 = vmatprep.subr.mxu0 0.0
        %597 = vmatpush1.msra.mxu0 0.0
        %598 = vmatprep.subr.mxu0 0.0
        %599 = vmatpush1.msra.mxu0 0.0
        %600 = vmatprep.subr.mxu0 0.0
        %601 = vmatpush1.msra.mxu0 0.0
        %602 = vmatprep.subr.mxu0 0.0
        %603 = vmatpush1.msra.mxu0 0.0
        %604 = vmatprep.subr.mxu0 0.0
        %605 = vmatpush1.msra.mxu0 0.0
        %606 = vmatprep.subr.mxu0 0.0
        %607 = vmatpush1.msra.mxu0 0.0
        %608 = vmatprep.subr.mxu0 0.0
        %609 = vmatpush1.msra.mxu0 0.0
        %610 = vmatprep.subr.mxu0 0.0
        %611 = vmatpush1.msra.mxu0 0.0
        %612 = vmatprep.subr.mxu0 0.0
        %613 = vmatpush1.msra.mxu0 0.0
        %614 = vmatprep.subr.mxu0 0.0
        %615 = vmatpush1.msra.mxu0 0.0
        %616 = vmatprep.subr.mxu0 0.0
        %617 = vmatpush1.msra.mxu0 0.0
        %618 = vmatprep.subr.mxu0 0.0
        %619 = vmatpush1.msra.mxu0 0.0
        %620 = vmatprep.subr.mxu0 0.0
        %621 = vmatpush1.msra.mxu0 0.0
        %622 = vmatprep.subr.mxu0 0.0
        %623 = vmatpush1.msra.mxu0 0.0
        %624 = vmatprep.subr.mxu0 0.0
        %625 = vmatpush1.msra.mxu0 0.0
        %626 = vmatprep.subr.mxu0 0.0
        %627 = vmatpush1.msra.mxu0 0.0
        %628 = vmatprep.mubr.f32.mxu0 0.0
        %629 = vmatmul.mubr.f32.gmra.mrb[0].mxu0 %v559
        %v630 = vpop.f32.mrb[0].mxu0
        %v631 = vadd.f32 %v548, %v630
        %v632 = vpop.f32.mrb[0].mxu0
        %v633 = vadd.f32 %v550, %v632
        %634 = vmatprep.mubr.f32.mxu0 0.0
        %635 = vmatmul.mubr.f32.gmra.mrb[0].mxu0 %v562
        %v636 = vpop.f32.mrb[0].mxu0
        %v637 = vadd.f32 %v554, %v636
        %v638 = vpop.f32.mrb[0].mxu0
        %v639 = vadd.f32 %v556, %v638
        %640 = vdwg.mxu0
        %641 = vrot.lane.b32.xlu0 %v420, 15
        %v642 = vpop.permute.xlu0 %641
        %644 = vrot.lane.b32.xlu0 %v419, 15
        %v645 = vpop.permute.xlu0 %644
        %vm646 = vcmask 121856
        %v647 = vsel %vm646, %v645, %v642
        %v650 = vsel %vm646, %v642, %v645
        %v652 = vlaneseq
        %v653 = vshrl.u32 %v652, 7
        %v654 = vsub.s32 0, %v653
        %v655 = vrot.slane %v408, %v654
        %v656 = vlaneseq
        %v657 = vshrl.u32 %v656, 7
        %v658 = vsub.s32 1, %v657
        %v659 = vrot.slane %v408, %v658
        %v662 = vmul.f32 %v650, %v655
        %v663 = vmul.f32 %v647, %v659
        %s664 = scalar_lea.vmem %s2, 32
        %v665 = vld [vmem:[%s664] sm:$0xff]
        %v666 = vld [vmem:[%s664 + $0x8] sm:$0xff]
        %v668 = vsel %vm474, %v665, 0
        %v671 = vsel %vm474, %v666, 0
        %673 = vmatprep.subr.mxu0 %v663
        %674 = vmatpush1.msra.mxu0 %v662
        %675 = vmatprep.subr.mxu0 0.0
        %676 = vmatpush1.msra.mxu0 0.0
        %677 = vmatprep.subr.mxu0 0.0
        %678 = vmatpush1.msra.mxu0 0.0
        %679 = vmatprep.subr.mxu0 0.0
        %680 = vmatpush1.msra.mxu0 0.0
        %681 = vmatprep.subr.mxu0 0.0
        %682 = vmatpush1.msra.mxu0 0.0
        %683 = vmatprep.subr.mxu0 0.0
        %684 = vmatpush1.msra.mxu0 0.0
        %685 = vmatprep.subr.mxu0 0.0
        %686 = vmatpush1.msra.mxu0 0.0
        %687 = vmatprep.subr.mxu0 0.0
        %688 = vmatpush1.msra.mxu0 0.0
        %689 = vmatprep.subr.mxu0 0.0
        %690 = vmatpush1.msra.mxu0 0.0
        %691 = vmatprep.subr.mxu0 0.0
        %692 = vmatpush1.msra.mxu0 0.0
        %693 = vmatprep.subr.mxu0 0.0
        %694 = vmatpush1.msra.mxu0 0.0
        %695 = vmatprep.subr.mxu0 0.0
        %696 = vmatpush1.msra.mxu0 0.0
        %697 = vmatprep.subr.mxu0 0.0
        %698 = vmatpush1.msra.mxu0 0.0
        %699 = vmatprep.subr.mxu0 0.0
        %700 = vmatpush1.msra.mxu0 0.0
        %701 = vmatprep.subr.mxu0 0.0
        %702 = vmatpush1.msra.mxu0 0.0
        %703 = vmatprep.subr.mxu0 0.0
        %704 = vmatpush1.msra.mxu0 0.0
        %705 = vmatprep.subr.mxu0 0.0
        %706 = vmatpush1.msra.mxu0 0.0
        %707 = vmatprep.subr.mxu0 0.0
        %708 = vmatpush1.msra.mxu0 0.0
        %709 = vmatprep.subr.mxu0 0.0
        %710 = vmatpush1.msra.mxu0 0.0
        %711 = vmatprep.subr.mxu0 0.0
        %712 = vmatpush1.msra.mxu0 0.0
        %713 = vmatprep.subr.mxu0 0.0
        %714 = vmatpush1.msra.mxu0 0.0
        %715 = vmatprep.subr.mxu0 0.0
        %716 = vmatpush1.msra.mxu0 0.0
        %717 = vmatprep.subr.mxu0 0.0
        %718 = vmatpush1.msra.mxu0 0.0
        %719 = vmatprep.subr.mxu0 0.0
        %720 = vmatpush1.msra.mxu0 0.0
        %721 = vmatprep.subr.mxu0 0.0
        %722 = vmatpush1.msra.mxu0 0.0
        %723 = vmatprep.subr.mxu0 0.0
        %724 = vmatpush1.msra.mxu0 0.0
        %725 = vmatprep.subr.mxu0 0.0
        %726 = vmatpush1.msra.mxu0 0.0
        %727 = vmatprep.subr.mxu0 0.0
        %728 = vmatpush1.msra.mxu0 0.0
        %729 = vmatprep.subr.mxu0 0.0
        %730 = vmatpush1.msra.mxu0 0.0
        %731 = vmatprep.subr.mxu0 0.0
        %732 = vmatpush1.msra.mxu0 0.0
        %733 = vmatprep.subr.mxu0 0.0
        %734 = vmatpush1.msra.mxu0 0.0
        %735 = vmatprep.subr.mxu0 0.0
        %736 = vmatpush1.msra.mxu0 0.0
        %737 = vmatprep.mubr.f32.mxu0 0.0
        %738 = vmatmul.mubr.f32.gmra.mrb[0].mxu0 %v668
        %v739 = vpop.f32.mrb[0].mxu0
        %v740 = vadd.f32 0.0, %v739
        %v741 = vpop.f32.mrb[0].mxu0
        %v742 = vadd.f32 0.0, %v741
        %743 = vmatprep.mubr.f32.mxu0 0.0
        %744 = vmatmul.mubr.f32.gmra.mrb[0].mxu0 %v671
        %v745 = vpop.f32.mrb[0].mxu0
        %v746 = vadd.f32 0.0, %v745
        %v747 = vpop.f32.mrb[0].mxu0
        %v748 = vadd.f32 0.0, %v747
        %749 = vdwg.mxu0
        %v750 = vadd.f32 %v631, %v740
        %v751 = vadd.f32 %v633, %v742
        %v752 = vadd.f32 %v637, %v746
        %v753 = vadd.f32 %v639, %v748
        %754 = vrot.lane.b32.xlu0 %v420, 1
        %v755 = vpop.permute.xlu0 %754
        %757 = vrot.lane.b32.xlu0 %v419, 1
        %v758 = vpop.permute.xlu0 %757
        %vm759 = vcmask 7168
        %v760 = vsel %vm759, %v758, %v755
        %v763 = vsel %vm759, %v755, %v758
        %v765 = vlaneseq
        %v766 = vshrl.u32 %v765, 7
        %v767 = vsub.s32 0, %v766
        %v768 = vrot.slane %v410, %v767
        %v769 = vlaneseq
        %v770 = vshrl.u32 %v769, 7
        %v771 = vsub.s32 1, %v770
        %v772 = vrot.slane %v410, %v771
        %v775 = vmul.f32 %v763, %v768
        %v776 = vmul.f32 %v760, %v772
        %s777 = scalar_lea.vmem %s2, 48
        %v778 = vld [vmem:[%s777] sm:$0xff]
        %v779 = vld [vmem:[%s777 + $0x8] sm:$0xff]
        %v781 = vsel %vm474, %v778, 0
        %v784 = vsel %vm474, %v779, 0
        %786 = vmatprep.subr.mxu0 %v776
        %787 = vmatpush1.msra.mxu0 %v775
        %788 = vmatprep.subr.mxu0 0.0
        %789 = vmatpush1.msra.mxu0 0.0
        %790 = vmatprep.subr.mxu0 0.0
        %791 = vmatpush1.msra.mxu0 0.0
        %792 = vmatprep.subr.mxu0 0.0
        %793 = vmatpush1.msra.mxu0 0.0
        %794 = vmatprep.subr.mxu0 0.0
        %795 = vmatpush1.msra.mxu0 0.0
        %796 = vmatprep.subr.mxu0 0.0
        %797 = vmatpush1.msra.mxu0 0.0
        %798 = vmatprep.subr.mxu0 0.0
        %799 = vmatpush1.msra.mxu0 0.0
        %800 = vmatprep.subr.mxu0 0.0
        %801 = vmatpush1.msra.mxu0 0.0
        %802 = vmatprep.subr.mxu0 0.0
        %803 = vmatpush1.msra.mxu0 0.0
        %804 = vmatprep.subr.mxu0 0.0
        %805 = vmatpush1.msra.mxu0 0.0
        %806 = vmatprep.subr.mxu0 0.0
        %807 = vmatpush1.msra.mxu0 0.0
        %808 = vmatprep.subr.mxu0 0.0
        %809 = vmatpush1.msra.mxu0 0.0
        %810 = vmatprep.subr.mxu0 0.0
        %811 = vmatpush1.msra.mxu0 0.0
        %812 = vmatprep.subr.mxu0 0.0
        %813 = vmatpush1.msra.mxu0 0.0
        %814 = vmatprep.subr.mxu0 0.0
        %815 = vmatpush1.msra.mxu0 0.0
        %816 = vmatprep.subr.mxu0 0.0
        %817 = vmatpush1.msra.mxu0 0.0
        %818 = vmatprep.subr.mxu0 0.0
        %819 = vmatpush1.msra.mxu0 0.0
        %820 = vmatprep.subr.mxu0 0.0
        %821 = vmatpush1.msra.mxu0 0.0
        %822 = vmatprep.subr.mxu0 0.0
        %823 = vmatpush1.msra.mxu0 0.0
        %824 = vmatprep.subr.mxu0 0.0
        %825 = vmatpush1.msra.mxu0 0.0
        %826 = vmatprep.subr.mxu0 0.0
        %827 = vmatpush1.msra.mxu0 0.0
        %828 = vmatprep.subr.mxu0 0.0
        %829 = vmatpush1.msra.mxu0 0.0
        %830 = vmatprep.subr.mxu0 0.0
        %831 = vmatpush1.msra.mxu0 0.0
        %832 = vmatprep.subr.mxu0 0.0
        %833 = vmatpush1.msra.mxu0 0.0
        %834 = vmatprep.subr.mxu0 0.0
        %835 = vmatpush1.msra.mxu0 0.0
        %836 = vmatprep.subr.mxu0 0.0
        %837 = vmatpush1.msra.mxu0 0.0
        %838 = vmatprep.subr.mxu0 0.0
        %839 = vmatpush1.msra.mxu0 0.0
        %840 = vmatprep.subr.mxu0 0.0
        %841 = vmatpush1.msra.mxu0 0.0
        %842 = vmatprep.subr.mxu0 0.0
        %843 = vmatpush1.msra.mxu0 0.0
        %844 = vmatprep.subr.mxu0 0.0
        %845 = vmatpush1.msra.mxu0 0.0
        %846 = vmatprep.subr.mxu0 0.0
        %847 = vmatpush1.msra.mxu0 0.0
        %848 = vmatprep.subr.mxu0 0.0
        %849 = vmatpush1.msra.mxu0 0.0
        %850 = vmatprep.mubr.f32.mxu0 0.0
        %851 = vmatmul.mubr.f32.gmra.mrb[0].mxu0 %v781
        %v852 = vpop.f32.mrb[0].mxu0
        %v853 = vadd.f32 0.0, %v852
        %v854 = vpop.f32.mrb[0].mxu0
        %v855 = vadd.f32 0.0, %v854
        %856 = vmatprep.mubr.f32.mxu0 0.0
        %857 = vmatmul.mubr.f32.gmra.mrb[0].mxu0 %v784
        %v858 = vpop.f32.mrb[0].mxu0
        %v859 = vadd.f32 0.0, %v858
        %v860 = vpop.f32.mrb[0].mxu0
        %v861 = vadd.f32 0.0, %v860
        %862 = vdwg.mxu0
        %v863 = vadd.f32 %v750, %v853
        %v864 = vadd.f32 %v751, %v855
        %v865 = vadd.f32 %v752, %v859
        %v866 = vadd.f32 %v753, %v861
        %s867 = scalar_lea.vmem %s2, 64
        %v868 = vld [vmem:[%s867] sm:$0xff]
        %v869 = vld [vmem:[%s867 + $0x8] sm:$0xff]
        %v871 = vsel %vm474, %v868, 0
        %v874 = vsel %vm474, %v869, 0
        %876 = vmatprep.subr.mxu0 %v420
        %877 = vmatpush1.msra.mxu0 %v419
        %878 = vmatprep.subr.mxu0 0.0
        %879 = vmatpush1.msra.mxu0 0.0
        %880 = vmatprep.subr.mxu0 0.0
        %881 = vmatpush1.msra.mxu0 0.0
        %882 = vmatprep.subr.mxu0 0.0
        %883 = vmatpush1.msra.mxu0 0.0
        %884 = vmatprep.subr.mxu0 0.0
        %885 = vmatpush1.msra.mxu0 0.0
        %886 = vmatprep.subr.mxu0 0.0
        %887 = vmatpush1.msra.mxu0 0.0
        %888 = vmatprep.subr.mxu0 0.0
        %889 = vmatpush1.msra.mxu0 0.0
        %890 = vmatprep.subr.mxu0 0.0
        %891 = vmatpush1.msra.mxu0 0.0
        %892 = vmatprep.subr.mxu0 0.0
        %893 = vmatpush1.msra.mxu0 0.0
        %894 = vmatprep.subr.mxu0 0.0
        %895 = vmatpush1.msra.mxu0 0.0
        %896 = vmatprep.subr.mxu0 0.0
        %897 = vmatpush1.msra.mxu0 0.0
        %898 = vmatprep.subr.mxu0 0.0
        %899 = vmatpush1.msra.mxu0 0.0
        %900 = vmatprep.subr.mxu0 0.0
        %901 = vmatpush1.msra.mxu0 0.0
        %902 = vmatprep.subr.mxu0 0.0
        %903 = vmatpush1.msra.mxu0 0.0
        %904 = vmatprep.subr.mxu0 0.0
        %905 = vmatpush1.msra.mxu0 0.0
        %906 = vmatprep.subr.mxu0 0.0
        %907 = vmatpush1.msra.mxu0 0.0
        %908 = vmatprep.subr.mxu0 0.0
        %909 = vmatpush1.msra.mxu0 0.0
        %910 = vmatprep.subr.mxu0 0.0
        %911 = vmatpush1.msra.mxu0 0.0
        %912 = vmatprep.subr.mxu0 0.0
        %913 = vmatpush1.msra.mxu0 0.0
        %914 = vmatprep.subr.mxu0 0.0
        %915 = vmatpush1.msra.mxu0 0.0
        %916 = vmatprep.subr.mxu0 0.0
        %917 = vmatpush1.msra.mxu0 0.0
        %918 = vmatprep.subr.mxu0 0.0
        %919 = vmatpush1.msra.mxu0 0.0
        %920 = vmatprep.subr.mxu0 0.0
        %921 = vmatpush1.msra.mxu0 0.0
        %922 = vmatprep.subr.mxu0 0.0
        %923 = vmatpush1.msra.mxu0 0.0
        %924 = vmatprep.subr.mxu0 0.0
        %925 = vmatpush1.msra.mxu0 0.0
        %926 = vmatprep.subr.mxu0 0.0
        %927 = vmatpush1.msra.mxu0 0.0
        %928 = vmatprep.subr.mxu0 0.0
        %929 = vmatpush1.msra.mxu0 0.0
        %930 = vmatprep.subr.mxu0 0.0
        %931 = vmatpush1.msra.mxu0 0.0
        %932 = vmatprep.subr.mxu0 0.0
        %933 = vmatpush1.msra.mxu0 0.0
        %934 = vmatprep.subr.mxu0 0.0
        %935 = vmatpush1.msra.mxu0 0.0
        %936 = vmatprep.subr.mxu0 0.0
        %937 = vmatpush1.msra.mxu0 0.0
        %938 = vmatprep.subr.mxu0 0.0
        %939 = vmatpush1.msra.mxu0 0.0
        %940 = vmatprep.mubr.f32.mxu0 0.0
        %941 = vmatmul.mubr.f32.gmra.mrb[0].mxu0 %v871
        %v942 = vpop.f32.mrb[0].mxu0
        %v943 = vadd.f32 0.0, %v942
        %v944 = vpop.f32.mrb[0].mxu0
        %v945 = vadd.f32 0.0, %v944
        %946 = vmatprep.mubr.f32.mxu0 0.0
        %947 = vmatmul.mubr.f32.gmra.mrb[0].mxu0 %v874
        %v948 = vpop.f32.mrb[0].mxu0
        %v949 = vadd.f32 0.0, %v948
        %v950 = vpop.f32.mrb[0].mxu0
        %v951 = vadd.f32 0.0, %v950
        %952 = vdwg.mxu0
        %v953 = vadd.f32 %v863, %v943
        %v954 = vadd.f32 %v864, %v945
        %v955 = vadd.f32 %v865, %v949
        %v956 = vadd.f32 %v866, %v951
        %957 = vrot.lane.b32.xlu0 %v419, 127
        %v958 = vpop.permute.xlu0 %957
        %959 = vrot.lane.b32.xlu0 %v420, 127
        %v960 = vpop.permute.xlu0 %959
        %vm961 = vcmask 1039360
        %v962 = vsel %vm961, %v958, %v960
        %v966 = vsel %vm961, %v960, %v958
        %v968 = vlaneseq
        %v969 = vshrl.u32 %v968, 7
        %v970 = vsub.s32 0, %v969
        %v971 = vrot.slane %v412, %v970
        %v972 = vlaneseq
        %v973 = vshrl.u32 %v972, 7
        %v974 = vsub.s32 1, %v973
        %v975 = vrot.slane %v412, %v974
        %v978 = vmul.f32 %v962, %v971
        %v979 = vmul.f32 %v966, %v975
        %s980 = scalar_lea.vmem %s2, 80
        %v981 = vld [vmem:[%s980] sm:$0xff]
        %v982 = vld [vmem:[%s980 + $0x8] sm:$0xff]
        %v984 = vsel %vm474, %v981, 0
        %v987 = vsel %vm474, %v982, 0
        %989 = vmatprep.subr.mxu0 %v979
        %990 = vmatpush1.msra.mxu0 %v978
        %991 = vmatprep.subr.mxu0 0.0
        %992 = vmatpush1.msra.mxu0 0.0
        %993 = vmatprep.subr.mxu0 0.0
        %994 = vmatpush1.msra.mxu0 0.0
        %995 = vmatprep.subr.mxu0 0.0
        %996 = vmatpush1.msra.mxu0 0.0
        %997 = vmatprep.subr.mxu0 0.0
        %998 = vmatpush1.msra.mxu0 0.0
        %999 = vmatprep.subr.mxu0 0.0
        %1000 = vmatpush1.msra.mxu0 0.0
        %1001 = vmatprep.subr.mxu0 0.0
        %1002 = vmatpush1.msra.mxu0 0.0
        %1003 = vmatprep.subr.mxu0 0.0
        %1004 = vmatpush1.msra.mxu0 0.0
        %1005 = vmatprep.subr.mxu0 0.0
        %1006 = vmatpush1.msra.mxu0 0.0
        %1007 = vmatprep.subr.mxu0 0.0
        %1008 = vmatpush1.msra.mxu0 0.0
        %1009 = vmatprep.subr.mxu0 0.0
        %1010 = vmatpush1.msra.mxu0 0.0
        %1011 = vmatprep.subr.mxu0 0.0
        %1012 = vmatpush1.msra.mxu0 0.0
        %1013 = vmatprep.subr.mxu0 0.0
        %1014 = vmatpush1.msra.mxu0 0.0
        %1015 = vmatprep.subr.mxu0 0.0
        %1016 = vmatpush1.msra.mxu0 0.0
        %1017 = vmatprep.subr.mxu0 0.0
        %1018 = vmatpush1.msra.mxu0 0.0
        %1019 = vmatprep.subr.mxu0 0.0
        %1020 = vmatpush1.msra.mxu0 0.0
        %1021 = vmatprep.subr.mxu0 0.0
        %1022 = vmatpush1.msra.mxu0 0.0
        %1023 = vmatprep.subr.mxu0 0.0
        %1024 = vmatpush1.msra.mxu0 0.0
        %1025 = vmatprep.subr.mxu0 0.0
        %1026 = vmatpush1.msra.mxu0 0.0
        %1027 = vmatprep.subr.mxu0 0.0
        %1028 = vmatpush1.msra.mxu0 0.0
        %1029 = vmatprep.subr.mxu0 0.0
        %1030 = vmatpush1.msra.mxu0 0.0
        %1031 = vmatprep.subr.mxu0 0.0
        %1032 = vmatpush1.msra.mxu0 0.0
        %1033 = vmatprep.subr.mxu0 0.0
        %1034 = vmatpush1.msra.mxu0 0.0
        %1035 = vmatprep.subr.mxu0 0.0
        %1036 = vmatpush1.msra.mxu0 0.0
        %1037 = vmatprep.subr.mxu0 0.0
        %1038 = vmatpush1.msra.mxu0 0.0
        %1039 = vmatprep.subr.mxu0 0.0
        %1040 = vmatpush1.msra.mxu0 0.0
        %1041 = vmatprep.subr.mxu0 0.0
        %1042 = vmatpush1.msra.mxu0 0.0
        %1043 = vmatprep.subr.mxu0 0.0
        %1044 = vmatpush1.msra.mxu0 0.0
        %1045 = vmatprep.subr.mxu0 0.0
        %1046 = vmatpush1.msra.mxu0 0.0
        %1047 = vmatprep.subr.mxu0 0.0
        %1048 = vmatpush1.msra.mxu0 0.0
        %1049 = vmatprep.subr.mxu0 0.0
        %1050 = vmatpush1.msra.mxu0 0.0
        %1051 = vmatprep.subr.mxu0 0.0
        %1052 = vmatpush1.msra.mxu0 0.0
        %1053 = vmatprep.mubr.f32.mxu0 0.0
        %1054 = vmatmul.mubr.f32.gmra.mrb[0].mxu0 %v984
        %v1055 = vpop.f32.mrb[0].mxu0
        %v1056 = vadd.f32 0.0, %v1055
        %v1057 = vpop.f32.mrb[0].mxu0
        %v1058 = vadd.f32 0.0, %v1057
        %1059 = vmatprep.mubr.f32.mxu0 0.0
        %1060 = vmatmul.mubr.f32.gmra.mrb[0].mxu0 %v987
        %v1061 = vpop.f32.mrb[0].mxu0
        %v1062 = vadd.f32 0.0, %v1061
        %v1063 = vpop.f32.mrb[0].mxu0
        %v1064 = vadd.f32 0.0, %v1063
        %1065 = vdwg.mxu0
        %v1066 = vadd.f32 %v953, %v1056
        %v1067 = vadd.f32 %v954, %v1058
        %v1068 = vadd.f32 %v955, %v1062
        %v1069 = vadd.f32 %v956, %v1064
        %1070 = vrot.lane.b32.xlu0 %v419, 113
        %v1071 = vpop.permute.xlu0 %1070
        %1072 = vrot.lane.b32.xlu0 %v420, 113
        %v1073 = vpop.permute.xlu0 %1072
        %vm1074 = vcmask 924672
        %v1075 = vsel %vm1074, %v1071, %v1073
        %v1079 = vsel %vm1074, %v1073, %v1071
        %v1081 = vlaneseq
        %v1082 = vshrl.u32 %v1081, 7
        %v1083 = vsub.s32 0, %v1082
        %v1084 = vrot.slane %v414, %v1083
        %v1085 = vlaneseq
        %v1086 = vshrl.u32 %v1085, 7
        %v1087 = vsub.s32 1, %v1086
        %v1088 = vrot.slane %v414, %v1087
        %v1091 = vmul.f32 %v1075, %v1084
        %v1092 = vmul.f32 %v1079, %v1088
        %s1093 = scalar_lea.vmem %s2, 96
        %v1094 = vld [vmem:[%s1093] sm:$0xff]
        %v1095 = vld [vmem:[%s1093 + $0x8] sm:$0xff]
        %v1097 = vsel %vm474, %v1094, 0
        %v1100 = vsel %vm474, %v1095, 0
        %1102 = vmatprep.subr.mxu0 %v1092
        %1103 = vmatpush1.msra.mxu0 %v1091
        %1104 = vmatprep.subr.mxu0 0.0
        %1105 = vmatpush1.msra.mxu0 0.0
        %1106 = vmatprep.subr.mxu0 0.0
        %1107 = vmatpush1.msra.mxu0 0.0
        %1108 = vmatprep.subr.mxu0 0.0
        %1109 = vmatpush1.msra.mxu0 0.0
        %1110 = vmatprep.subr.mxu0 0.0
        %1111 = vmatpush1.msra.mxu0 0.0
        %1112 = vmatprep.subr.mxu0 0.0
        %1113 = vmatpush1.msra.mxu0 0.0
        %1114 = vmatprep.subr.mxu0 0.0
        %1115 = vmatpush1.msra.mxu0 0.0
        %1116 = vmatprep.subr.mxu0 0.0
        %1117 = vmatpush1.msra.mxu0 0.0
        %1118 = vmatprep.subr.mxu0 0.0
        %1119 = vmatpush1.msra.mxu0 0.0
        %1120 = vmatprep.subr.mxu0 0.0
        %1121 = vmatpush1.msra.mxu0 0.0
        %1122 = vmatprep.subr.mxu0 0.0
        %1123 = vmatpush1.msra.mxu0 0.0
        %1124 = vmatprep.subr.mxu0 0.0
        %1125 = vmatpush1.msra.mxu0 0.0
        %1126 = vmatprep.subr.mxu0 0.0
        %1127 = vmatpush1.msra.mxu0 0.0
        %1128 = vmatprep.subr.mxu0 0.0
        %1129 = vmatpush1.msra.mxu0 0.0
        %1130 = vmatprep.subr.mxu0 0.0
        %1131 = vmatpush1.msra.mxu0 0.0
        %1132 = vmatprep.subr.mxu0 0.0
        %1133 = vmatpush1.msra.mxu0 0.0
        %1134 = vmatprep.subr.mxu0 0.0
        %1135 = vmatpush1.msra.mxu0 0.0
        %1136 = vmatprep.subr.mxu0 0.0
        %1137 = vmatpush1.msra.mxu0 0.0
        %1138 = vmatprep.subr.mxu0 0.0
        %1139 = vmatpush1.msra.mxu0 0.0
        %1140 = vmatprep.subr.mxu0 0.0
        %1141 = vmatpush1.msra.mxu0 0.0
        %1142 = vmatprep.subr.mxu0 0.0
        %1143 = vmatpush1.msra.mxu0 0.0
        %1144 = vmatprep.subr.mxu0 0.0
        %1145 = vmatpush1.msra.mxu0 0.0
        %1146 = vmatprep.subr.mxu0 0.0
        %1147 = vmatpush1.msra.mxu0 0.0
        %1148 = vmatprep.subr.mxu0 0.0
        %1149 = vmatpush1.msra.mxu0 0.0
        %1150 = vmatprep.subr.mxu0 0.0
        %1151 = vmatpush1.msra.mxu0 0.0
        %1152 = vmatprep.subr.mxu0 0.0
        %1153 = vmatpush1.msra.mxu0 0.0
        %1154 = vmatprep.subr.mxu0 0.0
        %1155 = vmatpush1.msra.mxu0 0.0
        %1156 = vmatprep.subr.mxu0 0.0
        %1157 = vmatpush1.msra.mxu0 0.0
        %1158 = vmatprep.subr.mxu0 0.0
        %1159 = vmatpush1.msra.mxu0 0.0
        %1160 = vmatprep.subr.mxu0 0.0
        %1161 = vmatpush1.msra.mxu0 0.0
        %1162 = vmatprep.subr.mxu0 0.0
        %1163 = vmatpush1.msra.mxu0 0.0
        %1164 = vmatprep.subr.mxu0 0.0
        %1165 = vmatpush1.msra.mxu0 0.0
        %1166 = vmatprep.mubr.f32.mxu0 0.0
        %1167 = vmatmul.mubr.f32.gmra.mrb[0].mxu0 %v1097
        %v1168 = vpop.f32.mrb[0].mxu0
        %v1169 = vadd.f32 0.0, %v1168
        %v1170 = vpop.f32.mrb[0].mxu0
        %v1171 = vadd.f32 0.0, %v1170
        %1172 = vmatprep.mubr.f32.mxu0 0.0
        %1173 = vmatmul.mubr.f32.gmra.mrb[0].mxu0 %v1100
        %v1174 = vpop.f32.mrb[0].mxu0
        %v1175 = vadd.f32 0.0, %v1174
        %v1176 = vpop.f32.mrb[0].mxu0
        %v1177 = vadd.f32 0.0, %v1176
        %1178 = vdwg.mxu0
        %v1179 = vadd.f32 %v1066, %v1169
        %v1180 = vadd.f32 %v1067, %v1171
        %v1181 = vadd.f32 %v1068, %v1175
        %v1182 = vadd.f32 %v1069, %v1177
        %1183 = vrot.lane.b32.xlu0 %v419, 112
        %v1184 = vpop.permute.xlu0 %1183
        %1185 = vrot.lane.b32.xlu0 %v420, 112
        %v1186 = vpop.permute.xlu0 %1185
        %vm1187 = vcmask 916480
        %v1188 = vsel %vm1187, %v1184, %v1186
        %v1192 = vsel %vm1187, %v1186, %v1184
        %v1194 = vlaneseq
        %v1195 = vshrl.u32 %v1194, 7
        %v1196 = vsub.s32 0, %v1195
        %v1197 = vrot.slane %v416, %v1196
        %v1198 = vlaneseq
        %v1199 = vshrl.u32 %v1198, 7
        %v1200 = vsub.s32 1, %v1199
        %v1201 = vrot.slane %v416, %v1200
        %v1204 = vmul.f32 %v1188, %v1197
        %v1205 = vmul.f32 %v1192, %v1201
        %s1206 = scalar_lea.vmem %s2, 112
        %v1207 = vld [vmem:[%s1206] sm:$0xff]
        %v1208 = vld [vmem:[%s1206 + $0x8] sm:$0xff]
        %v1210 = vsel %vm474, %v1207, 0
        %v1213 = vsel %vm474, %v1208, 0
        %1215 = vmatprep.subr.mxu0 %v1205
        %1216 = vmatpush1.msra.mxu0 %v1204
        %1217 = vmatprep.subr.mxu0 0.0
        %1218 = vmatpush1.msra.mxu0 0.0
        %1219 = vmatprep.subr.mxu0 0.0
        %1220 = vmatpush1.msra.mxu0 0.0
        %1221 = vmatprep.subr.mxu0 0.0
        %1222 = vmatpush1.msra.mxu0 0.0
        %1223 = vmatprep.subr.mxu0 0.0
        %1224 = vmatpush1.msra.mxu0 0.0
        %1225 = vmatprep.subr.mxu0 0.0
        %1226 = vmatpush1.msra.mxu0 0.0
        %1227 = vmatprep.subr.mxu0 0.0
        %1228 = vmatpush1.msra.mxu0 0.0
        %1229 = vmatprep.subr.mxu0 0.0
        %1230 = vmatpush1.msra.mxu0 0.0
        %1231 = vmatprep.subr.mxu0 0.0
        %1232 = vmatpush1.msra.mxu0 0.0
        %1233 = vmatprep.subr.mxu0 0.0
        %1234 = vmatpush1.msra.mxu0 0.0
        %1235 = vmatprep.subr.mxu0 0.0
        %1236 = vmatpush1.msra.mxu0 0.0
        %1237 = vmatprep.subr.mxu0 0.0
        %1238 = vmatpush1.msra.mxu0 0.0
        %1239 = vmatprep.subr.mxu0 0.0
        %1240 = vmatpush1.msra.mxu0 0.0
        %1241 = vmatprep.subr.mxu0 0.0
        %1242 = vmatpush1.msra.mxu0 0.0
        %1243 = vmatprep.subr.mxu0 0.0
        %1244 = vmatpush1.msra.mxu0 0.0
        %1245 = vmatprep.subr.mxu0 0.0
        %1246 = vmatpush1.msra.mxu0 0.0
        %1247 = vmatprep.subr.mxu0 0.0
        %1248 = vmatpush1.msra.mxu0 0.0
        %1249 = vmatprep.subr.mxu0 0.0
        %1250 = vmatpush1.msra.mxu0 0.0
        %1251 = vmatprep.subr.mxu0 0.0
        %1252 = vmatpush1.msra.mxu0 0.0
        %1253 = vmatprep.subr.mxu0 0.0
        %1254 = vmatpush1.msra.mxu0 0.0
        %1255 = vmatprep.subr.mxu0 0.0
        %1256 = vmatpush1.msra.mxu0 0.0
        %1257 = vmatprep.subr.mxu0 0.0
        %1258 = vmatpush1.msra.mxu0 0.0
        %1259 = vmatprep.subr.mxu0 0.0
        %1260 = vmatpush1.msra.mxu0 0.0
        %1261 = vmatprep.subr.mxu0 0.0
        %1262 = vmatpush1.msra.mxu0 0.0
        %1263 = vmatprep.subr.mxu0 0.0
        %1264 = vmatpush1.msra.mxu0 0.0
        %1265 = vmatprep.subr.mxu0 0.0
        %1266 = vmatpush1.msra.mxu0 0.0
        %1267 = vmatprep.subr.mxu0 0.0
        %1268 = vmatpush1.msra.mxu0 0.0
        %1269 = vmatprep.subr.mxu0 0.0
        %1270 = vmatpush1.msra.mxu0 0.0
        %1271 = vmatprep.subr.mxu0 0.0
        %1272 = vmatpush1.msra.mxu0 0.0
        %1273 = vmatprep.subr.mxu0 0.0
        %1274 = vmatpush1.msra.mxu0 0.0
        %1275 = vmatprep.subr.mxu0 0.0
        %1276 = vmatpush1.msra.mxu0 0.0
        %1277 = vmatprep.subr.mxu0 0.0
        %1278 = vmatpush1.msra.mxu0 0.0
        %1279 = vmatprep.mubr.f32.mxu0 0.0
        %1280 = vmatmul.mubr.f32.gmra.mrb[0].mxu0 %v1210
        %v1281 = vpop.f32.mrb[0].mxu0
        %v1282 = vadd.f32 0.0, %v1281
        %v1283 = vpop.f32.mrb[0].mxu0
        %v1284 = vadd.f32 0.0, %v1283
        %1285 = vmatprep.mubr.f32.mxu0 0.0
        %1286 = vmatmul.mubr.f32.gmra.mrb[0].mxu0 %v1213
        %v1287 = vpop.f32.mrb[0].mxu0
        %v1288 = vadd.f32 0.0, %v1287
        %v1289 = vpop.f32.mrb[0].mxu0
        %v1290 = vadd.f32 0.0, %v1289
        %1291 = vdwg.mxu0
        %v1292 = vadd.f32 %v1179, %v1282
        %v1293 = vadd.f32 %v1180, %v1284
        %v1294 = vadd.f32 %v1181, %v1288
        %v1295 = vadd.f32 %v1182, %v1290
        %1296 = vrot.lane.b32.xlu0 %v419, 111
        %v1297 = vpop.permute.xlu0 %1296
        %1298 = vrot.lane.b32.xlu0 %v420, 111
        %v1299 = vpop.permute.xlu0 %1298
        %vm1300 = vcmask 908288
        %v1301 = vsel %vm1300, %v1297, %v1299
        %v1305 = vsel %vm1300, %v1299, %v1297
        %v1307 = vlaneseq
        %v1308 = vshrl.u32 %v1307, 7
        %v1309 = vsub.s32 0, %v1308
        %v1310 = vrot.slane %v418, %v1309
        %v1311 = vlaneseq
        %v1312 = vshrl.u32 %v1311, 7
        %v1313 = vsub.s32 1, %v1312
        %v1314 = vrot.slane %v418, %v1313
        %v1317 = vmul.f32 %v1301, %v1310
        %v1318 = vmul.f32 %v1305, %v1314
        %s1319 = scalar_lea.vmem %s2, 128
        %v1320 = vld [vmem:[%s1319] sm:$0xff]
        %v1321 = vld [vmem:[%s1319 + $0x8] sm:$0xff]
        %v1323 = vsel %vm474, %v1320, 0
        %v1326 = vsel %vm474, %v1321, 0
        %1328 = vmatprep.subr.mxu0 %v1318
        %1329 = vmatpush1.msra.mxu0 %v1317
        %1330 = vmatprep.subr.mxu0 0.0
        %1331 = vmatpush1.msra.mxu0 0.0
        %1332 = vmatprep.subr.mxu0 0.0
        %1333 = vmatpush1.msra.mxu0 0.0
        %1334 = vmatprep.subr.mxu0 0.0
        %1335 = vmatpush1.msra.mxu0 0.0
        %1336 = vmatprep.subr.mxu0 0.0
        %1337 = vmatpush1.msra.mxu0 0.0
        %1338 = vmatprep.subr.mxu0 0.0
        %1339 = vmatpush1.msra.mxu0 0.0
        %1340 = vmatprep.subr.mxu0 0.0
        %1341 = vmatpush1.msra.mxu0 0.0
        %1342 = vmatprep.subr.mxu0 0.0
        %1343 = vmatpush1.msra.mxu0 0.0
        %1344 = vmatprep.subr.mxu0 0.0
        %1345 = vmatpush1.msra.mxu0 0.0
        %1346 = vmatprep.subr.mxu0 0.0
        %1347 = vmatpush1.msra.mxu0 0.0
        %1348 = vmatprep.subr.mxu0 0.0
        %1349 = vmatpush1.msra.mxu0 0.0
        %1350 = vmatprep.subr.mxu0 0.0
        %1351 = vmatpush1.msra.mxu0 0.0
        %1352 = vmatprep.subr.mxu0 0.0
        %1353 = vmatpush1.msra.mxu0 0.0
        %1354 = vmatprep.subr.mxu0 0.0
        %1355 = vmatpush1.msra.mxu0 0.0
        %1356 = vmatprep.subr.mxu0 0.0
        %1357 = vmatpush1.msra.mxu0 0.0
        %1358 = vmatprep.subr.mxu0 0.0
        %1359 = vmatpush1.msra.mxu0 0.0
        %1360 = vmatprep.subr.mxu0 0.0
        %1361 = vmatpush1.msra.mxu0 0.0
        %1362 = vmatprep.subr.mxu0 0.0
        %1363 = vmatpush1.msra.mxu0 0.0
        %1364 = vmatprep.subr.mxu0 0.0
        %1365 = vmatpush1.msra.mxu0 0.0
        %1366 = vmatprep.subr.mxu0 0.0
        %1367 = vmatpush1.msra.mxu0 0.0
        %1368 = vmatprep.subr.mxu0 0.0
        %1369 = vmatpush1.msra.mxu0 0.0
        %1370 = vmatprep.subr.mxu0 0.0
        %1371 = vmatpush1.msra.mxu0 0.0
        %1372 = vmatprep.subr.mxu0 0.0
        %1373 = vmatpush1.msra.mxu0 0.0
        %1374 = vmatprep.subr.mxu0 0.0
        %1375 = vmatpush1.msra.mxu0 0.0
        %1376 = vmatprep.subr.mxu0 0.0
        %1377 = vmatpush1.msra.mxu0 0.0
        %1378 = vmatprep.subr.mxu0 0.0
        %1379 = vmatpush1.msra.mxu0 0.0
        %1380 = vmatprep.subr.mxu0 0.0
        %1381 = vmatpush1.msra.mxu0 0.0
        %1382 = vmatprep.subr.mxu0 0.0
        %1383 = vmatpush1.msra.mxu0 0.0
        %1384 = vmatprep.subr.mxu0 0.0
        %1385 = vmatpush1.msra.mxu0 0.0
        %1386 = vmatprep.subr.mxu0 0.0
        %1387 = vmatpush1.msra.mxu0 0.0
        %1388 = vmatprep.subr.mxu0 0.0
        %1389 = vmatpush1.msra.mxu0 0.0
        %1390 = vmatprep.subr.mxu0 0.0
        %1391 = vmatpush1.msra.mxu0 0.0
        %1392 = vmatprep.mubr.f32.mxu0 0.0
        %1393 = vmatmul.mubr.f32.gmra.mrb[0].mxu0 %v1323
        %v1394 = vpop.f32.mrb[0].mxu0
        %v1395 = vadd.f32 0.0, %v1394
        %v1396 = vpop.f32.mrb[0].mxu0
        %v1397 = vadd.f32 0.0, %v1396
        %1398 = vmatprep.mubr.f32.mxu0 0.0
        %1399 = vmatmul.mubr.f32.gmra.mrb[0].mxu0 %v1326
        %v1400 = vpop.f32.mrb[0].mxu0
        %v1401 = vadd.f32 0.0, %v1400
        %v1402 = vpop.f32.mrb[0].mxu0
        %v1403 = vadd.f32 0.0, %v1402
        %1404 = vdwg.mxu0
        %v1405 = vadd.f32 %v1292, %v1395
        %v1406 = vadd.f32 %v1293, %v1397
        %v1407 = vadd.f32 %v1294, %v1401
        %v1408 = vadd.f32 %v1295, %v1403
        %v1409 = vld [vmem:[%s3] sm:$0xff]
        %v1410 = vld [vmem:[%s3 + $0x8] sm:$0xff]
        %1412 = vset.pattern.permute.xlu0 0
        %1413 = vperm.xlu0 %1412, %v1409
        %v1414 = vpop.permute.xlu0 %1413
        %1417 = vset.pattern.permute.xlu0 0
        %1418 = vperm.xlu0 %1417, %v1410
        %v1419 = vpop.permute.xlu0 %1418
        %v1421 = vadd.f32 %v1405, %v1414
        %v1422 = vadd.f32 %v1406, %v1414
        %v1423 = vadd.f32 %v1407, %v1419
        %v1424 = vadd.f32 %v1408, %v1419
        %s1425 = sld [smem:[#allocation3]]
        %vm1426 = vcmp.ge.f32.partialorder %v1421, 0.0
        %vm1427 = vcmp.ge.f32.partialorder %v1422, 0.0
        %vm1428 = vcmp.ge.f32.partialorder %v1423, 0.0
        %vm1429 = vcmp.ge.f32.partialorder %v1424, 0.0
        %v1430 = vstv %s1425
        %v1431 = vmul.f32 %v1430, %v1421
        %v1432 = vmul.f32 %v1430, %v1422
        %v1433 = vmul.f32 %v1430, %v1423
        %v1434 = vmul.f32 %v1430, %v1424
        %v1435 = vsel %vm1426, %v1421, %v1431
        %v1436 = vsel %vm1427, %v1422, %v1432
        %v1437 = vsel %vm1428, %v1423, %v1433
        %v1438 = vsel %vm1429, %v1424, %v1434
        %1441 = vrot.lane.b32.xlu0 %v1436, 17
        %v1442 = vpop.permute.xlu0 %1441
        %1443 = vrot.lane.b32.xlu0 %v1438, 17
        %v1444 = vpop.permute.xlu0 %1443
        %1449 = vrot.lane.b32.xlu0 %v1435, 17
        %v1450 = vpop.permute.xlu0 %1449
        %1451 = vrot.lane.b32.xlu0 %v1437, 17
        %v1452 = vpop.permute.xlu0 %1451
        %v1453 = vsel %vm428, %v1450, %v1442
        %v1454 = vsel %vm428, %v1452, %v1444
        %v1459 = vsel %vm428, %v1442, %v1450
        %v1460 = vsel %vm428, %v1444, %v1452
        %v1461 = vmul.f32 %v1459, %v437
        %v1462 = vmul.f32 %v1453, %v441
        %v1463 = vmul.f32 %v1460, %v437
        %v1464 = vmul.f32 %v1454, %v441
        %v1465 = vld [vmem:[%s4] sm:$0xff]
        %v1466 = vld [vmem:[%s4 + $0x8] sm:$0xff]
        %v1467 = vld [vmem:[%s4 + $0x10] sm:$0xff]
        %v1468 = vld [vmem:[%s4 + $0x18] sm:$0xff]
        %1469 = vrot.lane.b32.xlu0 %v1436, 16
        %v1470 = vpop.permute.xlu0 %1469
        %1471 = vrot.lane.b32.xlu0 %v1438, 16
        %v1472 = vpop.permute.xlu0 %1471
        %1475 = vrot.lane.b32.xlu0 %v1435, 16
        %v1476 = vpop.permute.xlu0 %1475
        %1477 = vrot.lane.b32.xlu0 %v1437, 16
        %v1478 = vpop.permute.xlu0 %1477
        %v1479 = vsel %vm453, %v1476, %v1470
        %v1480 = vsel %vm453, %v1478, %v1472
        %v1485 = vsel %vm453, %v1470, %v1476
        %v1486 = vsel %vm453, %v1472, %v1478
        %v1487 = vmul.f32 %v1485, %v462
        %v1488 = vmul.f32 %v1479, %v466
        %v1489 = vmul.f32 %v1486, %v462
        %v1490 = vmul.f32 %v1480, %v466
        %s1491 = scalar_lea.vmem %s4, 32
        %v1492 = vld [vmem:[%s1491] sm:$0xff]
        %v1493 = vld [vmem:[%s1491 + $0x8] sm:$0xff]
        %v1494 = vld [vmem:[%s1491 + $0x10] sm:$0xff]
        %v1495 = vld [vmem:[%s1491 + $0x18] sm:$0xff]
        %v1497 = vsel %vm453, %v1492, 0
        %v1500 = vsel %vm453, %v1493, 0
        %v1503 = vsel %vm453, %v1494, 0
        %v1506 = vsel %vm453, %v1495, 0
        %1508 = vmatprep.subr.mxu0 %v1488
        %1509 = vmatpush1.msra.mxu0 %v1487
        %1510 = vmatprep.subr.mxu0 %v1490
        %1511 = vmatpush1.msra.mxu0 %v1489
        %1512 = vmatprep.subr.mxu0 0.0
        %1513 = vmatpush1.msra.mxu0 0.0
        %1514 = vmatprep.subr.mxu0 0.0
        %1515 = vmatpush1.msra.mxu0 0.0
        %1516 = vmatprep.subr.mxu0 0.0
        %1517 = vmatpush1.msra.mxu0 0.0
        %1518 = vmatprep.subr.mxu0 0.0
        %1519 = vmatpush1.msra.mxu0 0.0
        %1520 = vmatprep.subr.mxu0 0.0
        %1521 = vmatpush1.msra.mxu0 0.0
        %1522 = vmatprep.subr.mxu0 0.0
        %1523 = vmatpush1.msra.mxu0 0.0
        %1524 = vmatprep.subr.mxu0 0.0
        %1525 = vmatpush1.msra.mxu0 0.0
        %1526 = vmatprep.subr.mxu0 0.0
        %1527 = vmatpush1.msra.mxu0 0.0
        %1528 = vmatprep.subr.mxu0 0.0
        %1529 = vmatpush1.msra.mxu0 0.0
        %1530 = vmatprep.subr.mxu0 0.0
        %1531 = vmatpush1.msra.mxu0 0.0
        %1532 = vmatprep.subr.mxu0 0.0
        %1533 = vmatpush1.msra.mxu0 0.0
        %1534 = vmatprep.subr.mxu0 0.0
        %1535 = vmatpush1.msra.mxu0 0.0
        %1536 = vmatprep.subr.mxu0 0.0
        %1537 = vmatpush1.msra.mxu0 0.0
        %1538 = vmatprep.subr.mxu0 0.0
        %1539 = vmatpush1.msra.mxu0 0.0
        %1540 = vmatprep.subr.mxu0 0.0
        %1541 = vmatpush1.msra.mxu0 0.0
        %1542 = vmatprep.subr.mxu0 0.0
        %1543 = vmatpush1.msra.mxu0 0.0
        %1544 = vmatprep.subr.mxu0 0.0
        %1545 = vmatpush1.msra.mxu0 0.0
        %1546 = vmatprep.subr.mxu0 0.0
        %1547 = vmatpush1.msra.mxu0 0.0
        %1548 = vmatprep.subr.mxu0 0.0
        %1549 = vmatpush1.msra.mxu0 0.0
        %1550 = vmatprep.subr.mxu0 0.0
        %1551 = vmatpush1.msra.mxu0 0.0
        %1552 = vmatprep.subr.mxu0 0.0
        %1553 = vmatpush1.msra.mxu0 0.0
        %1554 = vmatprep.subr.mxu0 0.0
        %1555 = vmatpush1.msra.mxu0 0.0
        %1556 = vmatprep.subr.mxu0 0.0
        %1557 = vmatpush1.msra.mxu0 0.0
        %1558 = vmatprep.subr.mxu0 0.0
        %1559 = vmatpush1.msra.mxu0 0.0
        %1560 = vmatprep.subr.mxu0 0.0
        %1561 = vmatpush1.msra.mxu0 0.0
        %1562 = vmatprep.subr.mxu0 0.0
        %1563 = vmatpush1.msra.mxu0 0.0
        %1564 = vmatprep.subr.mxu0 0.0
        %1565 = vmatpush1.msra.mxu0 0.0
        %1566 = vmatprep.subr.mxu0 0.0
        %1567 = vmatpush1.msra.mxu0 0.0
        %1568 = vmatprep.subr.mxu0 0.0
        %1569 = vmatpush1.msra.mxu0 0.0
        %1570 = vmatprep.subr.mxu0 0.0
        %1571 = vmatpush1.msra.mxu0 0.0
        %1572 = vmatprep.mubr.f32.mxu0 0.0
        %1573 = vmatmul.mubr.f32.gmra.mrb[0].mxu0 %v1497
        %v1574 = vpop.f32.mrb[0].mxu0
        %v1575 = vadd.f32 0.0, %v1574
        %v1576 = vpop.f32.mrb[0].mxu0
        %v1577 = vadd.f32 0.0, %v1576
        %1578 = vmatprep.mubr.f32.mxu0 0.0
        %1579 = vmatmul.mubr.f32.gmra.mrb[0].mxu0 %v1500
        %v1580 = vpop.f32.mrb[0].mxu0
        %v1581 = vadd.f32 0.0, %v1580
        %v1582 = vpop.f32.mrb[0].mxu0
        %v1583 = vadd.f32 0.0, %v1582
        %1584 = vmatprep.mubr.f32.mxu0 0.0
        %1585 = vmatmul.mubr.f32.gmra.mrb[0].mxu0 %v1503
        %v1586 = vpop.f32.mrb[0].mxu0
        %v1587 = vadd.f32 0.0, %v1586
        %v1588 = vpop.f32.mrb[0].mxu0
        %v1589 = vadd.f32 0.0, %v1588
        %1590 = vmatprep.mubr.f32.mxu0 0.0
        %1591 = vmatmul.mubr.f32.gmra.mrb[0].mxu0 %v1506
        %v1592 = vpop.f32.mrb[0].mxu0
        %v1593 = vadd.f32 0.0, %v1592
        %v1594 = vpop.f32.mrb[0].mxu0
        %v1595 = vadd.f32 0.0, %v1594
        %1596 = vdwg.mxu0
        %v1598 = vsel %vm453, %v1465, 0
        %v1601 = vsel %vm453, %v1466, 0
        %v1604 = vsel %vm453, %v1467, 0
        %v1607 = vsel %vm453, %v1468, 0
        %1609 = vmatprep.subr.mxu0 %v1462
        %1610 = vmatpush1.msra.mxu0 %v1461
        %1611 = vmatprep.subr.mxu0 %v1464
        %1612 = vmatpush1.msra.mxu0 %v1463
        %1613 = vmatprep.subr.mxu0 0.0
        %1614 = vmatpush1.msra.mxu0 0.0
        %1615 = vmatprep.subr.mxu0 0.0
        %1616 = vmatpush1.msra.mxu0 0.0
        %1617 = vmatprep.subr.mxu0 0.0
        %1618 = vmatpush1.msra.mxu0 0.0
        %1619 = vmatprep.subr.mxu0 0.0
        %1620 = vmatpush1.msra.mxu0 0.0
        %1621 = vmatprep.subr.mxu0 0.0
        %1622 = vmatpush1.msra.mxu0 0.0
        %1623 = vmatprep.subr.mxu0 0.0
        %1624 = vmatpush1.msra.mxu0 0.0
        %1625 = vmatprep.subr.mxu0 0.0
        %1626 = vmatpush1.msra.mxu0 0.0
        %1627 = vmatprep.subr.mxu0 0.0
        %1628 = vmatpush1.msra.mxu0 0.0
        %1629 = vmatprep.subr.mxu0 0.0
        %1630 = vmatpush1.msra.mxu0 0.0
        %1631 = vmatprep.subr.mxu0 0.0
        %1632 = vmatpush1.msra.mxu0 0.0
        %1633 = vmatprep.subr.mxu0 0.0
        %1634 = vmatpush1.msra.mxu0 0.0
        %1635 = vmatprep.subr.mxu0 0.0
        %1636 = vmatpush1.msra.mxu0 0.0
        %1637 = vmatprep.subr.mxu0 0.0
        %1638 = vmatpush1.msra.mxu0 0.0
        %1639 = vmatprep.subr.mxu0 0.0
        %1640 = vmatpush1.msra.mxu0 0.0
        %1641 = vmatprep.subr.mxu0 0.0
        %1642 = vmatpush1.msra.mxu0 0.0
        %1643 = vmatprep.subr.mxu0 0.0
        %1644 = vmatpush1.msra.mxu0 0.0
        %1645 = vmatprep.subr.mxu0 0.0
        %1646 = vmatpush1.msra.mxu0 0.0
        %1647 = vmatprep.subr.mxu0 0.0
        %1648 = vmatpush1.msra.mxu0 0.0
        %1649 = vmatprep.subr.mxu0 0.0
        %1650 = vmatpush1.msra.mxu0 0.0
        %1651 = vmatprep.subr.mxu0 0.0
        %1652 = vmatpush1.msra.mxu0 0.0
        %1653 = vmatprep.subr.mxu0 0.0
        %1654 = vmatpush1.msra.mxu0 0.0
        %1655 = vmatprep.subr.mxu0 0.0
        %1656 = vmatpush1.msra.mxu0 0.0
        %1657 = vmatprep.subr.mxu0 0.0
        %1658 = vmatpush1.msra.mxu0 0.0
        %1659 = vmatprep.subr.mxu0 0.0
        %1660 = vmatpush1.msra.mxu0 0.0
        %1661 = vmatprep.subr.mxu0 0.0
        %1662 = vmatpush1.msra.mxu0 0.0
        %1663 = vmatprep.subr.mxu0 0.0
        %1664 = vmatpush1.msra.mxu0 0.0
        %1665 = vmatprep.subr.mxu0 0.0
        %1666 = vmatpush1.msra.mxu0 0.0
        %1667 = vmatprep.subr.mxu0 0.0
        %1668 = vmatpush1.msra.mxu0 0.0
        %1669 = vmatprep.subr.mxu0 0.0
        %1670 = vmatpush1.msra.mxu0 0.0
        %1671 = vmatprep.subr.mxu0 0.0
        %1672 = vmatpush1.msra.mxu0 0.0
        %1673 = vmatprep.mubr.f32.mxu0 0.0
        %1674 = vmatmul.mubr.f32.gmra.mrb[0].mxu0 %v1598
        %v1675 = vpop.f32.mrb[0].mxu0
        %v1676 = vadd.f32 %v1575, %v1675
        %v1677 = vpop.f32.mrb[0].mxu0
        %v1678 = vadd.f32 %v1577, %v1677
        %1679 = vmatprep.mubr.f32.mxu0 0.0
        %1680 = vmatmul.mubr.f32.gmra.mrb[0].mxu0 %v1601
        %v1681 = vpop.f32.mrb[0].mxu0
        %v1682 = vadd.f32 %v1581, %v1681
        %v1683 = vpop.f32.mrb[0].mxu0
        %v1684 = vadd.f32 %v1583, %v1683
        %1685 = vmatprep.mubr.f32.mxu0 0.0
        %1686 = vmatmul.mubr.f32.gmra.mrb[0].mxu0 %v1604
        %v1687 = vpop.f32.mrb[0].mxu0
        %v1688 = vadd.f32 %v1587, %v1687
        %v1689 = vpop.f32.mrb[0].mxu0
        %v1690 = vadd.f32 %v1589, %v1689
        %1691 = vmatprep.mubr.f32.mxu0 0.0
        %1692 = vmatmul.mubr.f32.gmra.mrb[0].mxu0 %v1607
        %v1693 = vpop.f32.mrb[0].mxu0
        %v1694 = vadd.f32 %v1593, %v1693
        %v1695 = vpop.f32.mrb[0].mxu0
        %v1696 = vadd.f32 %v1595, %v1695
        %1697 = vdwg.mxu0
        %1698 = vrot.lane.b32.xlu0 %v1436, 15
        %v1699 = vpop.permute.xlu0 %1698
        %1700 = vrot.lane.b32.xlu0 %v1438, 15
        %v1701 = vpop.permute.xlu0 %1700
        %1704 = vrot.lane.b32.xlu0 %v1435, 15
        %v1705 = vpop.permute.xlu0 %1704
        %1706 = vrot.lane.b32.xlu0 %v1437, 15
        %v1707 = vpop.permute.xlu0 %1706
        %v1708 = vsel %vm646, %v1705, %v1699
        %v1709 = vsel %vm646, %v1707, %v1701
        %v1714 = vsel %vm646, %v1699, %v1705
        %v1715 = vsel %vm646, %v1701, %v1707
        %v1716 = vmul.f32 %v1714, %v655
        %v1717 = vmul.f32 %v1708, %v659
        %v1718 = vmul.f32 %v1715, %v655
        %v1719 = vmul.f32 %v1709, %v659
        %s1720 = scalar_lea.vmem %s4, 64
        %v1721 = vld [vmem:[%s1720] sm:$0xff]
        %v1722 = vld [vmem:[%s1720 + $0x8] sm:$0xff]
        %v1723 = vld [vmem:[%s1720 + $0x10] sm:$0xff]
        %v1724 = vld [vmem:[%s1720 + $0x18] sm:$0xff]
        %v1726 = vsel %vm453, %v1721, 0
        %v1729 = vsel %vm453, %v1722, 0
        %v1732 = vsel %vm453, %v1723, 0
        %v1735 = vsel %vm453, %v1724, 0
        %1737 = vmatprep.subr.mxu0 %v1717
        %1738 = vmatpush1.msra.mxu0 %v1716
        %1739 = vmatprep.subr.mxu0 %v1719
        %1740 = vmatpush1.msra.mxu0 %v1718
        %1741 = vmatprep.subr.mxu0 0.0
        %1742 = vmatpush1.msra.mxu0 0.0
        %1743 = vmatprep.subr.mxu0 0.0
        %1744 = vmatpush1.msra.mxu0 0.0
        %1745 = vmatprep.subr.mxu0 0.0
        %1746 = vmatpush1.msra.mxu0 0.0
        %1747 = vmatprep.subr.mxu0 0.0
        %1748 = vmatpush1.msra.mxu0 0.0
        %1749 = vmatprep.subr.mxu0 0.0
        %1750 = vmatpush1.msra.mxu0 0.0
        %1751 = vmatprep.subr.mxu0 0.0
        %1752 = vmatpush1.msra.mxu0 0.0
        %1753 = vmatprep.subr.mxu0 0.0
        %1754 = vmatpush1.msra.mxu0 0.0
        %1755 = vmatprep.subr.mxu0 0.0
        %1756 = vmatpush1.msra.mxu0 0.0
        %1757 = vmatprep.subr.mxu0 0.0
        %1758 = vmatpush1.msra.mxu0 0.0
        %1759 = vmatprep.subr.mxu0 0.0
        %1760 = vmatpush1.msra.mxu0 0.0
        %1761 = vmatprep.subr.mxu0 0.0
        %1762 = vmatpush1.msra.mxu0 0.0
        %1763 = vmatprep.subr.mxu0 0.0
        %1764 = vmatpush1.msra.mxu0 0.0
        %1765 = vmatprep.subr.mxu0 0.0
        %1766 = vmatpush1.msra.mxu0 0.0
        %1767 = vmatprep.subr.mxu0 0.0
        %1768 = vmatpush1.msra.mxu0 0.0
        %1769 = vmatprep.subr.mxu0 0.0
        %1770 = vmatpush1.msra.mxu0 0.0
        %1771 = vmatprep.subr.mxu0 0.0
        %1772 = vmatpush1.msra.mxu0 0.0
        %1773 = vmatprep.subr.mxu0 0.0
        %1774 = vmatpush1.msra.mxu0 0.0
        %1775 = vmatprep.subr.mxu0 0.0
        %1776 = vmatpush1.msra.mxu0 0.0
        %1777 = vmatprep.subr.mxu0 0.0
        %1778 = vmatpush1.msra.mxu0 0.0
        %1779 = vmatprep.subr.mxu0 0.0
        %1780 = vmatpush1.msra.mxu0 0.0
        %1781 = vmatprep.subr.mxu0 0.0
        %1782 = vmatpush1.msra.mxu0 0.0
        %1783 = vmatprep.subr.mxu0 0.0
        %1784 = vmatpush1.msra.mxu0 0.0
        %1785 = vmatprep.subr.mxu0 0.0
        %1786 = vmatpush1.msra.mxu0 0.0
        %1787 = vmatprep.subr.mxu0 0.0
        %1788 = vmatpush1.msra.mxu0 0.0
        %1789 = vmatprep.subr.mxu0 0.0
        %1790 = vmatpush1.msra.mxu0 0.0
        %1791 = vmatprep.subr.mxu0 0.0
        %1792 = vmatpush1.msra.mxu0 0.0
        %1793 = vmatprep.subr.mxu0 0.0
        %1794 = vmatpush1.msra.mxu0 0.0
        %1795 = vmatprep.subr.mxu0 0.0
        %1796 = vmatpush1.msra.mxu0 0.0
        %1797 = vmatprep.subr.mxu0 0.0
        %1798 = vmatpush1.msra.mxu0 0.0
        %1799 = vmatprep.subr.mxu0 0.0
        %1800 = vmatpush1.msra.mxu0 0.0
        %1801 = vmatprep.mubr.f32.mxu0 0.0
        %1802 = vmatmul.mubr.f32.gmra.mrb[0].mxu0 %v1726
        %v1803 = vpop.f32.mrb[0].mxu0
        %v1804 = vadd.f32 0.0, %v1803
        %v1805 = vpop.f32.mrb[0].mxu0
        %v1806 = vadd.f32 0.0, %v1805
        %1807 = vmatprep.mubr.f32.mxu0 0.0
        %1808 = vmatmul.mubr.f32.gmra.mrb[0].mxu0 %v1729
        %v1809 = vpop.f32.mrb[0].mxu0
        %v1810 = vadd.f32 0.0, %v1809
        %v1811 = vpop.f32.mrb[0].mxu0
        %v1812 = vadd.f32 0.0, %v1811
        %1813 = vmatprep.mubr.f32.mxu0 0.0
        %1814 = vmatmul.mubr.f32.gmra.mrb[0].mxu0 %v1732
        %v1815 = vpop.f32.mrb[0].mxu0
        %v1816 = vadd.f32 0.0, %v1815
        %v1817 = vpop.f32.mrb[0].mxu0
        %v1818 = vadd.f32 0.0, %v1817
        %1819 = vmatprep.mubr.f32.mxu0 0.0
        %1820 = vmatmul.mubr.f32.gmra.mrb[0].mxu0 %v1735
        %v1821 = vpop.f32.mrb[0].mxu0
        %v1822 = vadd.f32 0.0, %v1821
        %v1823 = vpop.f32.mrb[0].mxu0
        %v1824 = vadd.f32 0.0, %v1823
        %1825 = vdwg.mxu0
        %v1826 = vadd.f32 %v1676, %v1804
        %v1827 = vadd.f32 %v1678, %v1806
        %v1828 = vadd.f32 %v1682, %v1810
        %v1829 = vadd.f32 %v1684, %v1812
        %v1830 = vadd.f32 %v1688, %v1816
        %v1831 = vadd.f32 %v1690, %v1818
        %v1832 = vadd.f32 %v1694, %v1822
        %v1833 = vadd.f32 %v1696, %v1824
        %1834 = vrot.lane.b32.xlu0 %v1436, 1
        %v1835 = vpop.permute.xlu0 %1834
        %1836 = vrot.lane.b32.xlu0 %v1438, 1
        %v1837 = vpop.permute.xlu0 %1836
        %1840 = vrot.lane.b32.xlu0 %v1435, 1
        %v1841 = vpop.permute.xlu0 %1840
        %1842 = vrot.lane.b32.xlu0 %v1437, 1
        %v1843 = vpop.permute.xlu0 %1842
        %v1844 = vsel %vm759, %v1841, %v1835
        %v1845 = vsel %vm759, %v1843, %v1837
        %v1850 = vsel %vm759, %v1835, %v1841
        %v1851 = vsel %vm759, %v1837, %v1843
        %v1852 = vmul.f32 %v1850, %v768
        %v1853 = vmul.f32 %v1844, %v772
        %v1854 = vmul.f32 %v1851, %v768
        %v1855 = vmul.f32 %v1845, %v772
        %s1856 = scalar_lea.vmem %s4, 96
        %v1857 = vld [vmem:[%s1856] sm:$0xff]
        %v1858 = vld [vmem:[%s1856 + $0x8] sm:$0xff]
        %v1859 = vld [vmem:[%s1856 + $0x10] sm:$0xff]
        %v1860 = vld [vmem:[%s1856 + $0x18] sm:$0xff]
        %v1862 = vsel %vm453, %v1857, 0
        %v1865 = vsel %vm453, %v1858, 0
        %v1868 = vsel %vm453, %v1859, 0
        %v1871 = vsel %vm453, %v1860, 0
        %1873 = vmatprep.subr.mxu0 %v1853
        %1874 = vmatpush1.msra.mxu0 %v1852
        %1875 = vmatprep.subr.mxu0 %v1855
        %1876 = vmatpush1.msra.mxu0 %v1854
        %1877 = vmatprep.subr.mxu0 0.0
        %1878 = vmatpush1.msra.mxu0 0.0
        %1879 = vmatprep.subr.mxu0 0.0
        %1880 = vmatpush1.msra.mxu0 0.0
        %1881 = vmatprep.subr.mxu0 0.0
        %1882 = vmatpush1.msra.mxu0 0.0
        %1883 = vmatprep.subr.mxu0 0.0
        %1884 = vmatpush1.msra.mxu0 0.0
        %1885 = vmatprep.subr.mxu0 0.0
        %1886 = vmatpush1.msra.mxu0 0.0
        %1887 = vmatprep.subr.mxu0 0.0
        %1888 = vmatpush1.msra.mxu0 0.0
        %1889 = vmatprep.subr.mxu0 0.0
        %1890 = vmatpush1.msra.mxu0 0.0
        %1891 = vmatprep.subr.mxu0 0.0
        %1892 = vmatpush1.msra.mxu0 0.0
        %1893 = vmatprep.subr.mxu0 0.0
        %1894 = vmatpush1.msra.mxu0 0.0
        %1895 = vmatprep.subr.mxu0 0.0
        %1896 = vmatpush1.msra.mxu0 0.0
        %1897 = vmatprep.subr.mxu0 0.0
        %1898 = vmatpush1.msra.mxu0 0.0
        %1899 = vmatprep.subr.mxu0 0.0
        %1900 = vmatpush1.msra.mxu0 0.0
        %1901 = vmatprep.subr.mxu0 0.0
        %1902 = vmatpush1.msra.mxu0 0.0
        %1903 = vmatprep.subr.mxu0 0.0
        %1904 = vmatpush1.msra.mxu0 0.0
        %1905 = vmatprep.subr.mxu0 0.0
        %1906 = vmatpush1.msra.mxu0 0.0
        %1907 = vmatprep.subr.mxu0 0.0
        %1908 = vmatpush1.msra.mxu0 0.0
        %1909 = vmatprep.subr.mxu0 0.0
        %1910 = vmatpush1.msra.mxu0 0.0
        %1911 = vmatprep.subr.mxu0 0.0
        %1912 = vmatpush1.msra.mxu0 0.0
        %1913 = vmatprep.subr.mxu0 0.0
        %1914 = vmatpush1.msra.mxu0 0.0
        %1915 = vmatprep.subr.mxu0 0.0
        %1916 = vmatpush1.msra.mxu0 0.0
        %1917 = vmatprep.subr.mxu0 0.0
        %1918 = vmatpush1.msra.mxu0 0.0
        %1919 = vmatprep.subr.mxu0 0.0
        %1920 = vmatpush1.msra.mxu0 0.0
        %1921 = vmatprep.subr.mxu0 0.0
        %1922 = vmatpush1.msra.mxu0 0.0
        %1923 = vmatprep.subr.mxu0 0.0
        %1924 = vmatpush1.msra.mxu0 0.0
        %1925 = vmatprep.subr.mxu0 0.0
        %1926 = vmatpush1.msra.mxu0 0.0
        %1927 = vmatprep.subr.mxu0 0.0
        %1928 = vmatpush1.msra.mxu0 0.0
        %1929 = vmatprep.subr.mxu0 0.0
        %1930 = vmatpush1.msra.mxu0 0.0
        %1931 = vmatprep.subr.mxu0 0.0
        %1932 = vmatpush1.msra.mxu0 0.0
        %1933 = vmatprep.subr.mxu0 0.0
        %1934 = vmatpush1.msra.mxu0 0.0
        %1935 = vmatprep.subr.mxu0 0.0
        %1936 = vmatpush1.msra.mxu0 0.0
        %1937 = vmatprep.mubr.f32.mxu0 0.0
        %1938 = vmatmul.mubr.f32.gmra.mrb[0].mxu0 %v1862
        %v1939 = vpop.f32.mrb[0].mxu0
        %v1940 = vadd.f32 0.0, %v1939
        %v1941 = vpop.f32.mrb[0].mxu0
        %v1942 = vadd.f32 0.0, %v1941
        %1943 = vmatprep.mubr.f32.mxu0 0.0
        %1944 = vmatmul.mubr.f32.gmra.mrb[0].mxu0 %v1865
        %v1945 = vpop.f32.mrb[0].mxu0
        %v1946 = vadd.f32 0.0, %v1945
        %v1947 = vpop.f32.mrb[0].mxu0
        %v1948 = vadd.f32 0.0, %v1947
        %1949 = vmatprep.mubr.f32.mxu0 0.0
        %1950 = vmatmul.mubr.f32.gmra.mrb[0].mxu0 %v1868
        %v1951 = vpop.f32.mrb[0].mxu0
        %v1952 = vadd.f32 0.0, %v1951
        %v1953 = vpop.f32.mrb[0].mxu0
        %v1954 = vadd.f32 0.0, %v1953
        %1955 = vmatprep.mubr.f32.mxu0 0.0
        %1956 = vmatmul.mubr.f32.gmra.mrb[0].mxu0 %v1871
        %v1957 = vpop.f32.mrb[0].mxu0
        %v1958 = vadd.f32 0.0, %v1957
        %v1959 = vpop.f32.mrb[0].mxu0
        %v1960 = vadd.f32 0.0, %v1959
        %1961 = vdwg.mxu0
        %v1962 = vadd.f32 %v1826, %v1940
        %v1963 = vadd.f32 %v1827, %v1942
        %v1964 = vadd.f32 %v1828, %v1946
        %v1965 = vadd.f32 %v1829, %v1948
        %v1966 = vadd.f32 %v1830, %v1952
        %v1967 = vadd.f32 %v1831, %v1954
        %v1968 = vadd.f32 %v1832, %v1958
        %v1969 = vadd.f32 %v1833, %v1960
        %s1970 = scalar_lea.vmem %s4, 128
        %v1971 = vld [vmem:[%s1970] sm:$0xff]
        %v1972 = vld [vmem:[%s1970 + $0x8] sm:$0xff]
        %v1973 = vld [vmem:[%s1970 + $0x10] sm:$0xff]
        %v1974 = vld [vmem:[%s1970 + $0x18] sm:$0xff]
        %v1976 = vsel %vm453, %v1971, 0
        %v1979 = vsel %vm453, %v1972, 0
        %v1982 = vsel %vm453, %v1973, 0
        %v1985 = vsel %vm453, %v1974, 0
        %1987 = vmatprep.subr.mxu0 %v1436
        %1988 = vmatpush1.msra.mxu0 %v1435
        %1989 = vmatprep.subr.mxu0 %v1438
        %1990 = vmatpush1.msra.mxu0 %v1437
        %1991 = vmatprep.subr.mxu0 0.0
        %1992 = vmatpush1.msra.mxu0 0.0
        %1993 = vmatprep.subr.mxu0 0.0
        %1994 = vmatpush1.msra.mxu0 0.0
        %1995 = vmatprep.subr.mxu0 0.0
        %1996 = vmatpush1.msra.mxu0 0.0
        %1997 = vmatprep.subr.mxu0 0.0
        %1998 = vmatpush1.msra.mxu0 0.0
        %1999 = vmatprep.subr.mxu0 0.0
        %2000 = vmatpush1.msra.mxu0 0.0
        %2001 = vmatprep.subr.mxu0 0.0
        %2002 = vmatpush1.msra.mxu0 0.0
        %2003 = vmatprep.subr.mxu0 0.0
        %2004 = vmatpush1.msra.mxu0 0.0
        %2005 = vmatprep.subr.mxu0 0.0
        %2006 = vmatpush1.msra.mxu0 0.0
        %2007 = vmatprep.subr.mxu0 0.0
        %2008 = vmatpush1.msra.mxu0 0.0
        %2009 = vmatprep.subr.mxu0 0.0
        %2010 = vmatpush1.msra.mxu0 0.0
        %2011 = vmatprep.subr.mxu0 0.0
        %2012 = vmatpush1.msra.mxu0 0.0
        %2013 = vmatprep.subr.mxu0 0.0
        %2014 = vmatpush1.msra.mxu0 0.0
        %2015 = vmatprep.subr.mxu0 0.0
        %2016 = vmatpush1.msra.mxu0 0.0
        %2017 = vmatprep.subr.mxu0 0.0
        %2018 = vmatpush1.msra.mxu0 0.0
        %2019 = vmatprep.subr.mxu0 0.0
        %2020 = vmatpush1.msra.mxu0 0.0
        %2021 = vmatprep.subr.mxu0 0.0
        %2022 = vmatpush1.msra.mxu0 0.0
        %2023 = vmatprep.subr.mxu0 0.0
        %2024 = vmatpush1.msra.mxu0 0.0
        %2025 = vmatprep.subr.mxu0 0.0
        %2026 = vmatpush1.msra.mxu0 0.0
        %2027 = vmatprep.subr.mxu0 0.0
        %2028 = vmatpush1.msra.mxu0 0.0
        %2029 = vmatprep.subr.mxu0 0.0
        %2030 = vmatpush1.msra.mxu0 0.0
        %2031 = vmatprep.subr.mxu0 0.0
        %2032 = vmatpush1.msra.mxu0 0.0
        %2033 = vmatprep.subr.mxu0 0.0
        %2034 = vmatpush1.msra.mxu0 0.0
        %2035 = vmatprep.subr.mxu0 0.0
        %2036 = vmatpush1.msra.mxu0 0.0
        %2037 = vmatprep.subr.mxu0 0.0
        %2038 = vmatpush1.msra.mxu0 0.0
        %2039 = vmatprep.subr.mxu0 0.0
        %2040 = vmatpush1.msra.mxu0 0.0
        %2041 = vmatprep.subr.mxu0 0.0
        %2042 = vmatpush1.msra.mxu0 0.0
        %2043 = vmatprep.subr.mxu0 0.0
        %2044 = vmatpush1.msra.mxu0 0.0
        %2045 = vmatprep.subr.mxu0 0.0
        %2046 = vmatpush1.msra.mxu0 0.0
        %2047 = vmatprep.subr.mxu0 0.0
        %2048 = vmatpush1.msra.mxu0 0.0
        %2049 = vmatprep.subr.mxu0 0.0
        %2050 = vmatpush1.msra.mxu0 0.0
        %2051 = vmatprep.mubr.f32.mxu0 0.0
        %2052 = vmatmul.mubr.f32.gmra.mrb[0].mxu0 %v1976
        %v2053 = vpop.f32.mrb[0].mxu0
        %v2054 = vadd.f32 0.0, %v2053
        %v2055 = vpop.f32.mrb[0].mxu0
        %v2056 = vadd.f32 0.0, %v2055
        %2057 = vmatprep.mubr.f32.mxu0 0.0
        %2058 = vmatmul.mubr.f32.gmra.mrb[0].mxu0 %v1979
        %v2059 = vpop.f32.mrb[0].mxu0
        %v2060 = vadd.f32 0.0, %v2059
        %v2061 = vpop.f32.mrb[0].mxu0
        %v2062 = vadd.f32 0.0, %v2061
        %2063 = vmatprep.mubr.f32.mxu0 0.0
        %2064 = vmatmul.mubr.f32.gmra.mrb[0].mxu0 %v1982
        %v2065 = vpop.f32.mrb[0].mxu0
        %v2066 = vadd.f32 0.0, %v2065
        %v2067 = vpop.f32.mrb[0].mxu0
        %v2068 = vadd.f32 0.0, %v2067
        %2069 = vmatprep.mubr.f32.mxu0 0.0
        %2070 = vmatmul.mubr.f32.gmra.mrb[0].mxu0 %v1985
        %v2071 = vpop.f32.mrb[0].mxu0
        %v2072 = vadd.f32 0.0, %v2071
        %v2073 = vpop.f32.mrb[0].mxu0
        %v2074 = vadd.f32 0.0, %v2073
        %2075 = vdwg.mxu0
        %v2076 = vadd.f32 %v1962, %v2054
        %v2077 = vadd.f32 %v1963, %v2056
        %v2078 = vadd.f32 %v1964, %v2060
        %v2079 = vadd.f32 %v1965, %v2062
        %v2080 = vadd.f32 %v1966, %v2066
        %v2081 = vadd.f32 %v1967, %v2068
        %v2082 = vadd.f32 %v1968, %v2072
        %v2083 = vadd.f32 %v1969, %v2074
        %2084 = vrot.lane.b32.xlu0 %v1435, 127
        %v2085 = vpop.permute.xlu0 %2084
        %2086 = vrot.lane.b32.xlu0 %v1436, 127
        %v2087 = vpop.permute.xlu0 %2086
        %2088 = vrot.lane.b32.xlu0 %v1437, 127
        %v2089 = vpop.permute.xlu0 %2088
        %2090 = vrot.lane.b32.xlu0 %v1438, 127
        %v2091 = vpop.permute.xlu0 %2090
        %v2092 = vsel %vm961, %v2085, %v2087
        %v2093 = vsel %vm961, %v2089, %v2091
        %v2100 = vsel %vm961, %v2087, %v2085
        %v2101 = vsel %vm961, %v2091, %v2089
        %v2102 = vmul.f32 %v2092, %v971
        %v2103 = vmul.f32 %v2100, %v975
        %v2104 = vmul.f32 %v2093, %v971
        %v2105 = vmul.f32 %v2101, %v975
        %s2106 = scalar_lea.vmem %s4, 160
        %v2107 = vld [vmem:[%s2106] sm:$0xff]
        %v2108 = vld [vmem:[%s2106 + $0x8] sm:$0xff]
        %v2109 = vld [vmem:[%s2106 + $0x10] sm:$0xff]
        %v2110 = vld [vmem:[%s2106 + $0x18] sm:$0xff]
        %v2112 = vsel %vm453, %v2107, 0
        %v2115 = vsel %vm453, %v2108, 0
        %v2118 = vsel %vm453, %v2109, 0
        %v2121 = vsel %vm453, %v2110, 0
        %2123 = vmatprep.subr.mxu0 %v2103
        %2124 = vmatpush1.msra.mxu0 %v2102
        %2125 = vmatprep.subr.mxu0 %v2105
        %2126 = vmatpush1.msra.mxu0 %v2104
        %2127 = vmatprep.subr.mxu0 0.0
        %2128 = vmatpush1.msra.mxu0 0.0
        %2129 = vmatprep.subr.mxu0 0.0
        %2130 = vmatpush1.msra.mxu0 0.0
        %2131 = vmatprep.subr.mxu0 0.0
        %2132 = vmatpush1.msra.mxu0 0.0
        %2133 = vmatprep.subr.mxu0 0.0
        %2134 = vmatpush1.msra.mxu0 0.0
        %2135 = vmatprep.subr.mxu0 0.0
        %2136 = vmatpush1.msra.mxu0 0.0
        %2137 = vmatprep.subr.mxu0 0.0
        %2138 = vmatpush1.msra.mxu0 0.0
        %2139 = vmatprep.subr.mxu0 0.0
        %2140 = vmatpush1.msra.mxu0 0.0
        %2141 = vmatprep.subr.mxu0 0.0
        %2142 = vmatpush1.msra.mxu0 0.0
        %2143 = vmatprep.subr.mxu0 0.0
        %2144 = vmatpush1.msra.mxu0 0.0
        %2145 = vmatprep.subr.mxu0 0.0
        %2146 = vmatpush1.msra.mxu0 0.0
        %2147 = vmatprep.subr.mxu0 0.0
        %2148 = vmatpush1.msra.mxu0 0.0
        %2149 = vmatprep.subr.mxu0 0.0
        %2150 = vmatpush1.msra.mxu0 0.0
        %2151 = vmatprep.subr.mxu0 0.0
        %2152 = vmatpush1.msra.mxu0 0.0
        %2153 = vmatprep.subr.mxu0 0.0
        %2154 = vmatpush1.msra.mxu0 0.0
        %2155 = vmatprep.subr.mxu0 0.0
        %2156 = vmatpush1.msra.mxu0 0.0
        %2157 = vmatprep.subr.mxu0 0.0
        %2158 = vmatpush1.msra.mxu0 0.0
        %2159 = vmatprep.subr.mxu0 0.0
        %2160 = vmatpush1.msra.mxu0 0.0
        %2161 = vmatprep.subr.mxu0 0.0
        %2162 = vmatpush1.msra.mxu0 0.0
        %2163 = vmatprep.subr.mxu0 0.0
        %2164 = vmatpush1.msra.mxu0 0.0
        %2165 = vmatprep.subr.mxu0 0.0
        %2166 = vmatpush1.msra.mxu0 0.0
        %2167 = vmatprep.subr.mxu0 0.0
        %2168 = vmatpush1.msra.mxu0 0.0
        %2169 = vmatprep.subr.mxu0 0.0
        %2170 = vmatpush1.msra.mxu0 0.0
        %2171 = vmatprep.subr.mxu0 0.0
        %2172 = vmatpush1.msra.mxu0 0.0
        %2173 = vmatprep.subr.mxu0 0.0
        %2174 = vmatpush1.msra.mxu0 0.0
        %2175 = vmatprep.subr.mxu0 0.0
        %2176 = vmatpush1.msra.mxu0 0.0
        %2177 = vmatprep.subr.mxu0 0.0
        %2178 = vmatpush1.msra.mxu0 0.0
        %2179 = vmatprep.subr.mxu0 0.0
        %2180 = vmatpush1.msra.mxu0 0.0
        %2181 = vmatprep.subr.mxu0 0.0
        %2182 = vmatpush1.msra.mxu0 0.0
        %2183 = vmatprep.subr.mxu0 0.0
        %2184 = vmatpush1.msra.mxu0 0.0
        %2185 = vmatprep.subr.mxu0 0.0
        %2186 = vmatpush1.msra.mxu0 0.0
        %2187 = vmatprep.mubr.f32.mxu0 0.0
        %2188 = vmatmul.mubr.f32.gmra.mrb[0].mxu0 %v2112
        %v2189 = vpop.f32.mrb[0].mxu0
        %v2190 = vadd.f32 0.0, %v2189
        %v2191 = vpop.f32.mrb[0].mxu0
        %v2192 = vadd.f32 0.0, %v2191
        %2193 = vmatprep.mubr.f32.mxu0 0.0
        %2194 = vmatmul.mubr.f32.gmra.mrb[0].mxu0 %v2115
        %v2195 = vpop.f32.mrb[0].mxu0
        %v2196 = vadd.f32 0.0, %v2195
        %v2197 = vpop.f32.mrb[0].mxu0
        %v2198 = vadd.f32 0.0, %v2197
        %2199 = vmatprep.mubr.f32.mxu0 0.0
        %2200 = vmatmul.mubr.f32.gmra.mrb[0].mxu0 %v2118
        %v2201 = vpop.f32.mrb[0].mxu0
        %v2202 = vadd.f32 0.0, %v2201
        %v2203 = vpop.f32.mrb[0].mxu0
        %v2204 = vadd.f32 0.0, %v2203
        %2205 = vmatprep.mubr.f32.mxu0 0.0
        %2206 = vmatmul.mubr.f32.gmra.mrb[0].mxu0 %v2121
        %v2207 = vpop.f32.mrb[0].mxu0
        %v2208 = vadd.f32 0.0, %v2207
        %v2209 = vpop.f32.mrb[0].mxu0
        %v2210 = vadd.f32 0.0, %v2209
        %2211 = vdwg.mxu0
        %v2212 = vadd.f32 %v2076, %v2190
        %v2213 = vadd.f32 %v2077, %v2192
        %v2214 = vadd.f32 %v2078, %v2196
        %v2215 = vadd.f32 %v2079, %v2198
        %v2216 = vadd.f32 %v2080, %v2202
        %v2217 = vadd.f32 %v2081, %v2204
        %v2218 = vadd.f32 %v2082, %v2208
        %v2219 = vadd.f32 %v2083, %v2210
        %2220 = vrot.lane.b32.xlu0 %v1435, 113
        %v2221 = vpop.permute.xlu0 %2220
        %2222 = vrot.lane.b32.xlu0 %v1436, 113
        %v2223 = vpop.permute.xlu0 %2222
        %2224 = vrot.lane.b32.xlu0 %v1437, 113
        %v2225 = vpop.permute.xlu0 %2224
        %2226 = vrot.lane.b32.xlu0 %v1438, 113
        %v2227 = vpop.permute.xlu0 %2226
        %v2228 = vsel %vm1074, %v2221, %v2223
        %v2229 = vsel %vm1074, %v2225, %v2227
        %v2236 = vsel %vm1074, %v2223, %v2221
        %v2237 = vsel %vm1074, %v2227, %v2225
        %v2238 = vmul.f32 %v2228, %v1084
        %v2239 = vmul.f32 %v2236, %v1088
        %v2240 = vmul.f32 %v2229, %v1084
        %v2241 = vmul.f32 %v2237, %v1088
        %s2242 = scalar_lea.vmem %s4, 192
        %v2243 = vld [vmem:[%s2242] sm:$0xff]
        %v2244 = vld [vmem:[%s2242 + $0x8] sm:$0xff]
        %v2245 = vld [vmem:[%s2242 + $0x10] sm:$0xff]
        %v2246 = vld [vmem:[%s2242 + $0x18] sm:$0xff]
        %v2248 = vsel %vm453, %v2243, 0
        %v2251 = vsel %vm453, %v2244, 0
        %v2254 = vsel %vm453, %v2245, 0
        %v2257 = vsel %vm453, %v2246, 0
        %2259 = vmatprep.subr.mxu0 %v2239
        %2260 = vmatpush1.msra.mxu0 %v2238
        %2261 = vmatprep.subr.mxu0 %v2241
        %2262 = vmatpush1.msra.mxu0 %v2240
        %2263 = vmatprep.subr.mxu0 0.0
        %2264 = vmatpush1.msra.mxu0 0.0
        %2265 = vmatprep.subr.mxu0 0.0
        %2266 = vmatpush1.msra.mxu0 0.0
        %2267 = vmatprep.subr.mxu0 0.0
        %2268 = vmatpush1.msra.mxu0 0.0
        %2269 = vmatprep.subr.mxu0 0.0
        %2270 = vmatpush1.msra.mxu0 0.0
        %2271 = vmatprep.subr.mxu0 0.0
        %2272 = vmatpush1.msra.mxu0 0.0
        %2273 = vmatprep.subr.mxu0 0.0
        %2274 = vmatpush1.msra.mxu0 0.0
        %2275 = vmatprep.subr.mxu0 0.0
        %2276 = vmatpush1.msra.mxu0 0.0
        %2277 = vmatprep.subr.mxu0 0.0
        %2278 = vmatpush1.msra.mxu0 0.0
        %2279 = vmatprep.subr.mxu0 0.0
        %2280 = vmatpush1.msra.mxu0 0.0
        %2281 = vmatprep.subr.mxu0 0.0
        %2282 = vmatpush1.msra.mxu0 0.0
        %2283 = vmatprep.subr.mxu0 0.0
        %2284 = vmatpush1.msra.mxu0 0.0
        %2285 = vmatprep.subr.mxu0 0.0
        %2286 = vmatpush1.msra.mxu0 0.0
        %2287 = vmatprep.subr.mxu0 0.0
        %2288 = vmatpush1.msra.mxu0 0.0
        %2289 = vmatprep.subr.mxu0 0.0
        %2290 = vmatpush1.msra.mxu0 0.0
        %2291 = vmatprep.subr.mxu0 0.0
        %2292 = vmatpush1.msra.mxu0 0.0
        %2293 = vmatprep.subr.mxu0 0.0
        %2294 = vmatpush1.msra.mxu0 0.0
        %2295 = vmatprep.subr.mxu0 0.0
        %2296 = vmatpush1.msra.mxu0 0.0
        %2297 = vmatprep.subr.mxu0 0.0
        %2298 = vmatpush1.msra.mxu0 0.0
        %2299 = vmatprep.subr.mxu0 0.0
        %2300 = vmatpush1.msra.mxu0 0.0
        %2301 = vmatprep.subr.mxu0 0.0
        %2302 = vmatpush1.msra.mxu0 0.0
        %2303 = vmatprep.subr.mxu0 0.0
        %2304 = vmatpush1.msra.mxu0 0.0
        %2305 = vmatprep.subr.mxu0 0.0
        %2306 = vmatpush1.msra.mxu0 0.0
        %2307 = vmatprep.subr.mxu0 0.0
        %2308 = vmatpush1.msra.mxu0 0.0
        %2309 = vmatprep.subr.mxu0 0.0
        %2310 = vmatpush1.msra.mxu0 0.0
        %2311 = vmatprep.subr.mxu0 0.0
        %2312 = vmatpush1.msra.mxu0 0.0
        %2313 = vmatprep.subr.mxu0 0.0
        %2314 = vmatpush1.msra.mxu0 0.0
        %2315 = vmatprep.subr.mxu0 0.0
        %2316 = vmatpush1.msra.mxu0 0.0
        %2317 = vmatprep.subr.mxu0 0.0
        %2318 = vmatpush1.msra.mxu0 0.0
        %2319 = vmatprep.subr.mxu0 0.0
        %2320 = vmatpush1.msra.mxu0 0.0
        %2321 = vmatprep.subr.mxu0 0.0
        %2322 = vmatpush1.msra.mxu0 0.0
        %2323 = vmatprep.mubr.f32.mxu0 0.0
        %2324 = vmatmul.mubr.f32.gmra.mrb[0].mxu0 %v2248
        %v2325 = vpop.f32.mrb[0].mxu0
        %v2326 = vadd.f32 0.0, %v2325
        %v2327 = vpop.f32.mrb[0].mxu0
        %v2328 = vadd.f32 0.0, %v2327
        %2329 = vmatprep.mubr.f32.mxu0 0.0
        %2330 = vmatmul.mubr.f32.gmra.mrb[0].mxu0 %v2251
        %v2331 = vpop.f32.mrb[0].mxu0
        %v2332 = vadd.f32 0.0, %v2331
        %v2333 = vpop.f32.mrb[0].mxu0
        %v2334 = vadd.f32 0.0, %v2333
        %2335 = vmatprep.mubr.f32.mxu0 0.0
        %2336 = vmatmul.mubr.f32.gmra.mrb[0].mxu0 %v2254
        %v2337 = vpop.f32.mrb[0].mxu0
        %v2338 = vadd.f32 0.0, %v2337
        %v2339 = vpop.f32.mrb[0].mxu0
        %v2340 = vadd.f32 0.0, %v2339
        %2341 = vmatprep.mubr.f32.mxu0 0.0
        %2342 = vmatmul.mubr.f32.gmra.mrb[0].mxu0 %v2257
        %v2343 = vpop.f32.mrb[0].mxu0
        %v2344 = vadd.f32 0.0, %v2343
        %v2345 = vpop.f32.mrb[0].mxu0
        %v2346 = vadd.f32 0.0, %v2345
        %2347 = vdwg.mxu0
        %v2348 = vadd.f32 %v2212, %v2326
        %v2349 = vadd.f32 %v2213, %v2328
        %v2350 = vadd.f32 %v2214, %v2332
        %v2351 = vadd.f32 %v2215, %v2334
        %v2352 = vadd.f32 %v2216, %v2338
        %v2353 = vadd.f32 %v2217, %v2340
        %v2354 = vadd.f32 %v2218, %v2344
        %v2355 = vadd.f32 %v2219, %v2346
        %2356 = vrot.lane.b32.xlu0 %v1435, 112
        %v2357 = vpop.permute.xlu0 %2356
        %2358 = vrot.lane.b32.xlu0 %v1436, 112
        %v2359 = vpop.permute.xlu0 %2358
        %2360 = vrot.lane.b32.xlu0 %v1437, 112
        %v2361 = vpop.permute.xlu0 %2360
        %2362 = vrot.lane.b32.xlu0 %v1438, 112
        %v2363 = vpop.permute.xlu0 %2362
        %v2364 = vsel %vm1187, %v2357, %v2359
        %v2365 = vsel %vm1187, %v2361, %v2363
        %v2372 = vsel %vm1187, %v2359, %v2357
        %v2373 = vsel %vm1187, %v2363, %v2361
        %v2374 = vmul.f32 %v2364, %v1197
        %v2375 = vmul.f32 %v2372, %v1201
        %v2376 = vmul.f32 %v2365, %v1197
        %v2377 = vmul.f32 %v2373, %v1201
        %s2378 = scalar_lea.vmem %s4, 224
        %v2379 = vld [vmem:[%s2378] sm:$0xff]
        %v2380 = vld [vmem:[%s2378 + $0x8] sm:$0xff]
        %v2381 = vld [vmem:[%s2378 + $0x10] sm:$0xff]
        %v2382 = vld [vmem:[%s2378 + $0x18] sm:$0xff]
        %v2384 = vsel %vm453, %v2379, 0
        %v2387 = vsel %vm453, %v2380, 0
        %v2390 = vsel %vm453, %v2381, 0
        %v2393 = vsel %vm453, %v2382, 0
        %2395 = vmatprep.subr.mxu0 %v2375
        %2396 = vmatpush1.msra.mxu0 %v2374
        %2397 = vmatprep.subr.mxu0 %v2377
        %2398 = vmatpush1.msra.mxu0 %v2376
        %2399 = vmatprep.subr.mxu0 0.0
        %2400 = vmatpush1.msra.mxu0 0.0
        %2401 = vmatprep.subr.mxu0 0.0
        %2402 = vmatpush1.msra.mxu0 0.0
        %2403 = vmatprep.subr.mxu0 0.0
        %2404 = vmatpush1.msra.mxu0 0.0
        %2405 = vmatprep.subr.mxu0 0.0
        %2406 = vmatpush1.msra.mxu0 0.0
        %2407 = vmatprep.subr.mxu0 0.0
        %2408 = vmatpush1.msra.mxu0 0.0
        %2409 = vmatprep.subr.mxu0 0.0
        %2410 = vmatpush1.msra.mxu0 0.0
        %2411 = vmatprep.subr.mxu0 0.0
        %2412 = vmatpush1.msra.mxu0 0.0
        %2413 = vmatprep.subr.mxu0 0.0
        %2414 = vmatpush1.msra.mxu0 0.0
        %2415 = vmatprep.subr.mxu0 0.0
        %2416 = vmatpush1.msra.mxu0 0.0
        %2417 = vmatprep.subr.mxu0 0.0
        %2418 = vmatpush1.msra.mxu0 0.0
        %2419 = vmatprep.subr.mxu0 0.0
        %2420 = vmatpush1.msra.mxu0 0.0
        %2421 = vmatprep.subr.mxu0 0.0
        %2422 = vmatpush1.msra.mxu0 0.0
        %2423 = vmatprep.subr.mxu0 0.0
        %2424 = vmatpush1.msra.mxu0 0.0
        %2425 = vmatprep.subr.mxu0 0.0
        %2426 = vmatpush1.msra.mxu0 0.0
        %2427 = vmatprep.subr.mxu0 0.0
        %2428 = vmatpush1.msra.mxu0 0.0
        %2429 = vmatprep.subr.mxu0 0.0
        %2430 = vmatpush1.msra.mxu0 0.0
        %2431 = vmatprep.subr.mxu0 0.0
        %2432 = vmatpush1.msra.mxu0 0.0
        %2433 = vmatprep.subr.mxu0 0.0
        %2434 = vmatpush1.msra.mxu0 0.0
        %2435 = vmatprep.subr.mxu0 0.0
        %2436 = vmatpush1.msra.mxu0 0.0
        %2437 = vmatprep.subr.mxu0 0.0
        %2438 = vmatpush1.msra.mxu0 0.0
        %2439 = vmatprep.subr.mxu0 0.0
        %2440 = vmatpush1.msra.mxu0 0.0
        %2441 = vmatprep.subr.mxu0 0.0
        %2442 = vmatpush1.msra.mxu0 0.0
        %2443 = vmatprep.subr.mxu0 0.0
        %2444 = vmatpush1.msra.mxu0 0.0
        %2445 = vmatprep.subr.mxu0 0.0
        %2446 = vmatpush1.msra.mxu0 0.0
        %2447 = vmatprep.subr.mxu0 0.0
        %2448 = vmatpush1.msra.mxu0 0.0
        %2449 = vmatprep.subr.mxu0 0.0
        %2450 = vmatpush1.msra.mxu0 0.0
        %2451 = vmatprep.subr.mxu0 0.0
        %2452 = vmatpush1.msra.mxu0 0.0
        %2453 = vmatprep.subr.mxu0 0.0
        %2454 = vmatpush1.msra.mxu0 0.0
        %2455 = vmatprep.subr.mxu0 0.0
        %2456 = vmatpush1.msra.mxu0 0.0
        %2457 = vmatprep.subr.mxu0 0.0
        %2458 = vmatpush1.msra.mxu0 0.0
        %2459 = vmatprep.mubr.f32.mxu0 0.0
        %2460 = vmatmul.mubr.f32.gmra.mrb[0].mxu0 %v2384
        %v2461 = vpop.f32.mrb[0].mxu0
        %v2462 = vadd.f32 0.0, %v2461
        %v2463 = vpop.f32.mrb[0].mxu0
        %v2464 = vadd.f32 0.0, %v2463
        %2465 = vmatprep.mubr.f32.mxu0 0.0
        %2466 = vmatmul.mubr.f32.gmra.mrb[0].mxu0 %v2387
        %v2467 = vpop.f32.mrb[0].mxu0
        %v2468 = vadd.f32 0.0, %v2467
        %v2469 = vpop.f32.mrb[0].mxu0
        %v2470 = vadd.f32 0.0, %v2469
        %2471 = vmatprep.mubr.f32.mxu0 0.0
        %2472 = vmatmul.mubr.f32.gmra.mrb[0].mxu0 %v2390
        %v2473 = vpop.f32.mrb[0].mxu0
        %v2474 = vadd.f32 0.0, %v2473
        %v2475 = vpop.f32.mrb[0].mxu0
        %v2476 = vadd.f32 0.0, %v2475
        %2477 = vmatprep.mubr.f32.mxu0 0.0
        %2478 = vmatmul.mubr.f32.gmra.mrb[0].mxu0 %v2393
        %v2479 = vpop.f32.mrb[0].mxu0
        %v2480 = vadd.f32 0.0, %v2479
        %v2481 = vpop.f32.mrb[0].mxu0
        %v2482 = vadd.f32 0.0, %v2481
        %2483 = vdwg.mxu0
        %v2484 = vadd.f32 %v2348, %v2462
        %v2485 = vadd.f32 %v2349, %v2464
        %v2486 = vadd.f32 %v2350, %v2468
        %v2487 = vadd.f32 %v2351, %v2470
        %v2488 = vadd.f32 %v2352, %v2474
        %v2489 = vadd.f32 %v2353, %v2476
        %v2490 = vadd.f32 %v2354, %v2480
        %v2491 = vadd.f32 %v2355, %v2482
        %2492 = vrot.lane.b32.xlu0 %v1435, 111
        %v2493 = vpop.permute.xlu0 %2492
        %2494 = vrot.lane.b32.xlu0 %v1436, 111
        %v2495 = vpop.permute.xlu0 %2494
        %2496 = vrot.lane.b32.xlu0 %v1437, 111
        %v2497 = vpop.permute.xlu0 %2496
        %2498 = vrot.lane.b32.xlu0 %v1438, 111
        %v2499 = vpop.permute.xlu0 %2498
        %v2500 = vsel %vm1300, %v2493, %v2495
        %v2501 = vsel %vm1300, %v2497, %v2499
        %v2508 = vsel %vm1300, %v2495, %v2493
        %v2509 = vsel %vm1300, %v2499, %v2497
        %v2510 = vmul.f32 %v2500, %v1310
        %v2511 = vmul.f32 %v2508, %v1314
        %v2512 = vmul.f32 %v2501, %v1310
        %v2513 = vmul.f32 %v2509, %v1314
        %s2514 = scalar_lea.vmem %s4, 256
        %v2515 = vld [vmem:[%s2514] sm:$0xff]
        %v2516 = vld [vmem:[%s2514 + $0x8] sm:$0xff]
        %v2517 = vld [vmem:[%s2514 + $0x10] sm:$0xff]
        %v2518 = vld [vmem:[%s2514 + $0x18] sm:$0xff]
        %v2520 = vsel %vm453, %v2515, 0
        %v2523 = vsel %vm453, %v2516, 0
        %v2526 = vsel %vm453, %v2517, 0
        %v2529 = vsel %vm453, %v2518, 0
        %2531 = vmatprep.subr.mxu0 %v2511
        %2532 = vmatpush1.msra.mxu0 %v2510
        %2533 = vmatprep.subr.mxu0 %v2513
        %2534 = vmatpush1.msra.mxu0 %v2512
        %2535 = vmatprep.subr.mxu0 0.0
        %2536 = vmatpush1.msra.mxu0 0.0
        %2537 = vmatprep.subr.mxu0 0.0
        %2538 = vmatpush1.msra.mxu0 0.0
        %2539 = vmatprep.subr.mxu0 0.0
        %2540 = vmatpush1.msra.mxu0 0.0
        %2541 = vmatprep.subr.mxu0 0.0
        %2542 = vmatpush1.msra.mxu0 0.0
        %2543 = vmatprep.subr.mxu0 0.0
        %2544 = vmatpush1.msra.mxu0 0.0
        %2545 = vmatprep.subr.mxu0 0.0
        %2546 = vmatpush1.msra.mxu0 0.0
        %2547 = vmatprep.subr.mxu0 0.0
        %2548 = vmatpush1.msra.mxu0 0.0
        %2549 = vmatprep.subr.mxu0 0.0
        %2550 = vmatpush1.msra.mxu0 0.0
        %2551 = vmatprep.subr.mxu0 0.0
        %2552 = vmatpush1.msra.mxu0 0.0
        %2553 = vmatprep.subr.mxu0 0.0
        %2554 = vmatpush1.msra.mxu0 0.0
        %2555 = vmatprep.subr.mxu0 0.0
        %2556 = vmatpush1.msra.mxu0 0.0
        %2557 = vmatprep.subr.mxu0 0.0
        %2558 = vmatpush1.msra.mxu0 0.0
        %2559 = vmatprep.subr.mxu0 0.0
        %2560 = vmatpush1.msra.mxu0 0.0
        %2561 = vmatprep.subr.mxu0 0.0
        %2562 = vmatpush1.msra.mxu0 0.0
        %2563 = vmatprep.subr.mxu0 0.0
        %2564 = vmatpush1.msra.mxu0 0.0
        %2565 = vmatprep.subr.mxu0 0.0
        %2566 = vmatpush1.msra.mxu0 0.0
        %2567 = vmatprep.subr.mxu0 0.0
        %2568 = vmatpush1.msra.mxu0 0.0
        %2569 = vmatprep.subr.mxu0 0.0
        %2570 = vmatpush1.msra.mxu0 0.0
        %2571 = vmatprep.subr.mxu0 0.0
        %2572 = vmatpush1.msra.mxu0 0.0
        %2573 = vmatprep.subr.mxu0 0.0
        %2574 = vmatpush1.msra.mxu0 0.0
        %2575 = vmatprep.subr.mxu0 0.0
        %2576 = vmatpush1.msra.mxu0 0.0
        %2577 = vmatprep.subr.mxu0 0.0
        %2578 = vmatpush1.msra.mxu0 0.0
        %2579 = vmatprep.subr.mxu0 0.0
        %2580 = vmatpush1.msra.mxu0 0.0
        %2581 = vmatprep.subr.mxu0 0.0
        %2582 = vmatpush1.msra.mxu0 0.0
        %2583 = vmatprep.subr.mxu0 0.0
        %2584 = vmatpush1.msra.mxu0 0.0
        %2585 = vmatprep.subr.mxu0 0.0
        %2586 = vmatpush1.msra.mxu0 0.0
        %2587 = vmatprep.subr.mxu0 0.0
        %2588 = vmatpush1.msra.mxu0 0.0
        %2589 = vmatprep.subr.mxu0 0.0
        %2590 = vmatpush1.msra.mxu0 0.0
        %2591 = vmatprep.subr.mxu0 0.0
        %2592 = vmatpush1.msra.mxu0 0.0
        %2593 = vmatprep.subr.mxu0 0.0
        %2594 = vmatpush1.msra.mxu0 0.0
        %2595 = vmatprep.mubr.f32.mxu0 0.0
        %2596 = vmatmul.mubr.f32.gmra.mrb[0].mxu0 %v2520
        %v2597 = vpop.f32.mrb[0].mxu0
        %v2598 = vadd.f32 0.0, %v2597
        %v2599 = vpop.f32.mrb[0].mxu0
        %v2600 = vadd.f32 0.0, %v2599
        %2601 = vmatprep.mubr.f32.mxu0 0.0
        %2602 = vmatmul.mubr.f32.gmra.mrb[0].mxu0 %v2523
        %v2603 = vpop.f32.mrb[0].mxu0
        %v2604 = vadd.f32 0.0, %v2603
        %v2605 = vpop.f32.mrb[0].mxu0
        %v2606 = vadd.f32 0.0, %v2605
        %2607 = vmatprep.mubr.f32.mxu0 0.0
        %2608 = vmatmul.mubr.f32.gmra.mrb[0].mxu0 %v2526
        %v2609 = vpop.f32.mrb[0].mxu0
        %v2610 = vadd.f32 0.0, %v2609
        %v2611 = vpop.f32.mrb[0].mxu0
        %v2612 = vadd.f32 0.0, %v2611
        %2613 = vmatprep.mubr.f32.mxu0 0.0
        %2614 = vmatmul.mubr.f32.gmra.mrb[0].mxu0 %v2529
        %v2615 = vpop.f32.mrb[0].mxu0
        %v2616 = vadd.f32 0.0, %v2615
        %v2617 = vpop.f32.mrb[0].mxu0
        %v2618 = vadd.f32 0.0, %v2617
        %2619 = vdwg.mxu0
        %v2620 = vadd.f32 %v2484, %v2598
        %v2621 = vadd.f32 %v2485, %v2600
        %v2622 = vadd.f32 %v2486, %v2604
        %v2623 = vadd.f32 %v2487, %v2606
        %v2624 = vadd.f32 %v2488, %v2610
        %v2625 = vadd.f32 %v2489, %v2612
        %v2626 = vadd.f32 %v2490, %v2616
        %v2627 = vadd.f32 %v2491, %v2618
        %v2628 = vld [vmem:[%s5] sm:$0xff]
        %v2629 = vld [vmem:[%s5 + $0x8] sm:$0xff]
        %v2630 = vld [vmem:[%s5 + $0x10] sm:$0xff]
        %v2631 = vld [vmem:[%s5 + $0x18] sm:$0xff]
        %2633 = vset.pattern.permute.xlu0 0
        %2634 = vperm.xlu0 %2633, %v2628
        %v2635 = vpop.permute.xlu0 %2634
        %2638 = vset.pattern.permute.xlu0 0
        %2639 = vperm.xlu0 %2638, %v2629
        %v2640 = vpop.permute.xlu0 %2639
        %2643 = vset.pattern.permute.xlu0 0
        %2644 = vperm.xlu0 %2643, %v2630
        %v2645 = vpop.permute.xlu0 %2644
        %2648 = vset.pattern.permute.xlu0 0
        %2649 = vperm.xlu0 %2648, %v2631
        %v2650 = vpop.permute.xlu0 %2649
        %v2652 = vadd.f32 %v2620, %v2635
        %v2653 = vadd.f32 %v2621, %v2635
        %v2654 = vadd.f32 %v2622, %v2640
        %v2655 = vadd.f32 %v2623, %v2640
        %v2656 = vadd.f32 %v2624, %v2645
        %v2657 = vadd.f32 %v2625, %v2645
        %v2658 = vadd.f32 %v2626, %v2650
        %v2659 = vadd.f32 %v2627, %v2650
        %s2660 = sld [smem:[#allocation3 + $0x1]]
        %vm2661 = vcmp.ge.f32.partialorder %v2652, 0.0
        %vm2662 = vcmp.ge.f32.partialorder %v2653, 0.0
        %vm2663 = vcmp.ge.f32.partialorder %v2654, 0.0
        %vm2664 = vcmp.ge.f32.partialorder %v2655, 0.0
        %vm2665 = vcmp.ge.f32.partialorder %v2656, 0.0
        %vm2666 = vcmp.ge.f32.partialorder %v2657, 0.0
        %vm2667 = vcmp.ge.f32.partialorder %v2658, 0.0
        %vm2668 = vcmp.ge.f32.partialorder %v2659, 0.0
        %v2669 = vstv %s2660
        %v2670 = vmul.f32 %v2669, %v2652
        %v2671 = vmul.f32 %v2669, %v2653
        %v2672 = vmul.f32 %v2669, %v2654
        %v2673 = vmul.f32 %v2669, %v2655
        %v2674 = vmul.f32 %v2669, %v2656
        %v2675 = vmul.f32 %v2669, %v2657
        %v2676 = vmul.f32 %v2669, %v2658
        %v2677 = vmul.f32 %v2669, %v2659
        %v2678 = vsel %vm2661, %v2652, %v2670
        %v2679 = vsel %vm2662, %v2653, %v2671
        %v2680 = vsel %vm2663, %v2654, %v2672
        %v2681 = vsel %vm2664, %v2655, %v2673
        %v2682 = vsel %vm2665, %v2656, %v2674
        %v2683 = vsel %vm2666, %v2657, %v2675
        %v2684 = vsel %vm2667, %v2658, %v2676
        %v2685 = vsel %vm2668, %v2659, %v2677
        %2690 = vrot.lane.b32.xlu0 %v2679, 17
        %v2691 = vpop.permute.xlu0 %2690
        %2692 = vrot.lane.b32.xlu0 %v2681, 17
        %v2693 = vpop.permute.xlu0 %2692
        %2694 = vrot.lane.b32.xlu0 %v2683, 17
        %v2695 = vpop.permute.xlu0 %2694
        %2696 = vrot.lane.b32.xlu0 %v2685, 17
        %v2697 = vpop.permute.xlu0 %2696
        %2706 = vrot.lane.b32.xlu0 %v2678, 17
        %v2707 = vpop.permute.xlu0 %2706
        %2708 = vrot.lane.b32.xlu0 %v2680, 17
        %v2709 = vpop.permute.xlu0 %2708
        %2710 = vrot.lane.b32.xlu0 %v2682, 17
        %v2711 = vpop.permute.xlu0 %2710
        %2712 = vrot.lane.b32.xlu0 %v2684, 17
        %v2713 = vpop.permute.xlu0 %2712
        %v2714 = vsel %vm428, %v2707, %v2691
        %v2715 = vsel %vm428, %v2709, %v2693
        %v2716 = vsel %vm428, %v2711, %v2695
        %v2717 = vsel %vm428, %v2713, %v2697
        %v2726 = vsel %vm428, %v2691, %v2707
        %v2727 = vsel %vm428, %v2693, %v2709
        %v2728 = vsel %vm428, %v2695, %v2711
        %v2729 = vsel %vm428, %v2697, %v2713
        %v2730 = vmul.f32 %v2726, %v437
        %v2731 = vmul.f32 %v2714, %v441
        %v2732 = vmul.f32 %v2727, %v437
        %v2733 = vmul.f32 %v2715, %v441
        %v2734 = vmul.f32 %v2728, %v437
        %v2735 = vmul.f32 %v2716, %v441
        %v2736 = vmul.f32 %v2729, %v437
        %v2737 = vmul.f32 %v2717, %v441
        %v2738 = vld [vmem:[%s6] sm:$0xff]
        %v2739 = vld [vmem:[%s6 + $0x8] sm:$0xff]
        %2740 = vrot.lane.b32.xlu0 %v2679, 16
        %v2741 = vpop.permute.xlu0 %2740
        %2742 = vrot.lane.b32.xlu0 %v2681, 16
        %v2743 = vpop.permute.xlu0 %2742
        %2744 = vrot.lane.b32.xlu0 %v2683, 16
        %v2745 = vpop.permute.xlu0 %2744
        %2746 = vrot.lane.b32.xlu0 %v2685, 16
        %v2747 = vpop.permute.xlu0 %2746
        %2752 = vrot.lane.b32.xlu0 %v2678, 16
        %v2753 = vpop.permute.xlu0 %2752
        %2754 = vrot.lane.b32.xlu0 %v2680, 16
        %v2755 = vpop.permute.xlu0 %2754
        %2756 = vrot.lane.b32.xlu0 %v2682, 16
        %v2757 = vpop.permute.xlu0 %2756
        %2758 = vrot.lane.b32.xlu0 %v2684, 16
        %v2759 = vpop.permute.xlu0 %2758
        %v2760 = vsel %vm453, %v2753, %v2741
        %v2761 = vsel %vm453, %v2755, %v2743
        %v2762 = vsel %vm453, %v2757, %v2745
        %v2763 = vsel %vm453, %v2759, %v2747
        %v2772 = vsel %vm453, %v2741, %v2753
        %v2773 = vsel %vm453, %v2743, %v2755
        %v2774 = vsel %vm453, %v2745, %v2757
        %v2775 = vsel %vm453, %v2747, %v2759
        %v2776 = vmul.f32 %v2772, %v462
        %v2777 = vmul.f32 %v2760, %v466
        %v2778 = vmul.f32 %v2773, %v462
        %v2779 = vmul.f32 %v2761, %v466
        %v2780 = vmul.f32 %v2774, %v462
        %v2781 = vmul.f32 %v2762, %v466
        %v2782 = vmul.f32 %v2775, %v462
        %v2783 = vmul.f32 %v2763, %v466
        %s2784 = scalar_lea.vmem %s6, 16
        %v2785 = vld [vmem:[%s2784] sm:$0xff]
        %v2786 = vld [vmem:[%s2784 + $0x8] sm:$0xff]
        %vm2787 = vcmask 261120
        %v2789 = vsel %vm2787, %v2785, 0
        %v2792 = vsel %vm2787, %v2786, 0
        %2794 = vmatprep.subr.mxu0 %v2777
        %2795 = vmatpush1.msra.mxu0 %v2776
        %2796 = vmatprep.subr.mxu0 %v2779
        %2797 = vmatpush1.msra.mxu0 %v2778
        %2798 = vmatprep.subr.mxu0 %v2781
        %2799 = vmatpush1.msra.mxu0 %v2780
        %2800 = vmatprep.subr.mxu0 %v2783
        %2801 = vmatpush1.msra.mxu0 %v2782
        %2802 = vmatprep.subr.mxu0 0.0
        %2803 = vmatpush1.msra.mxu0 0.0
        %2804 = vmatprep.subr.mxu0 0.0
        %2805 = vmatpush1.msra.mxu0 0.0
        %2806 = vmatprep.subr.mxu0 0.0
        %2807 = vmatpush1.msra.mxu0 0.0
        %2808 = vmatprep.subr.mxu0 0.0
        %2809 = vmatpush1.msra.mxu0 0.0
        %2810 = vmatprep.subr.mxu0 0.0
        %2811 = vmatpush1.msra.mxu0 0.0
        %2812 = vmatprep.subr.mxu0 0.0
        %2813 = vmatpush1.msra.mxu0 0.0
        %2814 = vmatprep.subr.mxu0 0.0
        %2815 = vmatpush1.msra.mxu0 0.0
        %2816 = vmatprep.subr.mxu0 0.0
        %2817 = vmatpush1.msra.mxu0 0.0
        %2818 = vmatprep.subr.mxu0 0.0
        %2819 = vmatpush1.msra.mxu0 0.0
        %2820 = vmatprep.subr.mxu0 0.0
        %2821 = vmatpush1.msra.mxu0 0.0
        %2822 = vmatprep.subr.mxu0 0.0
        %2823 = vmatpush1.msra.mxu0 0.0
        %2824 = vmatprep.subr.mxu0 0.0
        %2825 = vmatpush1.msra.mxu0 0.0
        %2826 = vmatprep.subr.mxu0 0.0
        %2827 = vmatpush1.msra.mxu0 0.0
        %2828 = vmatprep.subr.mxu0 0.0
        %2829 = vmatpush1.msra.mxu0 0.0
        %2830 = vmatprep.subr.mxu0 0.0
        %2831 = vmatpush1.msra.mxu0 0.0
        %2832 = vmatprep.subr.mxu0 0.0
        %2833 = vmatpush1.msra.mxu0 0.0
        %2834 = vmatprep.subr.mxu0 0.0
        %2835 = vmatpush1.msra.mxu0 0.0
        %2836 = vmatprep.subr.mxu0 0.0
        %2837 = vmatpush1.msra.mxu0 0.0
        %2838 = vmatprep.subr.mxu0 0.0
        %2839 = vmatpush1.msra.mxu0 0.0
        %2840 = vmatprep.subr.mxu0 0.0
        %2841 = vmatpush1.msra.mxu0 0.0
        %2842 = vmatprep.subr.mxu0 0.0
        %2843 = vmatpush1.msra.mxu0 0.0
        %2844 = vmatprep.subr.mxu0 0.0
        %2845 = vmatpush1.msra.mxu0 0.0
        %2846 = vmatprep.subr.mxu0 0.0
        %2847 = vmatpush1.msra.mxu0 0.0
        %2848 = vmatprep.subr.mxu0 0.0
        %2849 = vmatpush1.msra.mxu0 0.0
        %2850 = vmatprep.subr.mxu0 0.0
        %2851 = vmatpush1.msra.mxu0 0.0
        %2852 = vmatprep.subr.mxu0 0.0
        %2853 = vmatpush1.msra.mxu0 0.0
        %2854 = vmatprep.subr.mxu0 0.0
        %2855 = vmatpush1.msra.mxu0 0.0
        %2856 = vmatprep.subr.mxu0 0.0
        %2857 = vmatpush1.msra.mxu0 0.0
        %2858 = vmatprep.mubr.f32.mxu0 0.0
        %2859 = vmatmul.mubr.f32.gmra.mrb[0].mxu0 %v2789
        %v2860 = vpop.f32.mrb[0].mxu0
        %v2861 = vadd.f32 0.0, %v2860
        %v2862 = vpop.f32.mrb[0].mxu0
        %v2863 = vadd.f32 0.0, %v2862
        %2864 = vmatprep.mubr.f32.mxu0 0.0
        %2865 = vmatmul.mubr.f32.gmra.mrb[0].mxu0 %v2792
        %v2866 = vpop.f32.mrb[0].mxu0
        %v2867 = vadd.f32 0.0, %v2866
        %v2868 = vpop.f32.mrb[0].mxu0
        %v2869 = vadd.f32 0.0, %v2868
        %2870 = vdwg.mxu0
        %v2872 = vsel %vm2787, %v2738, 0
        %v2875 = vsel %vm2787, %v2739, 0
        %2877 = vmatprep.subr.mxu0 %v2731
        %2878 = vmatpush1.msra.mxu0 %v2730
        %2879 = vmatprep.subr.mxu0 %v2733
        %2880 = vmatpush1.msra.mxu0 %v2732
        %2881 = vmatprep.subr.mxu0 %v2735
        %2882 = vmatpush1.msra.mxu0 %v2734
        %2883 = vmatprep.subr.mxu0 %v2737
        %2884 = vmatpush1.msra.mxu0 %v2736
        %2885 = vmatprep.subr.mxu0 0.0
        %2886 = vmatpush1.msra.mxu0 0.0
        %2887 = vmatprep.subr.mxu0 0.0
        %2888 = vmatpush1.msra.mxu0 0.0
        %2889 = vmatprep.subr.mxu0 0.0
        %2890 = vmatpush1.msra.mxu0 0.0
        %2891 = vmatprep.subr.mxu0 0.0
        %2892 = vmatpush1.msra.mxu0 0.0
        %2893 = vmatprep.subr.mxu0 0.0
        %2894 = vmatpush1.msra.mxu0 0.0
        %2895 = vmatprep.subr.mxu0 0.0
        %2896 = vmatpush1.msra.mxu0 0.0
        %2897 = vmatprep.subr.mxu0 0.0
        %2898 = vmatpush1.msra.mxu0 0.0
        %2899 = vmatprep.subr.mxu0 0.0
        %2900 = vmatpush1.msra.mxu0 0.0
        %2901 = vmatprep.subr.mxu0 0.0
        %2902 = vmatpush1.msra.mxu0 0.0
        %2903 = vmatprep.subr.mxu0 0.0
        %2904 = vmatpush1.msra.mxu0 0.0
        %2905 = vmatprep.subr.mxu0 0.0
        %2906 = vmatpush1.msra.mxu0 0.0
        %2907 = vmatprep.subr.mxu0 0.0
        %2908 = vmatpush1.msra.mxu0 0.0
        %2909 = vmatprep.subr.mxu0 0.0
        %2910 = vmatpush1.msra.mxu0 0.0
        %2911 = vmatprep.subr.mxu0 0.0
        %2912 = vmatpush1.msra.mxu0 0.0
        %2913 = vmatprep.subr.mxu0 0.0
        %2914 = vmatpush1.msra.mxu0 0.0
        %2915 = vmatprep.subr.mxu0 0.0
        %2916 = vmatpush1.msra.mxu0 0.0
        %2917 = vmatprep.subr.mxu0 0.0
        %2918 = vmatpush1.msra.mxu0 0.0
        %2919 = vmatprep.subr.mxu0 0.0
        %2920 = vmatpush1.msra.mxu0 0.0
        %2921 = vmatprep.subr.mxu0 0.0
        %2922 = vmatpush1.msra.mxu0 0.0
        %2923 = vmatprep.subr.mxu0 0.0
        %2924 = vmatpush1.msra.mxu0 0.0
        %2925 = vmatprep.subr.mxu0 0.0
        %2926 = vmatpush1.msra.mxu0 0.0
        %2927 = vmatprep.subr.mxu0 0.0
        %2928 = vmatpush1.msra.mxu0 0.0
        %2929 = vmatprep.subr.mxu0 0.0
        %2930 = vmatpush1.msra.mxu0 0.0
        %2931 = vmatprep.subr.mxu0 0.0
        %2932 = vmatpush1.msra.mxu0 0.0
        %2933 = vmatprep.subr.mxu0 0.0
        %2934 = vmatpush1.msra.mxu0 0.0
        %2935 = vmatprep.subr.mxu0 0.0
        %2936 = vmatpush1.msra.mxu0 0.0
        %2937 = vmatprep.subr.mxu0 0.0
        %2938 = vmatpush1.msra.mxu0 0.0
        %2939 = vmatprep.subr.mxu0 0.0
        %2940 = vmatpush1.msra.mxu0 0.0
        %2941 = vmatprep.mubr.f32.mxu0 0.0
        %2942 = vmatmul.mubr.f32.gmra.mrb[0].mxu0 %v2872
        %v2943 = vpop.f32.mrb[0].mxu0
        %v2944 = vadd.f32 %v2861, %v2943
        %v2945 = vpop.f32.mrb[0].mxu0
        %v2946 = vadd.f32 %v2863, %v2945
        %2947 = vmatprep.mubr.f32.mxu0 0.0
        %2948 = vmatmul.mubr.f32.gmra.mrb[0].mxu0 %v2875
        %v2949 = vpop.f32.mrb[0].mxu0
        %v2950 = vadd.f32 %v2867, %v2949
        %v2951 = vpop.f32.mrb[0].mxu0
        %v2952 = vadd.f32 %v2869, %v2951
        %2953 = vdwg.mxu0
        %2954 = vrot.lane.b32.xlu0 %v2679, 15
        %v2955 = vpop.permute.xlu0 %2954
        %2956 = vrot.lane.b32.xlu0 %v2681, 15
        %v2957 = vpop.permute.xlu0 %2956
        %2958 = vrot.lane.b32.xlu0 %v2683, 15
        %v2959 = vpop.permute.xlu0 %2958
        %2960 = vrot.lane.b32.xlu0 %v2685, 15
        %v2961 = vpop.permute.xlu0 %2960
        %2966 = vrot.lane.b32.xlu0 %v2678, 15
        %v2967 = vpop.permute.xlu0 %2966
        %2968 = vrot.lane.b32.xlu0 %v2680, 15
        %v2969 = vpop.permute.xlu0 %2968
        %2970 = vrot.lane.b32.xlu0 %v2682, 15
        %v2971 = vpop.permute.xlu0 %2970
        %2972 = vrot.lane.b32.xlu0 %v2684, 15
        %v2973 = vpop.permute.xlu0 %2972
        %v2974 = vsel %vm646, %v2967, %v2955
        %v2975 = vsel %vm646, %v2969, %v2957
        %v2976 = vsel %vm646, %v2971, %v2959
        %v2977 = vsel %vm646, %v2973, %v2961
        %v2986 = vsel %vm646, %v2955, %v2967
        %v2987 = vsel %vm646, %v2957, %v2969
        %v2988 = vsel %vm646, %v2959, %v2971
        %v2989 = vsel %vm646, %v2961, %v2973
        %v2990 = vmul.f32 %v2986, %v655
        %v2991 = vmul.f32 %v2974, %v659
        %v2992 = vmul.f32 %v2987, %v655
        %v2993 = vmul.f32 %v2975, %v659
        %v2994 = vmul.f32 %v2988, %v655
        %v2995 = vmul.f32 %v2976, %v659
        %v2996 = vmul.f32 %v2989, %v655
        %v2997 = vmul.f32 %v2977, %v659
        %s2998 = scalar_lea.vmem %s6, 32
        %v2999 = vld [vmem:[%s2998] sm:$0xff]
        %v3000 = vld [vmem:[%s2998 + $0x8] sm:$0xff]
        %v3002 = vsel %vm2787, %v2999, 0
        %v3005 = vsel %vm2787, %v3000, 0
        %3007 = vmatprep.subr.mxu0 %v2991
        %3008 = vmatpush1.msra.mxu0 %v2990
        %3009 = vmatprep.subr.mxu0 %v2993
        %3010 = vmatpush1.msra.mxu0 %v2992
        %3011 = vmatprep.subr.mxu0 %v2995
        %3012 = vmatpush1.msra.mxu0 %v2994
        %3013 = vmatprep.subr.mxu0 %v2997
        %3014 = vmatpush1.msra.mxu0 %v2996
        %3015 = vmatprep.subr.mxu0 0.0
        %3016 = vmatpush1.msra.mxu0 0.0
        %3017 = vmatprep.subr.mxu0 0.0
        %3018 = vmatpush1.msra.mxu0 0.0
        %3019 = vmatprep.subr.mxu0 0.0
        %3020 = vmatpush1.msra.mxu0 0.0
        %3021 = vmatprep.subr.mxu0 0.0
        %3022 = vmatpush1.msra.mxu0 0.0
        %3023 = vmatprep.subr.mxu0 0.0
        %3024 = vmatpush1.msra.mxu0 0.0
        %3025 = vmatprep.subr.mxu0 0.0
        %3026 = vmatpush1.msra.mxu0 0.0
        %3027 = vmatprep.subr.mxu0 0.0
        %3028 = vmatpush1.msra.mxu0 0.0
        %3029 = vmatprep.subr.mxu0 0.0
        %3030 = vmatpush1.msra.mxu0 0.0
        %3031 = vmatprep.subr.mxu0 0.0
        %3032 = vmatpush1.msra.mxu0 0.0
        %3033 = vmatprep.subr.mxu0 0.0
        %3034 = vmatpush1.msra.mxu0 0.0
        %3035 = vmatprep.subr.mxu0 0.0
        %3036 = vmatpush1.msra.mxu0 0.0
        %3037 = vmatprep.subr.mxu0 0.0
        %3038 = vmatpush1.msra.mxu0 0.0
        %3039 = vmatprep.subr.mxu0 0.0
        %3040 = vmatpush1.msra.mxu0 0.0
        %3041 = vmatprep.subr.mxu0 0.0
        %3042 = vmatpush1.msra.mxu0 0.0
        %3043 = vmatprep.subr.mxu0 0.0
        %3044 = vmatpush1.msra.mxu0 0.0
        %3045 = vmatprep.subr.mxu0 0.0
        %3046 = vmatpush1.msra.mxu0 0.0
        %3047 = vmatprep.subr.mxu0 0.0
        %3048 = vmatpush1.msra.mxu0 0.0
        %3049 = vmatprep.subr.mxu0 0.0
        %3050 = vmatpush1.msra.mxu0 0.0
        %3051 = vmatprep.subr.mxu0 0.0
        %3052 = vmatpush1.msra.mxu0 0.0
        %3053 = vmatprep.subr.mxu0 0.0
        %3054 = vmatpush1.msra.mxu0 0.0
        %3055 = vmatprep.subr.mxu0 0.0
        %3056 = vmatpush1.msra.mxu0 0.0
        %3057 = vmatprep.subr.mxu0 0.0
        %3058 = vmatpush1.msra.mxu0 0.0
        %3059 = vmatprep.subr.mxu0 0.0
        %3060 = vmatpush1.msra.mxu0 0.0
        %3061 = vmatprep.subr.mxu0 0.0
        %3062 = vmatpush1.msra.mxu0 0.0
        %3063 = vmatprep.subr.mxu0 0.0
        %3064 = vmatpush1.msra.mxu0 0.0
        %3065 = vmatprep.subr.mxu0 0.0
        %3066 = vmatpush1.msra.mxu0 0.0
        %3067 = vmatprep.subr.mxu0 0.0
        %3068 = vmatpush1.msra.mxu0 0.0
        %3069 = vmatprep.subr.mxu0 0.0
        %3070 = vmatpush1.msra.mxu0 0.0
        %3071 = vmatprep.mubr.f32.mxu0 0.0
        %3072 = vmatmul.mubr.f32.gmra.mrb[0].mxu0 %v3002
        %v3073 = vpop.f32.mrb[0].mxu0
        %v3074 = vadd.f32 0.0, %v3073
        %v3075 = vpop.f32.mrb[0].mxu0
        %v3076 = vadd.f32 0.0, %v3075
        %3077 = vmatprep.mubr.f32.mxu0 0.0
        %3078 = vmatmul.mubr.f32.gmra.mrb[0].mxu0 %v3005
        %v3079 = vpop.f32.mrb[0].mxu0
        %v3080 = vadd.f32 0.0, %v3079
        %v3081 = vpop.f32.mrb[0].mxu0
        %v3082 = vadd.f32 0.0, %v3081
        %3083 = vdwg.mxu0
        %v3084 = vadd.f32 %v2944, %v3074
        %v3085 = vadd.f32 %v2946, %v3076
        %v3086 = vadd.f32 %v2950, %v3080
        %v3087 = vadd.f32 %v2952, %v3082
        %3088 = vrot.lane.b32.xlu0 %v2679, 1
        %v3089 = vpop.permute.xlu0 %3088
        %3090 = vrot.lane.b32.xlu0 %v2681, 1
        %v3091 = vpop.permute.xlu0 %3090
        %3092 = vrot.lane.b32.xlu0 %v2683, 1
        %v3093 = vpop.permute.xlu0 %3092
        %3094 = vrot.lane.b32.xlu0 %v2685, 1
        %v3095 = vpop.permute.xlu0 %3094
        %3100 = vrot.lane.b32.xlu0 %v2678, 1
        %v3101 = vpop.permute.xlu0 %3100
        %3102 = vrot.lane.b32.xlu0 %v2680, 1
        %v3103 = vpop.permute.xlu0 %3102
        %3104 = vrot.lane.b32.xlu0 %v2682, 1
        %v3105 = vpop.permute.xlu0 %3104
        %3106 = vrot.lane.b32.xlu0 %v2684, 1
        %v3107 = vpop.permute.xlu0 %3106
        %v3108 = vsel %vm759, %v3101, %v3089
        %v3109 = vsel %vm759, %v3103, %v3091
        %v3110 = vsel %vm759, %v3105, %v3093
        %v3111 = vsel %vm759, %v3107, %v3095
        %v3120 = vsel %vm759, %v3089, %v3101
        %v3121 = vsel %vm759, %v3091, %v3103
        %v3122 = vsel %vm759, %v3093, %v3105
        %v3123 = vsel %vm759, %v3095, %v3107
        %v3124 = vmul.f32 %v3120, %v768
        %v3125 = vmul.f32 %v3108, %v772
        %v3126 = vmul.f32 %v3121, %v768
        %v3127 = vmul.f32 %v3109, %v772
        %v3128 = vmul.f32 %v3122, %v768
        %v3129 = vmul.f32 %v3110, %v772
        %v3130 = vmul.f32 %v3123, %v768
        %v3131 = vmul.f32 %v3111, %v772
        %s3132 = scalar_lea.vmem %s6, 48
        %v3133 = vld [vmem:[%s3132] sm:$0xff]
        %v3134 = vld [vmem:[%s3132 + $0x8] sm:$0xff]
        %v3136 = vsel %vm2787, %v3133, 0
        %v3139 = vsel %vm2787, %v3134, 0
        %3141 = vmatprep.subr.mxu0 %v3125
        %3142 = vmatpush1.msra.mxu0 %v3124
        %3143 = vmatprep.subr.mxu0 %v3127
        %3144 = vmatpush1.msra.mxu0 %v3126
        %3145 = vmatprep.subr.mxu0 %v3129
        %3146 = vmatpush1.msra.mxu0 %v3128
        %3147 = vmatprep.subr.mxu0 %v3131
        %3148 = vmatpush1.msra.mxu0 %v3130
        %3149 = vmatprep.subr.mxu0 0.0
        %3150 = vmatpush1.msra.mxu0 0.0
        %3151 = vmatprep.subr.mxu0 0.0
        %3152 = vmatpush1.msra.mxu0 0.0
        %3153 = vmatprep.subr.mxu0 0.0
        %3154 = vmatpush1.msra.mxu0 0.0
        %3155 = vmatprep.subr.mxu0 0.0
        %3156 = vmatpush1.msra.mxu0 0.0
        %3157 = vmatprep.subr.mxu0 0.0
        %3158 = vmatpush1.msra.mxu0 0.0
        %3159 = vmatprep.subr.mxu0 0.0
        %3160 = vmatpush1.msra.mxu0 0.0
        %3161 = vmatprep.subr.mxu0 0.0
        %3162 = vmatpush1.msra.mxu0 0.0
        %3163 = vmatprep.subr.mxu0 0.0
        %3164 = vmatpush1.msra.mxu0 0.0
        %3165 = vmatprep.subr.mxu0 0.0
        %3166 = vmatpush1.msra.mxu0 0.0
        %3167 = vmatprep.subr.mxu0 0.0
        %3168 = vmatpush1.msra.mxu0 0.0
        %3169 = vmatprep.subr.mxu0 0.0
        %3170 = vmatpush1.msra.mxu0 0.0
        %3171 = vmatprep.subr.mxu0 0.0
        %3172 = vmatpush1.msra.mxu0 0.0
        %3173 = vmatprep.subr.mxu0 0.0
        %3174 = vmatpush1.msra.mxu0 0.0
        %3175 = vmatprep.subr.mxu0 0.0
        %3176 = vmatpush1.msra.mxu0 0.0
        %3177 = vmatprep.subr.mxu0 0.0
        %3178 = vmatpush1.msra.mxu0 0.0
        %3179 = vmatprep.subr.mxu0 0.0
        %3180 = vmatpush1.msra.mxu0 0.0
        %3181 = vmatprep.subr.mxu0 0.0
        %3182 = vmatpush1.msra.mxu0 0.0
        %3183 = vmatprep.subr.mxu0 0.0
        %3184 = vmatpush1.msra.mxu0 0.0
        %3185 = vmatprep.subr.mxu0 0.0
        %3186 = vmatpush1.msra.mxu0 0.0
        %3187 = vmatprep.subr.mxu0 0.0
        %3188 = vmatpush1.msra.mxu0 0.0
        %3189 = vmatprep.subr.mxu0 0.0
        %3190 = vmatpush1.msra.mxu0 0.0
        %3191 = vmatprep.subr.mxu0 0.0
        %3192 = vmatpush1.msra.mxu0 0.0
        %3193 = vmatprep.subr.mxu0 0.0
        %3194 = vmatpush1.msra.mxu0 0.0
        %3195 = vmatprep.subr.mxu0 0.0
        %3196 = vmatpush1.msra.mxu0 0.0
        %3197 = vmatprep.subr.mxu0 0.0
        %3198 = vmatpush1.msra.mxu0 0.0
        %3199 = vmatprep.subr.mxu0 0.0
        %3200 = vmatpush1.msra.mxu0 0.0
        %3201 = vmatprep.subr.mxu0 0.0
        %3202 = vmatpush1.msra.mxu0 0.0
        %3203 = vmatprep.subr.mxu0 0.0
        %3204 = vmatpush1.msra.mxu0 0.0
        %3205 = vmatprep.mubr.f32.mxu0 0.0
        %3206 = vmatmul.mubr.f32.gmra.mrb[0].mxu0 %v3136
        %v3207 = vpop.f32.mrb[0].mxu0
        %v3208 = vadd.f32 0.0, %v3207
        %v3209 = vpop.f32.mrb[0].mxu0
        %v3210 = vadd.f32 0.0, %v3209
        %3211 = vmatprep.mubr.f32.mxu0 0.0
        %3212 = vmatmul.mubr.f32.gmra.mrb[0].mxu0 %v3139
        %v3213 = vpop.f32.mrb[0].mxu0
        %v3214 = vadd.f32 0.0, %v3213
        %v3215 = vpop.f32.mrb[0].mxu0
        %v3216 = vadd.f32 0.0, %v3215
        %3217 = vdwg.mxu0
        %v3218 = vadd.f32 %v3084, %v3208
        %v3219 = vadd.f32 %v3085, %v3210
        %v3220 = vadd.f32 %v3086, %v3214
        %v3221 = vadd.f32 %v3087, %v3216
        %s3222 = scalar_lea.vmem %s6, 64
        %v3223 = vld [vmem:[%s3222] sm:$0xff]
        %v3224 = vld [vmem:[%s3222 + $0x8] sm:$0xff]
        %v3226 = vsel %vm2787, %v3223, 0
        %v3229 = vsel %vm2787, %v3224, 0
        %3231 = vmatprep.subr.mxu0 %v2679
        %3232 = vmatpush1.msra.mxu0 %v2678
        %3233 = vmatprep.subr.mxu0 %v2681
        %3234 = vmatpush1.msra.mxu0 %v2680
        %3235 = vmatprep.subr.mxu0 %v2683
        %3236 = vmatpush1.msra.mxu0 %v2682
        %3237 = vmatprep.subr.mxu0 %v2685
        %3238 = vmatpush1.msra.mxu0 %v2684
        %3239 = vmatprep.subr.mxu0 0.0
        %3240 = vmatpush1.msra.mxu0 0.0
        %3241 = vmatprep.subr.mxu0 0.0
        %3242 = vmatpush1.msra.mxu0 0.0
        %3243 = vmatprep.subr.mxu0 0.0
        %3244 = vmatpush1.msra.mxu0 0.0
        %3245 = vmatprep.subr.mxu0 0.0
        %3246 = vmatpush1.msra.mxu0 0.0
        %3247 = vmatprep.subr.mxu0 0.0
        %3248 = vmatpush1.msra.mxu0 0.0
        %3249 = vmatprep.subr.mxu0 0.0
        %3250 = vmatpush1.msra.mxu0 0.0
        %3251 = vmatprep.subr.mxu0 0.0
        %3252 = vmatpush1.msra.mxu0 0.0
        %3253 = vmatprep.subr.mxu0 0.0
        %3254 = vmatpush1.msra.mxu0 0.0
        %3255 = vmatprep.subr.mxu0 0.0
        %3256 = vmatpush1.msra.mxu0 0.0
        %3257 = vmatprep.subr.mxu0 0.0
        %3258 = vmatpush1.msra.mxu0 0.0
        %3259 = vmatprep.subr.mxu0 0.0
        %3260 = vmatpush1.msra.mxu0 0.0
        %3261 = vmatprep.subr.mxu0 0.0
        %3262 = vmatpush1.msra.mxu0 0.0
        %3263 = vmatprep.subr.mxu0 0.0
        %3264 = vmatpush1.msra.mxu0 0.0
        %3265 = vmatprep.subr.mxu0 0.0
        %3266 = vmatpush1.msra.mxu0 0.0
        %3267 = vmatprep.subr.mxu0 0.0
        %3268 = vmatpush1.msra.mxu0 0.0
        %3269 = vmatprep.subr.mxu0 0.0
        %3270 = vmatpush1.msra.mxu0 0.0
        %3271 = vmatprep.subr.mxu0 0.0
        %3272 = vmatpush1.msra.mxu0 0.0
        %3273 = vmatprep.subr.mxu0 0.0
        %3274 = vmatpush1.msra.mxu0 0.0
        %3275 = vmatprep.subr.mxu0 0.0
        %3276 = vmatpush1.msra.mxu0 0.0
        %3277 = vmatprep.subr.mxu0 0.0
        %3278 = vmatpush1.msra.mxu0 0.0
        %3279 = vmatprep.subr.mxu0 0.0
        %3280 = vmatpush1.msra.mxu0 0.0
        %3281 = vmatprep.subr.mxu0 0.0
        %3282 = vmatpush1.msra.mxu0 0.0
        %3283 = vmatprep.subr.mxu0 0.0
        %3284 = vmatpush1.msra.mxu0 0.0
        %3285 = vmatprep.subr.mxu0 0.0
        %3286 = vmatpush1.msra.mxu0 0.0
        %3287 = vmatprep.subr.mxu0 0.0
        %3288 = vmatpush1.msra.mxu0 0.0
        %3289 = vmatprep.subr.mxu0 0.0
        %3290 = vmatpush1.msra.mxu0 0.0
        %3291 = vmatprep.subr.mxu0 0.0
        %3292 = vmatpush1.msra.mxu0 0.0
        %3293 = vmatprep.subr.mxu0 0.0
        %3294 = vmatpush1.msra.mxu0 0.0
        %3295 = vmatprep.mubr.f32.mxu0 0.0
        %3296 = vmatmul.mubr.f32.gmra.mrb[0].mxu0 %v3226
        %v3297 = vpop.f32.mrb[0].mxu0
        %v3298 = vadd.f32 0.0, %v3297
        %v3299 = vpop.f32.mrb[0].mxu0
        %v3300 = vadd.f32 0.0, %v3299
        %3301 = vmatprep.mubr.f32.mxu0 0.0
        %3302 = vmatmul.mubr.f32.gmra.mrb[0].mxu0 %v3229
        %v3303 = vpop.f32.mrb[0].mxu0
        %v3304 = vadd.f32 0.0, %v3303
        %v3305 = vpop.f32.mrb[0].mxu0
        %v3306 = vadd.f32 0.0, %v3305
        %3307 = vdwg.mxu0
        %v3308 = vadd.f32 %v3218, %v3298
        %v3309 = vadd.f32 %v3219, %v3300
        %v3310 = vadd.f32 %v3220, %v3304
        %v3311 = vadd.f32 %v3221, %v3306
        %3312 = vrot.lane.b32.xlu0 %v2678, 127
        %v3313 = vpop.permute.xlu0 %3312
        %3314 = vrot.lane.b32.xlu0 %v2679, 127
        %v3315 = vpop.permute.xlu0 %3314
        %3316 = vrot.lane.b32.xlu0 %v2680, 127
        %v3317 = vpop.permute.xlu0 %3316
        %3318 = vrot.lane.b32.xlu0 %v2681, 127
        %v3319 = vpop.permute.xlu0 %3318
        %3320 = vrot.lane.b32.xlu0 %v2682, 127
        %v3321 = vpop.permute.xlu0 %3320
        %3322 = vrot.lane.b32.xlu0 %v2683, 127
        %v3323 = vpop.permute.xlu0 %3322
        %3324 = vrot.lane.b32.xlu0 %v2684, 127
        %v3325 = vpop.permute.xlu0 %3324
        %3326 = vrot.lane.b32.xlu0 %v2685, 127
        %v3327 = vpop.permute.xlu0 %3326
        %v3328 = vsel %vm961, %v3313, %v3315
        %v3329 = vsel %vm961, %v3317, %v3319
        %v3330 = vsel %vm961, %v3321, %v3323
        %v3331 = vsel %vm961, %v3325, %v3327
        %v3344 = vsel %vm961, %v3315, %v3313
        %v3345 = vsel %vm961, %v3319, %v3317
        %v3346 = vsel %vm961, %v3323, %v3321
        %v3347 = vsel %vm961, %v3327, %v3325
        %v3348 = vmul.f32 %v3328, %v971
        %v3349 = vmul.f32 %v3344, %v975
        %v3350 = vmul.f32 %v3329, %v971
        %v3351 = vmul.f32 %v3345, %v975
        %v3352 = vmul.f32 %v3330, %v971
        %v3353 = vmul.f32 %v3346, %v975
        %v3354 = vmul.f32 %v3331, %v971
        %v3355 = vmul.f32 %v3347, %v975
        %s3356 = scalar_lea.vmem %s6, 80
        %v3357 = vld [vmem:[%s3356] sm:$0xff]
        %v3358 = vld [vmem:[%s3356 + $0x8] sm:$0xff]
        %v3360 = vsel %vm2787, %v3357, 0
        %v3363 = vsel %vm2787, %v3358, 0
        %3365 = vmatprep.subr.mxu0 %v3349
        %3366 = vmatpush1.msra.mxu0 %v3348
        %3367 = vmatprep.subr.mxu0 %v3351
        %3368 = vmatpush1.msra.mxu0 %v3350
        %3369 = vmatprep.subr.mxu0 %v3353
        %3370 = vmatpush1.msra.mxu0 %v3352
        %3371 = vmatprep.subr.mxu0 %v3355
        %3372 = vmatpush1.msra.mxu0 %v3354
        %3373 = vmatprep.subr.mxu0 0.0
        %3374 = vmatpush1.msra.mxu0 0.0
        %3375 = vmatprep.subr.mxu0 0.0
        %3376 = vmatpush1.msra.mxu0 0.0
        %3377 = vmatprep.subr.mxu0 0.0
        %3378 = vmatpush1.msra.mxu0 0.0
        %3379 = vmatprep.subr.mxu0 0.0
        %3380 = vmatpush1.msra.mxu0 0.0
        %3381 = vmatprep.subr.mxu0 0.0
        %3382 = vmatpush1.msra.mxu0 0.0
        %3383 = vmatprep.subr.mxu0 0.0
        %3384 = vmatpush1.msra.mxu0 0.0
        %3385 = vmatprep.subr.mxu0 0.0
        %3386 = vmatpush1.msra.mxu0 0.0
        %3387 = vmatprep.subr.mxu0 0.0
        %3388 = vmatpush1.msra.mxu0 0.0
        %3389 = vmatprep.subr.mxu0 0.0
        %3390 = vmatpush1.msra.mxu0 0.0
        %3391 = vmatprep.subr.mxu0 0.0
        %3392 = vmatpush1.msra.mxu0 0.0
        %3393 = vmatprep.subr.mxu0 0.0
        %3394 = vmatpush1.msra.mxu0 0.0
        %3395 = vmatprep.subr.mxu0 0.0
        %3396 = vmatpush1.msra.mxu0 0.0
        %3397 = vmatprep.subr.mxu0 0.0
        %3398 = vmatpush1.msra.mxu0 0.0
        %3399 = vmatprep.subr.mxu0 0.0
        %3400 = vmatpush1.msra.mxu0 0.0
        %3401 = vmatprep.subr.mxu0 0.0
        %3402 = vmatpush1.msra.mxu0 0.0
        %3403 = vmatprep.subr.mxu0 0.0
        %3404 = vmatpush1.msra.mxu0 0.0
        %3405 = vmatprep.subr.mxu0 0.0
        %3406 = vmatpush1.msra.mxu0 0.0
        %3407 = vmatprep.subr.mxu0 0.0
        %3408 = vmatpush1.msra.mxu0 0.0
        %3409 = vmatprep.subr.mxu0 0.0
        %3410 = vmatpush1.msra.mxu0 0.0
        %3411 = vmatprep.subr.mxu0 0.0
        %3412 = vmatpush1.msra.mxu0 0.0
        %3413 = vmatprep.subr.mxu0 0.0
        %3414 = vmatpush1.msra.mxu0 0.0
        %3415 = vmatprep.subr.mxu0 0.0
        %3416 = vmatpush1.msra.mxu0 0.0
        %3417 = vmatprep.subr.mxu0 0.0
        %3418 = vmatpush1.msra.mxu0 0.0
        %3419 = vmatprep.subr.mxu0 0.0
        %3420 = vmatpush1.msra.mxu0 0.0
        %3421 = vmatprep.subr.mxu0 0.0
        %3422 = vmatpush1.msra.mxu0 0.0
        %3423 = vmatprep.subr.mxu0 0.0
        %3424 = vmatpush1.msra.mxu0 0.0
        %3425 = vmatprep.subr.mxu0 0.0
        %3426 = vmatpush1.msra.mxu0 0.0
        %3427 = vmatprep.subr.mxu0 0.0
        %3428 = vmatpush1.msra.mxu0 0.0
        %3429 = vmatprep.mubr.f32.mxu0 0.0
        %3430 = vmatmul.mubr.f32.gmra.mrb[0].mxu0 %v3360
        %v3431 = vpop.f32.mrb[0].mxu0
        %v3432 = vadd.f32 0.0, %v3431
        %v3433 = vpop.f32.mrb[0].mxu0
        %v3434 = vadd.f32 0.0, %v3433
        %3435 = vmatprep.mubr.f32.mxu0 0.0
        %3436 = vmatmul.mubr.f32.gmra.mrb[0].mxu0 %v3363
        %v3437 = vpop.f32.mrb[0].mxu0
        %v3438 = vadd.f32 0.0, %v3437
        %v3439 = vpop.f32.mrb[0].mxu0
        %v3440 = vadd.f32 0.0, %v3439
        %3441 = vdwg.mxu0
        %v3442 = vadd.f32 %v3308, %v3432
        %v3443 = vadd.f32 %v3309, %v3434
        %v3444 = vadd.f32 %v3310, %v3438
        %v3445 = vadd.f32 %v3311, %v3440
        %3446 = vrot.lane.b32.xlu0 %v2678, 113
        %v3447 = vpop.permute.xlu0 %3446
        %3448 = vrot.lane.b32.xlu0 %v2679, 113
        %v3449 = vpop.permute.xlu0 %3448
        %3450 = vrot.lane.b32.xlu0 %v2680, 113
        %v3451 = vpop.permute.xlu0 %3450
        %3452 = vrot.lane.b32.xlu0 %v2681, 113
        %v3453 = vpop.permute.xlu0 %3452
        %3454 = vrot.lane.b32.xlu0 %v2682, 113
        %v3455 = vpop.permute.xlu0 %3454
        %3456 = vrot.lane.b32.xlu0 %v2683, 113
        %v3457 = vpop.permute.xlu0 %3456
        %3458 = vrot.lane.b32.xlu0 %v2684, 113
        %v3459 = vpop.permute.xlu0 %3458
        %3460 = vrot.lane.b32.xlu0 %v2685, 113
        %v3461 = vpop.permute.xlu0 %3460
        %v3462 = vsel %vm1074, %v3447, %v3449
        %v3463 = vsel %vm1074, %v3451, %v3453
        %v3464 = vsel %vm1074, %v3455, %v3457
        %v3465 = vsel %vm1074, %v3459, %v3461
        %v3478 = vsel %vm1074, %v3449, %v3447
        %v3479 = vsel %vm1074, %v3453, %v3451
        %v3480 = vsel %vm1074, %v3457, %v3455
        %v3481 = vsel %vm1074, %v3461, %v3459
        %v3482 = vmul.f32 %v3462, %v1084
        %v3483 = vmul.f32 %v3478, %v1088
        %v3484 = vmul.f32 %v3463, %v1084
        %v3485 = vmul.f32 %v3479, %v1088
        %v3486 = vmul.f32 %v3464, %v1084
        %v3487 = vmul.f32 %v3480, %v1088
        %v3488 = vmul.f32 %v3465, %v1084
        %v3489 = vmul.f32 %v3481, %v1088
        %s3490 = scalar_lea.vmem %s6, 96
        %v3491 = vld [vmem:[%s3490] sm:$0xff]
        %v3492 = vld [vmem:[%s3490 + $0x8] sm:$0xff]
        %v3494 = vsel %vm2787, %v3491, 0
        %v3497 = vsel %vm2787, %v3492, 0
        %3499 = vmatprep.subr.mxu0 %v3483
        %3500 = vmatpush1.msra.mxu0 %v3482
        %3501 = vmatprep.subr.mxu0 %v3485
        %3502 = vmatpush1.msra.mxu0 %v3484
        %3503 = vmatprep.subr.mxu0 %v3487
        %3504 = vmatpush1.msra.mxu0 %v3486
        %3505 = vmatprep.subr.mxu0 %v3489
        %3506 = vmatpush1.msra.mxu0 %v3488
        %3507 = vmatprep.subr.mxu0 0.0
        %3508 = vmatpush1.msra.mxu0 0.0
        %3509 = vmatprep.subr.mxu0 0.0
        %3510 = vmatpush1.msra.mxu0 0.0
        %3511 = vmatprep.subr.mxu0 0.0
        %3512 = vmatpush1.msra.mxu0 0.0
        %3513 = vmatprep.subr.mxu0 0.0
        %3514 = vmatpush1.msra.mxu0 0.0
        %3515 = vmatprep.subr.mxu0 0.0
        %3516 = vmatpush1.msra.mxu0 0.0
        %3517 = vmatprep.subr.mxu0 0.0
        %3518 = vmatpush1.msra.mxu0 0.0
        %3519 = vmatprep.subr.mxu0 0.0
        %3520 = vmatpush1.msra.mxu0 0.0
        %3521 = vmatprep.subr.mxu0 0.0
        %3522 = vmatpush1.msra.mxu0 0.0
        %3523 = vmatprep.subr.mxu0 0.0
        %3524 = vmatpush1.msra.mxu0 0.0
        %3525 = vmatprep.subr.mxu0 0.0
        %3526 = vmatpush1.msra.mxu0 0.0
        %3527 = vmatprep.subr.mxu0 0.0
        %3528 = vmatpush1.msra.mxu0 0.0
        %3529 = vmatprep.subr.mxu0 0.0
        %3530 = vmatpush1.msra.mxu0 0.0
        %3531 = vmatprep.subr.mxu0 0.0
        %3532 = vmatpush1.msra.mxu0 0.0
        %3533 = vmatprep.subr.mxu0 0.0
        %3534 = vmatpush1.msra.mxu0 0.0
        %3535 = vmatprep.subr.mxu0 0.0
        %3536 = vmatpush1.msra.mxu0 0.0
        %3537 = vmatprep.subr.mxu0 0.0
        %3538 = vmatpush1.msra.mxu0 0.0
        %3539 = vmatprep.subr.mxu0 0.0
        %3540 = vmatpush1.msra.mxu0 0.0
        %3541 = vmatprep.subr.mxu0 0.0
        %3542 = vmatpush1.msra.mxu0 0.0
        %3543 = vmatprep.subr.mxu0 0.0
        %3544 = vmatpush1.msra.mxu0 0.0
        %3545 = vmatprep.subr.mxu0 0.0
        %3546 = vmatpush1.msra.mxu0 0.0
        %3547 = vmatprep.subr.mxu0 0.0
        %3548 = vmatpush1.msra.mxu0 0.0
        %3549 = vmatprep.subr.mxu0 0.0
        %3550 = vmatpush1.msra.mxu0 0.0
        %3551 = vmatprep.subr.mxu0 0.0
        %3552 = vmatpush1.msra.mxu0 0.0
        %3553 = vmatprep.subr.mxu0 0.0
        %3554 = vmatpush1.msra.mxu0 0.0
        %3555 = vmatprep.subr.mxu0 0.0
        %3556 = vmatpush1.msra.mxu0 0.0
        %3557 = vmatprep.subr.mxu0 0.0
        %3558 = vmatpush1.msra.mxu0 0.0
        %3559 = vmatprep.subr.mxu0 0.0
        %3560 = vmatpush1.msra.mxu0 0.0
        %3561 = vmatprep.subr.mxu0 0.0
        %3562 = vmatpush1.msra.mxu0 0.0
        %3563 = vmatprep.mubr.f32.mxu0 0.0
        %3564 = vmatmul.mubr.f32.gmra.mrb[0].mxu0 %v3494
        %v3565 = vpop.f32.mrb[0].mxu0
        %v3566 = vadd.f32 0.0, %v3565
        %v3567 = vpop.f32.mrb[0].mxu0
        %v3568 = vadd.f32 0.0, %v3567
        %3569 = vmatprep.mubr.f32.mxu0 0.0
        %3570 = vmatmul.mubr.f32.gmra.mrb[0].mxu0 %v3497
        %v3571 = vpop.f32.mrb[0].mxu0
        %v3572 = vadd.f32 0.0, %v3571
        %v3573 = vpop.f32.mrb[0].mxu0
        %v3574 = vadd.f32 0.0, %v3573
        %3575 = vdwg.mxu0
        %v3576 = vadd.f32 %v3442, %v3566
        %v3577 = vadd.f32 %v3443, %v3568
        %v3578 = vadd.f32 %v3444, %v3572
        %v3579 = vadd.f32 %v3445, %v3574
        %3580 = vrot.lane.b32.xlu0 %v2678, 112
        %v3581 = vpop.permute.xlu0 %3580
        %3582 = vrot.lane.b32.xlu0 %v2679, 112
        %v3583 = vpop.permute.xlu0 %3582
        %3584 = vrot.lane.b32.xlu0 %v2680, 112
        %v3585 = vpop.permute.xlu0 %3584
        %3586 = vrot.lane.b32.xlu0 %v2681, 112
        %v3587 = vpop.permute.xlu0 %3586
        %3588 = vrot.lane.b32.xlu0 %v2682, 112
        %v3589 = vpop.permute.xlu0 %3588
        %3590 = vrot.lane.b32.xlu0 %v2683, 112
        %v3591 = vpop.permute.xlu0 %3590
        %3592 = vrot.lane.b32.xlu0 %v2684, 112
        %v3593 = vpop.permute.xlu0 %3592
        %3594 = vrot.lane.b32.xlu0 %v2685, 112
        %v3595 = vpop.permute.xlu0 %3594
        %v3596 = vsel %vm1187, %v3581, %v3583
        %v3597 = vsel %vm1187, %v3585, %v3587
        %v3598 = vsel %vm1187, %v3589, %v3591
        %v3599 = vsel %vm1187, %v3593, %v3595
        %v3612 = vsel %vm1187, %v3583, %v3581
        %v3613 = vsel %vm1187, %v3587, %v3585
        %v3614 = vsel %vm1187, %v3591, %v3589
        %v3615 = vsel %vm1187, %v3595, %v3593
        %v3616 = vmul.f32 %v3596, %v1197
        %v3617 = vmul.f32 %v3612, %v1201
        %v3618 = vmul.f32 %v3597, %v1197
        %v3619 = vmul.f32 %v3613, %v1201
        %v3620 = vmul.f32 %v3598, %v1197
        %v3621 = vmul.f32 %v3614, %v1201
        %v3622 = vmul.f32 %v3599, %v1197
        %v3623 = vmul.f32 %v3615, %v1201
        %s3624 = scalar_lea.vmem %s6, 112
        %v3625 = vld [vmem:[%s3624] sm:$0xff]
        %v3626 = vld [vmem:[%s3624 + $0x8] sm:$0xff]
        %v3628 = vsel %vm2787, %v3625, 0
        %v3631 = vsel %vm2787, %v3626, 0
        %3633 = vmatprep.subr.mxu0 %v3617
        %3634 = vmatpush1.msra.mxu0 %v3616
        %3635 = vmatprep.subr.mxu0 %v3619
        %3636 = vmatpush1.msra.mxu0 %v3618
        %3637 = vmatprep.subr.mxu0 %v3621
        %3638 = vmatpush1.msra.mxu0 %v3620
        %3639 = vmatprep.subr.mxu0 %v3623
        %3640 = vmatpush1.msra.mxu0 %v3622
        %3641 = vmatprep.subr.mxu0 0.0
        %3642 = vmatpush1.msra.mxu0 0.0
        %3643 = vmatprep.subr.mxu0 0.0
        %3644 = vmatpush1.msra.mxu0 0.0
        %3645 = vmatprep.subr.mxu0 0.0
        %3646 = vmatpush1.msra.mxu0 0.0
        %3647 = vmatprep.subr.mxu0 0.0
        %3648 = vmatpush1.msra.mxu0 0.0
        %3649 = vmatprep.subr.mxu0 0.0
        %3650 = vmatpush1.msra.mxu0 0.0
        %3651 = vmatprep.subr.mxu0 0.0
        %3652 = vmatpush1.msra.mxu0 0.0
        %3653 = vmatprep.subr.mxu0 0.0
        %3654 = vmatpush1.msra.mxu0 0.0
        %3655 = vmatprep.subr.mxu0 0.0
        %3656 = vmatpush1.msra.mxu0 0.0
        %3657 = vmatprep.subr.mxu0 0.0
        %3658 = vmatpush1.msra.mxu0 0.0
        %3659 = vmatprep.subr.mxu0 0.0
        %3660 = vmatpush1.msra.mxu0 0.0
        %3661 = vmatprep.subr.mxu0 0.0
        %3662 = vmatpush1.msra.mxu0 0.0
        %3663 = vmatprep.subr.mxu0 0.0
        %3664 = vmatpush1.msra.mxu0 0.0
        %3665 = vmatprep.subr.mxu0 0.0
        %3666 = vmatpush1.msra.mxu0 0.0
        %3667 = vmatprep.subr.mxu0 0.0
        %3668 = vmatpush1.msra.mxu0 0.0
        %3669 = vmatprep.subr.mxu0 0.0
        %3670 = vmatpush1.msra.mxu0 0.0
        %3671 = vmatprep.subr.mxu0 0.0
        %3672 = vmatpush1.msra.mxu0 0.0
        %3673 = vmatprep.subr.mxu0 0.0
        %3674 = vmatpush1.msra.mxu0 0.0
        %3675 = vmatprep.subr.mxu0 0.0
        %3676 = vmatpush1.msra.mxu0 0.0
        %3677 = vmatprep.subr.mxu0 0.0
        %3678 = vmatpush1.msra.mxu0 0.0
        %3679 = vmatprep.subr.mxu0 0.0
        %3680 = vmatpush1.msra.mxu0 0.0
        %3681 = vmatprep.subr.mxu0 0.0
        %3682 = vmatpush1.msra.mxu0 0.0
        %3683 = vmatprep.subr.mxu0 0.0
        %3684 = vmatpush1.msra.mxu0 0.0
        %3685 = vmatprep.subr.mxu0 0.0
        %3686 = vmatpush1.msra.mxu0 0.0
        %3687 = vmatprep.subr.mxu0 0.0
        %3688 = vmatpush1.msra.mxu0 0.0
        %3689 = vmatprep.subr.mxu0 0.0
        %3690 = vmatpush1.msra.mxu0 0.0
        %3691 = vmatprep.subr.mxu0 0.0
        %3692 = vmatpush1.msra.mxu0 0.0
        %3693 = vmatprep.subr.mxu0 0.0
        %3694 = vmatpush1.msra.mxu0 0.0
        %3695 = vmatprep.subr.mxu0 0.0
        %3696 = vmatpush1.msra.mxu0 0.0
        %3697 = vmatprep.mubr.f32.mxu0 0.0
        %3698 = vmatmul.mubr.f32.gmra.mrb[0].mxu0 %v3628
        %v3699 = vpop.f32.mrb[0].mxu0
        %v3700 = vadd.f32 0.0, %v3699
        %v3701 = vpop.f32.mrb[0].mxu0
        %v3702 = vadd.f32 0.0, %v3701
        %3703 = vmatprep.mubr.f32.mxu0 0.0
        %3704 = vmatmul.mubr.f32.gmra.mrb[0].mxu0 %v3631
        %v3705 = vpop.f32.mrb[0].mxu0
        %v3706 = vadd.f32 0.0, %v3705
        %v3707 = vpop.f32.mrb[0].mxu0
        %v3708 = vadd.f32 0.0, %v3707
        %3709 = vdwg.mxu0
        %v3710 = vadd.f32 %v3576, %v3700
        %v3711 = vadd.f32 %v3577, %v3702
        %v3712 = vadd.f32 %v3578, %v3706
        %v3713 = vadd.f32 %v3579, %v3708
        %3714 = vrot.lane.b32.xlu0 %v2678, 111
        %v3715 = vpop.permute.xlu0 %3714
        %3716 = vrot.lane.b32.xlu0 %v2679, 111
        %v3717 = vpop.permute.xlu0 %3716
        %3718 = vrot.lane.b32.xlu0 %v2680, 111
        %v3719 = vpop.permute.xlu0 %3718
        %3720 = vrot.lane.b32.xlu0 %v2681, 111
        %v3721 = vpop.permute.xlu0 %3720
        %3722 = vrot.lane.b32.xlu0 %v2682, 111
        %v3723 = vpop.permute.xlu0 %3722
        %3724 = vrot.lane.b32.xlu0 %v2683, 111
        %v3725 = vpop.permute.xlu0 %3724
        %3726 = vrot.lane.b32.xlu0 %v2684, 111
        %v3727 = vpop.permute.xlu0 %3726
        %3728 = vrot.lane.b32.xlu0 %v2685, 111
        %v3729 = vpop.permute.xlu0 %3728
        %v3730 = vsel %vm1300, %v3715, %v3717
        %v3731 = vsel %vm1300, %v3719, %v3721
        %v3732 = vsel %vm1300, %v3723, %v3725
        %v3733 = vsel %vm1300, %v3727, %v3729
        %v3746 = vsel %vm1300, %v3717, %v3715
        %v3747 = vsel %vm1300, %v3721, %v3719
        %v3748 = vsel %vm1300, %v3725, %v3723
        %v3749 = vsel %vm1300, %v3729, %v3727
        %v3750 = vmul.f32 %v3730, %v1310
        %v3751 = vmul.f32 %v3746, %v1314
        %v3752 = vmul.f32 %v3731, %v1310
        %v3753 = vmul.f32 %v3747, %v1314
        %v3754 = vmul.f32 %v3732, %v1310
        %v3755 = vmul.f32 %v3748, %v1314
        %v3756 = vmul.f32 %v3733, %v1310
        %v3757 = vmul.f32 %v3749, %v1314
        %s3758 = scalar_lea.vmem %s6, 128
        %v3759 = vld [vmem:[%s3758] sm:$0xff]
        %v3760 = vld [vmem:[%s3758 + $0x8] sm:$0xff]
        %v3762 = vsel %vm2787, %v3759, 0
        %v3765 = vsel %vm2787, %v3760, 0
        %3767 = vmatprep.subr.mxu0 %v3751
        %3768 = vmatpush1.msra.mxu0 %v3750
        %3769 = vmatprep.subr.mxu0 %v3753
        %3770 = vmatpush1.msra.mxu0 %v3752
        %3771 = vmatprep.subr.mxu0 %v3755
        %3772 = vmatpush1.msra.mxu0 %v3754
        %3773 = vmatprep.subr.mxu0 %v3757
        %3774 = vmatpush1.msra.mxu0 %v3756
        %3775 = vmatprep.subr.mxu0 0.0
        %3776 = vmatpush1.msra.mxu0 0.0
        %3777 = vmatprep.subr.mxu0 0.0
        %3778 = vmatpush1.msra.mxu0 0.0
        %3779 = vmatprep.subr.mxu0 0.0
        %3780 = vmatpush1.msra.mxu0 0.0
        %3781 = vmatprep.subr.mxu0 0.0
        %3782 = vmatpush1.msra.mxu0 0.0
        %3783 = vmatprep.subr.mxu0 0.0
        %3784 = vmatpush1.msra.mxu0 0.0
        %3785 = vmatprep.subr.mxu0 0.0
        %3786 = vmatpush1.msra.mxu0 0.0
        %3787 = vmatprep.subr.mxu0 0.0
        %3788 = vmatpush1.msra.mxu0 0.0
        %3789 = vmatprep.subr.mxu0 0.0
        %3790 = vmatpush1.msra.mxu0 0.0
        %3791 = vmatprep.subr.mxu0 0.0
        %3792 = vmatpush1.msra.mxu0 0.0
        %3793 = vmatprep.subr.mxu0 0.0
        %3794 = vmatpush1.msra.mxu0 0.0
        %3795 = vmatprep.subr.mxu0 0.0
        %3796 = vmatpush1.msra.mxu0 0.0
        %3797 = vmatprep.subr.mxu0 0.0
        %3798 = vmatpush1.msra.mxu0 0.0
        %3799 = vmatprep.subr.mxu0 0.0
        %3800 = vmatpush1.msra.mxu0 0.0
        %3801 = vmatprep.subr.mxu0 0.0
        %3802 = vmatpush1.msra.mxu0 0.0
        %3803 = vmatprep.subr.mxu0 0.0
        %3804 = vmatpush1.msra.mxu0 0.0
        %3805 = vmatprep.subr.mxu0 0.0
        %3806 = vmatpush1.msra.mxu0 0.0
        %3807 = vmatprep.subr.mxu0 0.0
        %3808 = vmatpush1.msra.mxu0 0.0
        %3809 = vmatprep.subr.mxu0 0.0
        %3810 = vmatpush1.msra.mxu0 0.0
        %3811 = vmatprep.subr.mxu0 0.0
        %3812 = vmatpush1.msra.mxu0 0.0
        %3813 = vmatprep.subr.mxu0 0.0
        %3814 = vmatpush1.msra.mxu0 0.0
        %3815 = vmatprep.subr.mxu0 0.0
        %3816 = vmatpush1.msra.mxu0 0.0
        %3817 = vmatprep.subr.mxu0 0.0
        %3818 = vmatpush1.msra.mxu0 0.0
        %3819 = vmatprep.subr.mxu0 0.0
        %3820 = vmatpush1.msra.mxu0 0.0
        %3821 = vmatprep.subr.mxu0 0.0
        %3822 = vmatpush1.msra.mxu0 0.0
        %3823 = vmatprep.subr.mxu0 0.0
        %3824 = vmatpush1.msra.mxu0 0.0
        %3825 = vmatprep.subr.mxu0 0.0
        %3826 = vmatpush1.msra.mxu0 0.0
        %3827 = vmatprep.subr.mxu0 0.0
        %3828 = vmatpush1.msra.mxu0 0.0
        %3829 = vmatprep.subr.mxu0 0.0
        %3830 = vmatpush1.msra.mxu0 0.0
        %3831 = vmatprep.mubr.f32.mxu0 0.0
        %3832 = vmatmul.mubr.f32.gmra.mrb[0].mxu0 %v3762
        %v3833 = vpop.f32.mrb[0].mxu0
        %v3834 = vadd.f32 0.0, %v3833
        %v3835 = vpop.f32.mrb[0].mxu0
        %v3836 = vadd.f32 0.0, %v3835
        %3837 = vmatprep.mubr.f32.mxu0 0.0
        %3838 = vmatmul.mubr.f32.gmra.mrb[0].mxu0 %v3765
        %v3839 = vpop.f32.mrb[0].mxu0
        %v3840 = vadd.f32 0.0, %v3839
        %v3841 = vpop.f32.mrb[0].mxu0
        %v3842 = vadd.f32 0.0, %v3841
        %3843 = vdwg.mxu0
        %v3844 = vadd.f32 %v3710, %v3834
        %v3845 = vadd.f32 %v3711, %v3836
        %v3846 = vadd.f32 %v3712, %v3840
        %v3847 = vadd.f32 %v3713, %v3842
        %v3848 = vld [vmem:[%s7] sm:$0xff]
        %v3849 = vld [vmem:[%s7 + $0x8] sm:$0xff]
        %3851 = vset.pattern.permute.xlu0 0
        %3852 = vperm.xlu0 %3851, %v3848
        %v3853 = vpop.permute.xlu0 %3852
        %3856 = vset.pattern.permute.xlu0 0
        %3857 = vperm.xlu0 %3856, %v3849
        %v3858 = vpop.permute.xlu0 %3857
        %v3860 = vadd.f32 %v3844, %v3853
        %v3861 = vadd.f32 %v3845, %v3853
        %v3862 = vadd.f32 %v3846, %v3858
        %v3863 = vadd.f32 %v3847, %v3858
        %s3864 = sld [smem:[#allocation3 + $0x2]]
        %vm3865 = vcmp.ge.f32.partialorder %v3860, 0.0
        %vm3866 = vcmp.ge.f32.partialorder %v3861, 0.0
        %vm3867 = vcmp.ge.f32.partialorder %v3862, 0.0
        %vm3868 = vcmp.ge.f32.partialorder %v3863, 0.0
        %v3869 = vstv %s3864
        %v3870 = vmul.f32 %v3869, %v3860
        %v3871 = vmul.f32 %v3869, %v3861
        %v3872 = vmul.f32 %v3869, %v3862
        %v3873 = vmul.f32 %v3869, %v3863
        %v3874 = vsel %vm3865, %v3860, %v3870
        %v3875 = vsel %vm3866, %v3861, %v3871
        %v3876 = vsel %vm3867, %v3862, %v3872
        %v3877 = vsel %vm3868, %v3863, %v3873
        %3880 = vrot.lane.b32.xlu0 %v3875, 17
        %v3881 = vpop.permute.xlu0 %3880
        %3882 = vrot.lane.b32.xlu0 %v3877, 17
        %v3883 = vpop.permute.xlu0 %3882
        %3888 = vrot.lane.b32.xlu0 %v3874, 17
        %v3889 = vpop.permute.xlu0 %3888
        %3890 = vrot.lane.b32.xlu0 %v3876, 17
        %v3891 = vpop.permute.xlu0 %3890
        %v3892 = vsel %vm428, %v3889, %v3881
        %v3893 = vsel %vm428, %v3891, %v3883
        %v3898 = vsel %vm428, %v3881, %v3889
        %v3899 = vsel %vm428, %v3883, %v3891
        %v3900 = vmul.f32 %v3898, %v437
        %v3901 = vmul.f32 %v3892, %v441
        %v3902 = vmul.f32 %v3899, %v437
        %v3903 = vmul.f32 %v3893, %v441
        %v3904 = vld [vmem:[%s8] sm:$0x1]
        %3905 = vrot.lane.b32.xlu0 %v3875, 16
        %v3906 = vpop.permute.xlu0 %3905
        %3907 = vrot.lane.b32.xlu0 %v3877, 16
        %v3908 = vpop.permute.xlu0 %3907
        %3911 = vrot.lane.b32.xlu0 %v3874, 16
        %v3912 = vpop.permute.xlu0 %3911
        %3913 = vrot.lane.b32.xlu0 %v3876, 16
        %v3914 = vpop.permute.xlu0 %3913
        %v3915 = vsel %vm453, %v3912, %v3906
        %v3916 = vsel %vm453, %v3914, %v3908
        %v3921 = vsel %vm453, %v3906, %v3912
        %v3922 = vsel %vm453, %v3908, %v3914
        %v3923 = vmul.f32 %v3921, %v462
        %v3924 = vmul.f32 %v3915, %v466
        %v3925 = vmul.f32 %v3922, %v462
        %v3926 = vmul.f32 %v3916, %v466
        %s3927 = scalar_lea.vmem %s8, 1
        %v3928 = vld [vmem:[%s3927] sm:$0x1]
        %v3930 = vsel %vm453, %v3928, 0
        %3932 = vmatprep.subr.mxu0 %v3924
        %3933 = vmatpush1.msra.mxu0 %v3923
        %3934 = vmatprep.subr.mxu0 %v3926
        %3935 = vmatpush1.msra.mxu0 %v3925
        %3936 = vmatprep.subr.mxu0 0.0
        %3937 = vmatpush1.msra.mxu0 0.0
        %3938 = vmatprep.subr.mxu0 0.0
        %3939 = vmatpush1.msra.mxu0 0.0
        %3940 = vmatprep.subr.mxu0 0.0
        %3941 = vmatpush1.msra.mxu0 0.0
        %3942 = vmatprep.subr.mxu0 0.0
        %3943 = vmatpush1.msra.mxu0 0.0
        %3944 = vmatprep.subr.mxu0 0.0
        %3945 = vmatpush1.msra.mxu0 0.0
        %3946 = vmatprep.subr.mxu0 0.0
        %3947 = vmatpush1.msra.mxu0 0.0
        %3948 = vmatprep.subr.mxu0 0.0
        %3949 = vmatpush1.msra.mxu0 0.0
        %3950 = vmatprep.subr.mxu0 0.0
        %3951 = vmatpush1.msra.mxu0 0.0
        %3952 = vmatprep.subr.mxu0 0.0
        %3953 = vmatpush1.msra.mxu0 0.0
        %3954 = vmatprep.subr.mxu0 0.0
        %3955 = vmatpush1.msra.mxu0 0.0
        %3956 = vmatprep.subr.mxu0 0.0
        %3957 = vmatpush1.msra.mxu0 0.0
        %3958 = vmatprep.subr.mxu0 0.0
        %3959 = vmatpush1.msra.mxu0 0.0
        %3960 = vmatprep.subr.mxu0 0.0
        %3961 = vmatpush1.msra.mxu0 0.0
        %3962 = vmatprep.subr.mxu0 0.0
        %3963 = vmatpush1.msra.mxu0 0.0
        %3964 = vmatprep.subr.mxu0 0.0
        %3965 = vmatpush1.msra.mxu0 0.0
        %3966 = vmatprep.subr.mxu0 0.0
        %3967 = vmatpush1.msra.mxu0 0.0
        %3968 = vmatprep.subr.mxu0 0.0
        %3969 = vmatpush1.msra.mxu0 0.0
        %3970 = vmatprep.subr.mxu0 0.0
        %3971 = vmatpush1.msra.mxu0 0.0
        %3972 = vmatprep.subr.mxu0 0.0
        %3973 = vmatpush1.msra.mxu0 0.0
        %3974 = vmatprep.subr.mxu0 0.0
        %3975 = vmatpush1.msra.mxu0 0.0
        %3976 = vmatprep.subr.mxu0 0.0
        %3977 = vmatpush1.msra.mxu0 0.0
        %3978 = vmatprep.subr.mxu0 0.0
        %3979 = vmatpush1.msra.mxu0 0.0
        %3980 = vmatprep.subr.mxu0 0.0
        %3981 = vmatpush1.msra.mxu0 0.0
        %3982 = vmatprep.subr.mxu0 0.0
        %3983 = vmatpush1.msra.mxu0 0.0
        %3984 = vmatprep.subr.mxu0 0.0
        %3985 = vmatpush1.msra.mxu0 0.0
        %3986 = vmatprep.subr.mxu0 0.0
        %3987 = vmatpush1.msra.mxu0 0.0
        %3988 = vmatprep.subr.mxu0 0.0
        %3989 = vmatpush1.msra.mxu0 0.0
        %3990 = vmatprep.subr.mxu0 0.0
        %3991 = vmatpush1.msra.mxu0 0.0
        %3992 = vmatprep.subr.mxu0 0.0
        %3993 = vmatpush1.msra.mxu0 0.0
        %3994 = vmatprep.subr.mxu0 0.0
        %3995 = vmatpush1.msra.mxu0 0.0
        %3996 = vmatprep.mubr.f32.mxu0 0.0
        %3997 = vmatmul.mubr.f32.gmra.mrb[0].mxu0 %v3930
        %v3998 = vpop.f32.mrb[0].mxu0
        %v3999 = vadd.f32 0.0, %v3998
        %v4000 = vpop.f32.mrb[0].mxu0
        %v4001 = vadd.f32 0.0, %v4000
        %4002 = vdwg.mxu0
        %v4004 = vsel %vm453, %v3904, 0
        %4006 = vmatprep.subr.mxu0 %v3901
        %4007 = vmatpush1.msra.mxu0 %v3900
        %4008 = vmatprep.subr.mxu0 %v3903
        %4009 = vmatpush1.msra.mxu0 %v3902
        %4010 = vmatprep.subr.mxu0 0.0
        %4011 = vmatpush1.msra.mxu0 0.0
        %4012 = vmatprep.subr.mxu0 0.0
        %4013 = vmatpush1.msra.mxu0 0.0
        %4014 = vmatprep.subr.mxu0 0.0
        %4015 = vmatpush1.msra.mxu0 0.0
        %4016 = vmatprep.subr.mxu0 0.0
        %4017 = vmatpush1.msra.mxu0 0.0
        %4018 = vmatprep.subr.mxu0 0.0
        %4019 = vmatpush1.msra.mxu0 0.0
        %4020 = vmatprep.subr.mxu0 0.0
        %4021 = vmatpush1.msra.mxu0 0.0
        %4022 = vmatprep.subr.mxu0 0.0
        %4023 = vmatpush1.msra.mxu0 0.0
        %4024 = vmatprep.subr.mxu0 0.0
        %4025 = vmatpush1.msra.mxu0 0.0
        %4026 = vmatprep.subr.mxu0 0.0
        %4027 = vmatpush1.msra.mxu0 0.0
        %4028 = vmatprep.subr.mxu0 0.0
        %4029 = vmatpush1.msra.mxu0 0.0
        %4030 = vmatprep.subr.mxu0 0.0
        %4031 = vmatpush1.msra.mxu0 0.0
        %4032 = vmatprep.subr.mxu0 0.0
        %4033 = vmatpush1.msra.mxu0 0.0
        %4034 = vmatprep.subr.mxu0 0.0
        %4035 = vmatpush1.msra.mxu0 0.0
        %4036 = vmatprep.subr.mxu0 0.0
        %4037 = vmatpush1.msra.mxu0 0.0
        %4038 = vmatprep.subr.mxu0 0.0
        %4039 = vmatpush1.msra.mxu0 0.0
        %4040 = vmatprep.subr.mxu0 0.0
        %4041 = vmatpush1.msra.mxu0 0.0
        %4042 = vmatprep.subr.mxu0 0.0
        %4043 = vmatpush1.msra.mxu0 0.0
        %4044 = vmatprep.subr.mxu0 0.0
        %4045 = vmatpush1.msra.mxu0 0.0
        %4046 = vmatprep.subr.mxu0 0.0
        %4047 = vmatpush1.msra.mxu0 0.0
        %4048 = vmatprep.subr.mxu0 0.0
        %4049 = vmatpush1.msra.mxu0 0.0
        %4050 = vmatprep.subr.mxu0 0.0
        %4051 = vmatpush1.msra.mxu0 0.0
        %4052 = vmatprep.subr.mxu0 0.0
        %4053 = vmatpush1.msra.mxu0 0.0
        %4054 = vmatprep.subr.mxu0 0.0
        %4055 = vmatpush1.msra.mxu0 0.0
        %4056 = vmatprep.subr.mxu0 0.0
        %4057 = vmatpush1.msra.mxu0 0.0
        %4058 = vmatprep.subr.mxu0 0.0
        %4059 = vmatpush1.msra.mxu0 0.0
        %4060 = vmatprep.subr.mxu0 0.0
        %4061 = vmatpush1.msra.mxu0 0.0
        %4062 = vmatprep.subr.mxu0 0.0
        %4063 = vmatpush1.msra.mxu0 0.0
        %4064 = vmatprep.subr.mxu0 0.0
        %4065 = vmatpush1.msra.mxu0 0.0
        %4066 = vmatprep.subr.mxu0 0.0
        %4067 = vmatpush1.msra.mxu0 0.0
        %4068 = vmatprep.subr.mxu0 0.0
        %4069 = vmatpush1.msra.mxu0 0.0
        %4070 = vmatprep.mubr.f32.mxu0 0.0
        %4071 = vmatmul.mubr.f32.gmra.mrb[0].mxu0 %v4004
        %v4072 = vpop.f32.mrb[0].mxu0
        %v4073 = vadd.f32 %v3999, %v4072
        %v4074 = vpop.f32.mrb[0].mxu0
        %v4075 = vadd.f32 %v4001, %v4074
        %4076 = vdwg.mxu0
        %4077 = vrot.lane.b32.xlu0 %v3875, 15
        %v4078 = vpop.permute.xlu0 %4077
        %4079 = vrot.lane.b32.xlu0 %v3877, 15
        %v4080 = vpop.permute.xlu0 %4079
        %4083 = vrot.lane.b32.xlu0 %v3874, 15
        %v4084 = vpop.permute.xlu0 %4083
        %4085 = vrot.lane.b32.xlu0 %v3876, 15
        %v4086 = vpop.permute.xlu0 %4085
        %v4087 = vsel %vm646, %v4084, %v4078
        %v4088 = vsel %vm646, %v4086, %v4080
        %v4093 = vsel %vm646, %v4078, %v4084
        %v4094 = vsel %vm646, %v4080, %v4086
        %v4095 = vmul.f32 %v4093, %v655
        %v4096 = vmul.f32 %v4087, %v659
        %v4097 = vmul.f32 %v4094, %v655
        %v4098 = vmul.f32 %v4088, %v659
        %s4099 = scalar_lea.vmem %s8, 2
        %v4100 = vld [vmem:[%s4099] sm:$0x1]
        %v4102 = vsel %vm453, %v4100, 0
        %4104 = vmatprep.subr.mxu0 %v4096
        %4105 = vmatpush1.msra.mxu0 %v4095
        %4106 = vmatprep.subr.mxu0 %v4098
        %4107 = vmatpush1.msra.mxu0 %v4097
        %4108 = vmatprep.subr.mxu0 0.0
        %4109 = vmatpush1.msra.mxu0 0.0
        %4110 = vmatprep.subr.mxu0 0.0
        %4111 = vmatpush1.msra.mxu0 0.0
        %4112 = vmatprep.subr.mxu0 0.0
        %4113 = vmatpush1.msra.mxu0 0.0
        %4114 = vmatprep.subr.mxu0 0.0
        %4115 = vmatpush1.msra.mxu0 0.0
        %4116 = vmatprep.subr.mxu0 0.0
        %4117 = vmatpush1.msra.mxu0 0.0
        %4118 = vmatprep.subr.mxu0 0.0
        %4119 = vmatpush1.msra.mxu0 0.0
        %4120 = vmatprep.subr.mxu0 0.0
        %4121 = vmatpush1.msra.mxu0 0.0
        %4122 = vmatprep.subr.mxu0 0.0
        %4123 = vmatpush1.msra.mxu0 0.0
        %4124 = vmatprep.subr.mxu0 0.0
        %4125 = vmatpush1.msra.mxu0 0.0
        %4126 = vmatprep.subr.mxu0 0.0
        %4127 = vmatpush1.msra.mxu0 0.0
        %4128 = vmatprep.subr.mxu0 0.0
        %4129 = vmatpush1.msra.mxu0 0.0
        %4130 = vmatprep.subr.mxu0 0.0
        %4131 = vmatpush1.msra.mxu0 0.0
        %4132 = vmatprep.subr.mxu0 0.0
        %4133 = vmatpush1.msra.mxu0 0.0
        %4134 = vmatprep.subr.mxu0 0.0
        %4135 = vmatpush1.msra.mxu0 0.0
        %4136 = vmatprep.subr.mxu0 0.0
        %4137 = vmatpush1.msra.mxu0 0.0
        %4138 = vmatprep.subr.mxu0 0.0
        %4139 = vmatpush1.msra.mxu0 0.0
        %4140 = vmatprep.subr.mxu0 0.0
        %4141 = vmatpush1.msra.mxu0 0.0
        %4142 = vmatprep.subr.mxu0 0.0
        %4143 = vmatpush1.msra.mxu0 0.0
        %4144 = vmatprep.subr.mxu0 0.0
        %4145 = vmatpush1.msra.mxu0 0.0
        %4146 = vmatprep.subr.mxu0 0.0
        %4147 = vmatpush1.msra.mxu0 0.0
        %4148 = vmatprep.subr.mxu0 0.0
        %4149 = vmatpush1.msra.mxu0 0.0
        %4150 = vmatprep.subr.mxu0 0.0
        %4151 = vmatpush1.msra.mxu0 0.0
        %4152 = vmatprep.subr.mxu0 0.0
        %4153 = vmatpush1.msra.mxu0 0.0
        %4154 = vmatprep.subr.mxu0 0.0
        %4155 = vmatpush1.msra.mxu0 0.0
        %4156 = vmatprep.subr.mxu0 0.0
        %4157 = vmatpush1.msra.mxu0 0.0
        %4158 = vmatprep.subr.mxu0 0.0
        %4159 = vmatpush1.msra.mxu0 0.0
        %4160 = vmatprep.subr.mxu0 0.0
        %4161 = vmatpush1.msra.mxu0 0.0
        %4162 = vmatprep.subr.mxu0 0.0
        %4163 = vmatpush1.msra.mxu0 0.0
        %4164 = vmatprep.subr.mxu0 0.0
        %4165 = vmatpush1.msra.mxu0 0.0
        %4166 = vmatprep.subr.mxu0 0.0
        %4167 = vmatpush1.msra.mxu0 0.0
        %4168 = vmatprep.mubr.f32.mxu0 0.0
        %4169 = vmatmul.mubr.f32.gmra.mrb[0].mxu0 %v4102
        %v4170 = vpop.f32.mrb[0].mxu0
        %v4171 = vadd.f32 0.0, %v4170
        %v4172 = vpop.f32.mrb[0].mxu0
        %v4173 = vadd.f32 0.0, %v4172
        %4174 = vdwg.mxu0
        %v4175 = vadd.f32 %v4073, %v4171
        %v4176 = vadd.f32 %v4075, %v4173
        %4177 = vrot.lane.b32.xlu0 %v3875, 1
        %v4178 = vpop.permute.xlu0 %4177
        %4179 = vrot.lane.b32.xlu0 %v3877, 1
        %v4180 = vpop.permute.xlu0 %4179
        %4183 = vrot.lane.b32.xlu0 %v3874, 1
        %v4184 = vpop.permute.xlu0 %4183
        %4185 = vrot.lane.b32.xlu0 %v3876, 1
        %v4186 = vpop.permute.xlu0 %4185
        %v4187 = vsel %vm759, %v4184, %v4178
        %v4188 = vsel %vm759, %v4186, %v4180
        %v4193 = vsel %vm759, %v4178, %v4184
        %v4194 = vsel %vm759, %v4180, %v4186
        %v4195 = vmul.f32 %v4193, %v768
        %v4196 = vmul.f32 %v4187, %v772
        %v4197 = vmul.f32 %v4194, %v768
        %v4198 = vmul.f32 %v4188, %v772
        %s4199 = scalar_lea.vmem %s8, 3
        %v4200 = vld [vmem:[%s4199] sm:$0x1]
        %v4202 = vsel %vm453, %v4200, 0
        %4204 = vmatprep.subr.mxu0 %v4196
        %4205 = vmatpush1.msra.mxu0 %v4195
        %4206 = vmatprep.subr.mxu0 %v4198
        %4207 = vmatpush1.msra.mxu0 %v4197
        %4208 = vmatprep.subr.mxu0 0.0
        %4209 = vmatpush1.msra.mxu0 0.0
        %4210 = vmatprep.subr.mxu0 0.0
        %4211 = vmatpush1.msra.mxu0 0.0
        %4212 = vmatprep.subr.mxu0 0.0
        %4213 = vmatpush1.msra.mxu0 0.0
        %4214 = vmatprep.subr.mxu0 0.0
        %4215 = vmatpush1.msra.mxu0 0.0
        %4216 = vmatprep.subr.mxu0 0.0
        %4217 = vmatpush1.msra.mxu0 0.0
        %4218 = vmatprep.subr.mxu0 0.0
        %4219 = vmatpush1.msra.mxu0 0.0
        %4220 = vmatprep.subr.mxu0 0.0
        %4221 = vmatpush1.msra.mxu0 0.0
        %4222 = vmatprep.subr.mxu0 0.0
        %4223 = vmatpush1.msra.mxu0 0.0
        %4224 = vmatprep.subr.mxu0 0.0
        %4225 = vmatpush1.msra.mxu0 0.0
        %4226 = vmatprep.subr.mxu0 0.0
        %4227 = vmatpush1.msra.mxu0 0.0
        %4228 = vmatprep.subr.mxu0 0.0
        %4229 = vmatpush1.msra.mxu0 0.0
        %4230 = vmatprep.subr.mxu0 0.0
        %4231 = vmatpush1.msra.mxu0 0.0
        %4232 = vmatprep.subr.mxu0 0.0
        %4233 = vmatpush1.msra.mxu0 0.0
        %4234 = vmatprep.subr.mxu0 0.0
        %4235 = vmatpush1.msra.mxu0 0.0
        %4236 = vmatprep.subr.mxu0 0.0
        %4237 = vmatpush1.msra.mxu0 0.0
        %4238 = vmatprep.subr.mxu0 0.0
        %4239 = vmatpush1.msra.mxu0 0.0
        %4240 = vmatprep.subr.mxu0 0.0
        %4241 = vmatpush1.msra.mxu0 0.0
        %4242 = vmatprep.subr.mxu0 0.0
        %4243 = vmatpush1.msra.mxu0 0.0
        %4244 = vmatprep.subr.mxu0 0.0
        %4245 = vmatpush1.msra.mxu0 0.0
        %4246 = vmatprep.subr.mxu0 0.0
        %4247 = vmatpush1.msra.mxu0 0.0
        %4248 = vmatprep.subr.mxu0 0.0
        %4249 = vmatpush1.msra.mxu0 0.0
        %4250 = vmatprep.subr.mxu0 0.0
        %4251 = vmatpush1.msra.mxu0 0.0
        %4252 = vmatprep.subr.mxu0 0.0
        %4253 = vmatpush1.msra.mxu0 0.0
        %4254 = vmatprep.subr.mxu0 0.0
        %4255 = vmatpush1.msra.mxu0 0.0
        %4256 = vmatprep.subr.mxu0 0.0
        %4257 = vmatpush1.msra.mxu0 0.0
        %4258 = vmatprep.subr.mxu0 0.0
        %4259 = vmatpush1.msra.mxu0 0.0
        %4260 = vmatprep.subr.mxu0 0.0
        %4261 = vmatpush1.msra.mxu0 0.0
        %4262 = vmatprep.subr.mxu0 0.0
        %4263 = vmatpush1.msra.mxu0 0.0
        %4264 = vmatprep.subr.mxu0 0.0
        %4265 = vmatpush1.msra.mxu0 0.0
        %4266 = vmatprep.subr.mxu0 0.0
        %4267 = vmatpush1.msra.mxu0 0.0
        %4268 = vmatprep.mubr.f32.mxu0 0.0
        %4269 = vmatmul.mubr.f32.gmra.mrb[0].mxu0 %v4202
        %v4270 = vpop.f32.mrb[0].mxu0
        %v4271 = vadd.f32 0.0, %v4270
        %v4272 = vpop.f32.mrb[0].mxu0
        %v4273 = vadd.f32 0.0, %v4272
        %4274 = vdwg.mxu0
        %v4275 = vadd.f32 %v4175, %v4271
        %v4276 = vadd.f32 %v4176, %v4273
        %s4277 = scalar_lea.vmem %s8, 4
        %v4278 = vld [vmem:[%s4277] sm:$0x1]
        %v4280 = vsel %vm453, %v4278, 0
        %4282 = vmatprep.subr.mxu0 %v3875
        %4283 = vmatpush1.msra.mxu0 %v3874
        %4284 = vmatprep.subr.mxu0 %v3877
        %4285 = vmatpush1.msra.mxu0 %v3876
        %4286 = vmatprep.subr.mxu0 0.0
        %4287 = vmatpush1.msra.mxu0 0.0
        %4288 = vmatprep.subr.mxu0 0.0
        %4289 = vmatpush1.msra.mxu0 0.0
        %4290 = vmatprep.subr.mxu0 0.0
        %4291 = vmatpush1.msra.mxu0 0.0
        %4292 = vmatprep.subr.mxu0 0.0
        %4293 = vmatpush1.msra.mxu0 0.0
        %4294 = vmatprep.subr.mxu0 0.0
        %4295 = vmatpush1.msra.mxu0 0.0
        %4296 = vmatprep.subr.mxu0 0.0
        %4297 = vmatpush1.msra.mxu0 0.0
        %4298 = vmatprep.subr.mxu0 0.0
        %4299 = vmatpush1.msra.mxu0 0.0
        %4300 = vmatprep.subr.mxu0 0.0
        %4301 = vmatpush1.msra.mxu0 0.0
        %4302 = vmatprep.subr.mxu0 0.0
        %4303 = vmatpush1.msra.mxu0 0.0
        %4304 = vmatprep.subr.mxu0 0.0
        %4305 = vmatpush1.msra.mxu0 0.0
        %4306 = vmatprep.subr.mxu0 0.0
        %4307 = vmatpush1.msra.mxu0 0.0
        %4308 = vmatprep.subr.mxu0 0.0
        %4309 = vmatpush1.msra.mxu0 0.0
        %4310 = vmatprep.subr.mxu0 0.0
        %4311 = vmatpush1.msra.mxu0 0.0
        %4312 = vmatprep.subr.mxu0 0.0
        %4313 = vmatpush1.msra.mxu0 0.0
        %4314 = vmatprep.subr.mxu0 0.0
        %4315 = vmatpush1.msra.mxu0 0.0
        %4316 = vmatprep.subr.mxu0 0.0
        %4317 = vmatpush1.msra.mxu0 0.0
        %4318 = vmatprep.subr.mxu0 0.0
        %4319 = vmatpush1.msra.mxu0 0.0
        %4320 = vmatprep.subr.mxu0 0.0
        %4321 = vmatpush1.msra.mxu0 0.0
        %4322 = vmatprep.subr.mxu0 0.0
        %4323 = vmatpush1.msra.mxu0 0.0
        %4324 = vmatprep.subr.mxu0 0.0
        %4325 = vmatpush1.msra.mxu0 0.0
        %4326 = vmatprep.subr.mxu0 0.0
        %4327 = vmatpush1.msra.mxu0 0.0
        %4328 = vmatprep.subr.mxu0 0.0
        %4329 = vmatpush1.msra.mxu0 0.0
        %4330 = vmatprep.subr.mxu0 0.0
        %4331 = vmatpush1.msra.mxu0 0.0
        %4332 = vmatprep.subr.mxu0 0.0
        %4333 = vmatpush1.msra.mxu0 0.0
        %4334 = vmatprep.subr.mxu0 0.0
        %4335 = vmatpush1.msra.mxu0 0.0
        %4336 = vmatprep.subr.mxu0 0.0
        %4337 = vmatpush1.msra.mxu0 0.0
        %4338 = vmatprep.subr.mxu0 0.0
        %4339 = vmatpush1.msra.mxu0 0.0
        %4340 = vmatprep.subr.mxu0 0.0
        %4341 = vmatpush1.msra.mxu0 0.0
        %4342 = vmatprep.subr.mxu0 0.0
        %4343 = vmatpush1.msra.mxu0 0.0
        %4344 = vmatprep.subr.mxu0 0.0
        %4345 = vmatpush1.msra.mxu0 0.0
        %4346 = vmatprep.mubr.f32.mxu0 0.0
        %4347 = vmatmul.mubr.f32.gmra.mrb[0].mxu0 %v4280
        %v4348 = vpop.f32.mrb[0].mxu0
        %v4349 = vadd.f32 0.0, %v4348
        %v4350 = vpop.f32.mrb[0].mxu0
        %v4351 = vadd.f32 0.0, %v4350
        %4352 = vdwg.mxu0
        %v4353 = vadd.f32 %v4275, %v4349
        %v4354 = vadd.f32 %v4276, %v4351
        %4355 = vrot.lane.b32.xlu0 %v3874, 127
        %v4356 = vpop.permute.xlu0 %4355
        %4357 = vrot.lane.b32.xlu0 %v3875, 127
        %v4358 = vpop.permute.xlu0 %4357
        %4359 = vrot.lane.b32.xlu0 %v3876, 127
        %v4360 = vpop.permute.xlu0 %4359
        %4361 = vrot.lane.b32.xlu0 %v3877, 127
        %v4362 = vpop.permute.xlu0 %4361
        %v4363 = vsel %vm961, %v4356, %v4358
        %v4364 = vsel %vm961, %v4360, %v4362
        %v4371 = vsel %vm961, %v4358, %v4356
        %v4372 = vsel %vm961, %v4362, %v4360
        %v4373 = vmul.f32 %v4363, %v971
        %v4374 = vmul.f32 %v4371, %v975
        %v4375 = vmul.f32 %v4364, %v971
        %v4376 = vmul.f32 %v4372, %v975
        %s4377 = scalar_lea.vmem %s8, 5
        %v4378 = vld [vmem:[%s4377] sm:$0x1]
        %v4380 = vsel %vm453, %v4378, 0
        %4382 = vmatprep.subr.mxu0 %v4374
        %4383 = vmatpush1.msra.mxu0 %v4373
        %4384 = vmatprep.subr.mxu0 %v4376
        %4385 = vmatpush1.msra.mxu0 %v4375
        %4386 = vmatprep.subr.mxu0 0.0
        %4387 = vmatpush1.msra.mxu0 0.0
        %4388 = vmatprep.subr.mxu0 0.0
        %4389 = vmatpush1.msra.mxu0 0.0
        %4390 = vmatprep.subr.mxu0 0.0
        %4391 = vmatpush1.msra.mxu0 0.0
        %4392 = vmatprep.subr.mxu0 0.0
        %4393 = vmatpush1.msra.mxu0 0.0
        %4394 = vmatprep.subr.mxu0 0.0
        %4395 = vmatpush1.msra.mxu0 0.0
        %4396 = vmatprep.subr.mxu0 0.0
        %4397 = vmatpush1.msra.mxu0 0.0
        %4398 = vmatprep.subr.mxu0 0.0
        %4399 = vmatpush1.msra.mxu0 0.0
        %4400 = vmatprep.subr.mxu0 0.0
        %4401 = vmatpush1.msra.mxu0 0.0
        %4402 = vmatprep.subr.mxu0 0.0
        %4403 = vmatpush1.msra.mxu0 0.0
        %4404 = vmatprep.subr.mxu0 0.0
        %4405 = vmatpush1.msra.mxu0 0.0
        %4406 = vmatprep.subr.mxu0 0.0
        %4407 = vmatpush1.msra.mxu0 0.0
        %4408 = vmatprep.subr.mxu0 0.0
        %4409 = vmatpush1.msra.mxu0 0.0
        %4410 = vmatprep.subr.mxu0 0.0
        %4411 = vmatpush1.msra.mxu0 0.0
        %4412 = vmatprep.subr.mxu0 0.0
        %4413 = vmatpush1.msra.mxu0 0.0
        %4414 = vmatprep.subr.mxu0 0.0
        %4415 = vmatpush1.msra.mxu0 0.0
        %4416 = vmatprep.subr.mxu0 0.0
        %4417 = vmatpush1.msra.mxu0 0.0
        %4418 = vmatprep.subr.mxu0 0.0
        %4419 = vmatpush1.msra.mxu0 0.0
        %4420 = vmatprep.subr.mxu0 0.0
        %4421 = vmatpush1.msra.mxu0 0.0
        %4422 = vmatprep.subr.mxu0 0.0
        %4423 = vmatpush1.msra.mxu0 0.0
        %4424 = vmatprep.subr.mxu0 0.0
        %4425 = vmatpush1.msra.mxu0 0.0
        %4426 = vmatprep.subr.mxu0 0.0
        %4427 = vmatpush1.msra.mxu0 0.0
        %4428 = vmatprep.subr.mxu0 0.0
        %4429 = vmatpush1.msra.mxu0 0.0
        %4430 = vmatprep.subr.mxu0 0.0
        %4431 = vmatpush1.msra.mxu0 0.0
        %4432 = vmatprep.subr.mxu0 0.0
        %4433 = vmatpush1.msra.mxu0 0.0
        %4434 = vmatprep.subr.mxu0 0.0
        %4435 = vmatpush1.msra.mxu0 0.0
        %4436 = vmatprep.subr.mxu0 0.0
        %4437 = vmatpush1.msra.mxu0 0.0
        %4438 = vmatprep.subr.mxu0 0.0
        %4439 = vmatpush1.msra.mxu0 0.0
        %4440 = vmatprep.subr.mxu0 0.0
        %4441 = vmatpush1.msra.mxu0 0.0
        %4442 = vmatprep.subr.mxu0 0.0
        %4443 = vmatpush1.msra.mxu0 0.0
        %4444 = vmatprep.subr.mxu0 0.0
        %4445 = vmatpush1.msra.mxu0 0.0
        %4446 = vmatprep.mubr.f32.mxu0 0.0
        %4447 = vmatmul.mubr.f32.gmra.mrb[0].mxu0 %v4380
        %v4448 = vpop.f32.mrb[0].mxu0
        %v4449 = vadd.f32 0.0, %v4448
        %v4450 = vpop.f32.mrb[0].mxu0
        %v4451 = vadd.f32 0.0, %v4450
        %4452 = vdwg.mxu0
        %v4453 = vadd.f32 %v4353, %v4449
        %v4454 = vadd.f32 %v4354, %v4451
        %4455 = vrot.lane.b32.xlu0 %v3874, 113
        %v4456 = vpop.permute.xlu0 %4455
        %4457 = vrot.lane.b32.xlu0 %v3875, 113
        %v4458 = vpop.permute.xlu0 %4457
        %4459 = vrot.lane.b32.xlu0 %v3876, 113
        %v4460 = vpop.permute.xlu0 %4459
        %4461 = vrot.lane.b32.xlu0 %v3877, 113
        %v4462 = vpop.permute.xlu0 %4461
        %v4463 = vsel %vm1074, %v4456, %v4458
        %v4464 = vsel %vm1074, %v4460, %v4462
        %v4471 = vsel %vm1074, %v4458, %v4456
        %v4472 = vsel %vm1074, %v4462, %v4460
        %v4473 = vmul.f32 %v4463, %v1084
        %v4474 = vmul.f32 %v4471, %v1088
        %v4475 = vmul.f32 %v4464, %v1084
        %v4476 = vmul.f32 %v4472, %v1088
        %s4477 = scalar_lea.vmem %s8, 6
        %v4478 = vld [vmem:[%s4477] sm:$0x1]
        %v4480 = vsel %vm453, %v4478, 0
        %4482 = vmatprep.subr.mxu0 %v4474
        %4483 = vmatpush1.msra.mxu0 %v4473
        %4484 = vmatprep.subr.mxu0 %v4476
        %4485 = vmatpush1.msra.mxu0 %v4475
        %4486 = vmatprep.subr.mxu0 0.0
        %4487 = vmatpush1.msra.mxu0 0.0
        %4488 = vmatprep.subr.mxu0 0.0
        %4489 = vmatpush1.msra.mxu0 0.0
        %4490 = vmatprep.subr.mxu0 0.0
        %4491 = vmatpush1.msra.mxu0 0.0
        %4492 = vmatprep.subr.mxu0 0.0
        %4493 = vmatpush1.msra.mxu0 0.0
        %4494 = vmatprep.subr.mxu0 0.0
        %4495 = vmatpush1.msra.mxu0 0.0
        %4496 = vmatprep.subr.mxu0 0.0
        %4497 = vmatpush1.msra.mxu0 0.0
        %4498 = vmatprep.subr.mxu0 0.0
        %4499 = vmatpush1.msra.mxu0 0.0
        %4500 = vmatprep.subr.mxu0 0.0
        %4501 = vmatpush1.msra.mxu0 0.0
        %4502 = vmatprep.subr.mxu0 0.0
        %4503 = vmatpush1.msra.mxu0 0.0
        %4504 = vmatprep.subr.mxu0 0.0
        %4505 = vmatpush1.msra.mxu0 0.0
        %4506 = vmatprep.subr.mxu0 0.0
        %4507 = vmatpush1.msra.mxu0 0.0
        %4508 = vmatprep.subr.mxu0 0.0
        %4509 = vmatpush1.msra.mxu0 0.0
        %4510 = vmatprep.subr.mxu0 0.0
        %4511 = vmatpush1.msra.mxu0 0.0
        %4512 = vmatprep.subr.mxu0 0.0
        %4513 = vmatpush1.msra.mxu0 0.0
        %4514 = vmatprep.subr.mxu0 0.0
        %4515 = vmatpush1.msra.mxu0 0.0
        %4516 = vmatprep.subr.mxu0 0.0
        %4517 = vmatpush1.msra.mxu0 0.0
        %4518 = vmatprep.subr.mxu0 0.0
        %4519 = vmatpush1.msra.mxu0 0.0
        %4520 = vmatprep.subr.mxu0 0.0
        %4521 = vmatpush1.msra.mxu0 0.0
        %4522 = vmatprep.subr.mxu0 0.0
        %4523 = vmatpush1.msra.mxu0 0.0
        %4524 = vmatprep.subr.mxu0 0.0
        %4525 = vmatpush1.msra.mxu0 0.0
        %4526 = vmatprep.subr.mxu0 0.0
        %4527 = vmatpush1.msra.mxu0 0.0
        %4528 = vmatprep.subr.mxu0 0.0
        %4529 = vmatpush1.msra.mxu0 0.0
        %4530 = vmatprep.subr.mxu0 0.0
        %4531 = vmatpush1.msra.mxu0 0.0
        %4532 = vmatprep.subr.mxu0 0.0
        %4533 = vmatpush1.msra.mxu0 0.0
        %4534 = vmatprep.subr.mxu0 0.0
        %4535 = vmatpush1.msra.mxu0 0.0
        %4536 = vmatprep.subr.mxu0 0.0
        %4537 = vmatpush1.msra.mxu0 0.0
        %4538 = vmatprep.subr.mxu0 0.0
        %4539 = vmatpush1.msra.mxu0 0.0
        %4540 = vmatprep.subr.mxu0 0.0
        %4541 = vmatpush1.msra.mxu0 0.0
        %4542 = vmatprep.subr.mxu0 0.0
        %4543 = vmatpush1.msra.mxu0 0.0
        %4544 = vmatprep.subr.mxu0 0.0
        %4545 = vmatpush1.msra.mxu0 0.0
        %4546 = vmatprep.mubr.f32.mxu0 0.0
        %4547 = vmatmul.mubr.f32.gmra.mrb[0].mxu0 %v4480
        %v4548 = vpop.f32.mrb[0].mxu0
        %v4549 = vadd.f32 0.0, %v4548
        %v4550 = vpop.f32.mrb[0].mxu0
        %v4551 = vadd.f32 0.0, %v4550
        %4552 = vdwg.mxu0
        %v4553 = vadd.f32 %v4453, %v4549
        %v4554 = vadd.f32 %v4454, %v4551
        %4555 = vrot.lane.b32.xlu0 %v3874, 112
        %v4556 = vpop.permute.xlu0 %4555
        %4557 = vrot.lane.b32.xlu0 %v3875, 112
        %v4558 = vpop.permute.xlu0 %4557
        %4559 = vrot.lane.b32.xlu0 %v3876, 112
        %v4560 = vpop.permute.xlu0 %4559
        %4561 = vrot.lane.b32.xlu0 %v3877, 112
        %v4562 = vpop.permute.xlu0 %4561
        %v4563 = vsel %vm1187, %v4556, %v4558
        %v4564 = vsel %vm1187, %v4560, %v4562
        %v4571 = vsel %vm1187, %v4558, %v4556
        %v4572 = vsel %vm1187, %v4562, %v4560
        %v4573 = vmul.f32 %v4563, %v1197
        %v4574 = vmul.f32 %v4571, %v1201
        %v4575 = vmul.f32 %v4564, %v1197
        %v4576 = vmul.f32 %v4572, %v1201
        %s4577 = scalar_lea.vmem %s8, 7
        %v4578 = vld [vmem:[%s4577] sm:$0x1]
        %v4580 = vsel %vm453, %v4578, 0
        %4582 = vmatprep.subr.mxu0 %v4574
        %4583 = vmatpush1.msra.mxu0 %v4573
        %4584 = vmatprep.subr.mxu0 %v4576
        %4585 = vmatpush1.msra.mxu0 %v4575
        %4586 = vmatprep.subr.mxu0 0.0
        %4587 = vmatpush1.msra.mxu0 0.0
        %4588 = vmatprep.subr.mxu0 0.0
        %4589 = vmatpush1.msra.mxu0 0.0
        %4590 = vmatprep.subr.mxu0 0.0
        %4591 = vmatpush1.msra.mxu0 0.0
        %4592 = vmatprep.subr.mxu0 0.0
        %4593 = vmatpush1.msra.mxu0 0.0
        %4594 = vmatprep.subr.mxu0 0.0
        %4595 = vmatpush1.msra.mxu0 0.0
        %4596 = vmatprep.subr.mxu0 0.0
        %4597 = vmatpush1.msra.mxu0 0.0
        %4598 = vmatprep.subr.mxu0 0.0
        %4599 = vmatpush1.msra.mxu0 0.0
        %4600 = vmatprep.subr.mxu0 0.0
        %4601 = vmatpush1.msra.mxu0 0.0
        %4602 = vmatprep.subr.mxu0 0.0
        %4603 = vmatpush1.msra.mxu0 0.0
        %4604 = vmatprep.subr.mxu0 0.0
        %4605 = vmatpush1.msra.mxu0 0.0
        %4606 = vmatprep.subr.mxu0 0.0
        %4607 = vmatpush1.msra.mxu0 0.0
        %4608 = vmatprep.subr.mxu0 0.0
        %4609 = vmatpush1.msra.mxu0 0.0
        %4610 = vmatprep.subr.mxu0 0.0
        %4611 = vmatpush1.msra.mxu0 0.0
        %4612 = vmatprep.subr.mxu0 0.0
        %4613 = vmatpush1.msra.mxu0 0.0
        %4614 = vmatprep.subr.mxu0 0.0
        %4615 = vmatpush1.msra.mxu0 0.0
        %4616 = vmatprep.subr.mxu0 0.0
        %4617 = vmatpush1.msra.mxu0 0.0
        %4618 = vmatprep.subr.mxu0 0.0
        %4619 = vmatpush1.msra.mxu0 0.0
        %4620 = vmatprep.subr.mxu0 0.0
        %4621 = vmatpush1.msra.mxu0 0.0
        %4622 = vmatprep.subr.mxu0 0.0
        %4623 = vmatpush1.msra.mxu0 0.0
        %4624 = vmatprep.subr.mxu0 0.0
        %4625 = vmatpush1.msra.mxu0 0.0
        %4626 = vmatprep.subr.mxu0 0.0
        %4627 = vmatpush1.msra.mxu0 0.0
        %4628 = vmatprep.subr.mxu0 0.0
        %4629 = vmatpush1.msra.mxu0 0.0
        %4630 = vmatprep.subr.mxu0 0.0
        %4631 = vmatpush1.msra.mxu0 0.0
        %4632 = vmatprep.subr.mxu0 0.0
        %4633 = vmatpush1.msra.mxu0 0.0
        %4634 = vmatprep.subr.mxu0 0.0
        %4635 = vmatpush1.msra.mxu0 0.0
        %4636 = vmatprep.subr.mxu0 0.0
        %4637 = vmatpush1.msra.mxu0 0.0
        %4638 = vmatprep.subr.mxu0 0.0
        %4639 = vmatpush1.msra.mxu0 0.0
        %4640 = vmatprep.subr.mxu0 0.0
        %4641 = vmatpush1.msra.mxu0 0.0
        %4642 = vmatprep.subr.mxu0 0.0
        %4643 = vmatpush1.msra.mxu0 0.0
        %4644 = vmatprep.subr.mxu0 0.0
        %4645 = vmatpush1.msra.mxu0 0.0
        %4646 = vmatprep.mubr.f32.mxu0 0.0
        %4647 = vmatmul.mubr.f32.gmra.mrb[0].mxu0 %v4580
        %v4648 = vpop.f32.mrb[0].mxu0
        %v4649 = vadd.f32 0.0, %v4648
        %v4650 = vpop.f32.mrb[0].mxu0
        %v4651 = vadd.f32 0.0, %v4650
        %4652 = vdwg.mxu0
        %v4653 = vadd.f32 %v4553, %v4649
        %v4654 = vadd.f32 %v4554, %v4651
        %4655 = vrot.lane.b32.xlu0 %v3874, 111
        %v4656 = vpop.permute.xlu0 %4655
        %4657 = vrot.lane.b32.xlu0 %v3875, 111
        %v4658 = vpop.permute.xlu0 %4657
        %4659 = vrot.lane.b32.xlu0 %v3876, 111
        %v4660 = vpop.permute.xlu0 %4659
        %4661 = vrot.lane.b32.xlu0 %v3877, 111
        %v4662 = vpop.permute.xlu0 %4661
        %v4663 = vsel %vm1300, %v4656, %v4658
        %v4664 = vsel %vm1300, %v4660, %v4662
        %v4671 = vsel %vm1300, %v4658, %v4656
        %v4672 = vsel %vm1300, %v4662, %v4660
        %v4673 = vmul.f32 %v4663, %v1310
        %v4674 = vmul.f32 %v4671, %v1314
        %v4675 = vmul.f32 %v4664, %v1310
        %v4676 = vmul.f32 %v4672, %v1314
        %s4677 = scalar_lea.vmem %s8, 8
        %v4678 = vld [vmem:[%s4677] sm:$0x1]
        %v4680 = vsel %vm453, %v4678, 0
        %4682 = vmatprep.subr.mxu0 %v4674
        %4683 = vmatpush1.msra.mxu0 %v4673
        %4684 = vmatprep.subr.mxu0 %v4676
        %4685 = vmatpush1.msra.mxu0 %v4675
        %4686 = vmatprep.subr.mxu0 0.0
        %4687 = vmatpush1.msra.mxu0 0.0
        %4688 = vmatprep.subr.mxu0 0.0
        %4689 = vmatpush1.msra.mxu0 0.0
        %4690 = vmatprep.subr.mxu0 0.0
        %4691 = vmatpush1.msra.mxu0 0.0
        %4692 = vmatprep.subr.mxu0 0.0
        %4693 = vmatpush1.msra.mxu0 0.0
        %4694 = vmatprep.subr.mxu0 0.0
        %4695 = vmatpush1.msra.mxu0 0.0
        %4696 = vmatprep.subr.mxu0 0.0
        %4697 = vmatpush1.msra.mxu0 0.0
        %4698 = vmatprep.subr.mxu0 0.0
        %4699 = vmatpush1.msra.mxu0 0.0
        %4700 = vmatprep.subr.mxu0 0.0
        %4701 = vmatpush1.msra.mxu0 0.0
        %4702 = vmatprep.subr.mxu0 0.0
        %4703 = vmatpush1.msra.mxu0 0.0
        %4704 = vmatprep.subr.mxu0 0.0
        %4705 = vmatpush1.msra.mxu0 0.0
        %4706 = vmatprep.subr.mxu0 0.0
        %4707 = vmatpush1.msra.mxu0 0.0
        %4708 = vmatprep.subr.mxu0 0.0
        %4709 = vmatpush1.msra.mxu0 0.0
        %4710 = vmatprep.subr.mxu0 0.0
        %4711 = vmatpush1.msra.mxu0 0.0
        %4712 = vmatprep.subr.mxu0 0.0
        %4713 = vmatpush1.msra.mxu0 0.0
        %4714 = vmatprep.subr.mxu0 0.0
        %4715 = vmatpush1.msra.mxu0 0.0
        %4716 = vmatprep.subr.mxu0 0.0
        %4717 = vmatpush1.msra.mxu0 0.0
        %4718 = vmatprep.subr.mxu0 0.0
        %4719 = vmatpush1.msra.mxu0 0.0
        %4720 = vmatprep.subr.mxu0 0.0
        %4721 = vmatpush1.msra.mxu0 0.0
        %4722 = vmatprep.subr.mxu0 0.0
        %4723 = vmatpush1.msra.mxu0 0.0
        %4724 = vmatprep.subr.mxu0 0.0
        %4725 = vmatpush1.msra.mxu0 0.0
        %4726 = vmatprep.subr.mxu0 0.0
        %4727 = vmatpush1.msra.mxu0 0.0
        %4728 = vmatprep.subr.mxu0 0.0
        %4729 = vmatpush1.msra.mxu0 0.0
        %4730 = vmatprep.subr.mxu0 0.0
        %4731 = vmatpush1.msra.mxu0 0.0
        %4732 = vmatprep.subr.mxu0 0.0
        %4733 = vmatpush1.msra.mxu0 0.0
        %4734 = vmatprep.subr.mxu0 0.0
        %4735 = vmatpush1.msra.mxu0 0.0
        %4736 = vmatprep.subr.mxu0 0.0
        %4737 = vmatpush1.msra.mxu0 0.0
        %4738 = vmatprep.subr.mxu0 0.0
        %4739 = vmatpush1.msra.mxu0 0.0
        %4740 = vmatprep.subr.mxu0 0.0
        %4741 = vmatpush1.msra.mxu0 0.0
        %4742 = vmatprep.subr.mxu0 0.0
        %4743 = vmatpush1.msra.mxu0 0.0
        %4744 = vmatprep.subr.mxu0 0.0
        %4745 = vmatpush1.msra.mxu0 0.0
        %4746 = vmatprep.mubr.f32.mxu0 0.0
        %4747 = vmatmul.mubr.f32.gmra.mrb[0].mxu0 %v4680
        %v4748 = vpop.f32.mrb[0].mxu0
        %v4749 = vadd.f32 0.0, %v4748
        %v4750 = vpop.f32.mrb[0].mxu0
        %v4751 = vadd.f32 0.0, %v4750
        %4752 = vdwg.mxu0
        %v4753 = vadd.f32 %v4653, %v4749
        %v4754 = vadd.f32 %v4654, %v4751
        %v4755 = vld [vmem:[#allocation2] sm:$0x1]
        %4757 = vset.pattern.permute.xlu0 0
        %4758 = vperm.xlu0 %4757, %v4755
        %v4759 = vpop.permute.xlu0 %4758
        %v4761 = vlaneseq
        %v4762 = vshrl.u32 %v4761, 7
        %v4763 = vsub.s32 0, %v4762
        %v4764 = vrot.slane %v4759, %v4763
        %v4765 = vadd.f32 %v4753, %v4764
        %v4766 = vadd.f32 %v4754, %v4764
        %v4767 = vtanh.pop %v4765
        %v4768 = vtanh.pop %v4766
        %v4771 = vcombine.low %v4767, %v4768
        %v4773 = vunpack.c.l.s4 1966171168
        %v4774 = vunpack.c.0.s8 %v4773
        %v4775 = vlaneseq
        %v4776 = vshrl.u32 %v4775, 7
        %v4777 = vsub.s32 %v4774, %v4776
        %v4778 = vrot.slane %v4771, %v4777
        %v4780 = vunpack.c.l.s4 1966171168
        %v4781 = vunpack.c.0.s8 %v4780
        %v4782 = vlaneseq
        %v4783 = vshrl.u32 %v4782, 7
        %v4784 = vsub.s32 %v4781, %v4783
        %v4785 = vrot.slane %v4778, %v4784
        %v4787 = vlaneseq
        %vm4788 = vcmp.ge.s32.totalorder %v4787, 0
        %vm4789 = vcmp.lt.s32.totalorder %v4787, 256
        %vm4790 = vmand %vm4788, %vm4789
        %4791 = vst.msk [vmem:[%s396] sm:$0x3] %vm4790, %v4785
        %s4792 = sand.u32 %s272, 1
        %s4793 = scalar_lea.sflag [#allocation4], %s4792
        %s4794 = sand.u32 %s272, 1
        %s4795 = smul.addr %s4794, 2
        %s4796 = scalar_lea.vmem [#allocation6], %s4795
        // Predicated region
        $region69: #{tpu_custom_call.1} parent=63 // pred_check
          %p4797 = pneg %p282
        $region70: #{tpu_custom_call.1} parent=63 // pred_check_branch
          %4799 = sbr.rel (%p4797) target = $region72
        $region71: #{tpu_custom_call.1} parent=63 // pred_region
          %s4800 = smul.u32 2, %s28
          %s4802 = ssub.s32 32, 32
          %4803 = vsyncadd %s4793, %s4802
          %s4804 = smul.addr %s4800, 16
          %s4805 = scalar_lea.hbm %s11, %s4804
          %s4807 = sshll.u32 %s4796, 4
          %s4808 = int_to_ptr.vmem [resolvable:$true] %s4807
          %4810 = dma.vmem_to_hbm [thread:$0]  %s4808, 32, %s4805, %s4793
        $region72: #{tpu_custom_call.1} parent=63 // pred_fallthru
          _
      $region64: #{tpu_custom_call.1} parent=5 // pred_fallthru
        _
      %p4811 = scmp.le.s32.totalorder 2, %s23
      // Predicated region
      $region73: #{tpu_custom_call.1} parent=5 // pred_check
        %p4812 = pneg %p4811
      $region74: #{tpu_custom_call.1} parent=5 // pred_check_branch
        %4814 = sbr.rel (%p4812) target = $region76
      $region75: #{tpu_custom_call.1} parent=5 // pred_region
        %s4815 = ssub.s32 %s23, 2
        // Predicated region
        $region77: #{tpu_custom_call.1} parent=75 // pred_check
          %p4816 = pneg %p288
        $region78: #{tpu_custom_call.1} parent=75 // pred_check_branch
          %4818 = sbr.rel (%p4816) target = $region80
        $region79: #{tpu_custom_call.1} parent=75 // pred_region
          %s4819 = sand.u32 %s273, 1
          %s4820 = scalar_lea.sflag [#allocation4], %s4819
          %s4821 = sand.u32 %s273, 1
          %s4822 = smul.addr %s4821, 2
          %s4823 = scalar_lea.vmem [#allocation6], %s4822
          %4824 = dma.done %s4820, 32
        $region80: #{tpu_custom_call.1} parent=75 // pred_fallthru
          _
      $region76: #{tpu_custom_call.1} parent=5 // pred_fallthru
        _
    $region6: #{tpu_custom_call.1} parent=1 // loop_footer
      %s27 = sadd.s32 1, %s23
    $region7: #{tpu_custom_call.1} parent=1 // loop_footer_branch
      %22 = sbr.rel target = $region3
    $region8: #{tpu_custom_call.1} parent=1 // loop_exit
      _
    %4825 = vsyncpa [#allocation4], 1
    %s4826 = scalar_lea.sflag [#allocation4], 1
    %4827 = vsyncpa %s4826, 1
    %4828 = vsyncpa [#allocation5], 1
    %s4829 = scalar_lea.sflag [#allocation5], 1
    %4830 = vsyncpa %s4829, 1

</llo_original>
